<compile_context>
chip_gen: v7x
topology: tpu7x:2x2x1
jax: 0.10.0
libtpu: 0.0.40
codegen_flags: <defaults>
</compile_context>

<pallas_src>
import jax
import jax.numpy as jnp
from jax.experimental import pallas as pl
from jax.experimental.pallas import tpu as pltpu

DIM = 128               # `dim` in MyModel.__init__
NEG_SLOPE = 0.01        # torch.nn.LeakyReLU default negative_slope
H1, H2, H3 = 1024, 512, 256
OUT_PAD = 128           # final layer out-dim (2) padded to one full lane tile


def _leaky_relu(x):
    return jnp.where(x >= 0, x, NEG_SLOPE * x)


# ---------------------------------------------------------------------------
# Single fused kernel: cross-attention block + MLP head, one batch element per
# grid step (the grid axis is "parallel", so v7x's two TensorCores each take
# one batch element; weights use constant index_maps so they are DMA'd once).
#
# Per batch element (identical math to the reference forward):
#   t_att = v_t_d @ Wt + bt                                  (Nt, D)
#   l_att = v_l_d @ Wl + bl                                  (Nl, D)
#   A[i,j,:] = LeakyReLU(t_att[i] + l_att[j]) @ Wa + ba
#   target_atte = sigmoid(mean_j A),  ligase_atte = sigmoid(mean_i A)
# Because Wa is linear, the Wa matmul is hoisted out of the pairwise sums:
#   mean_j A[i] = (sum_j LR(t_att[i] + l_att[j])) @ Wa / Nl + ba
# so the MXU sees 4 (rows,128)@(128,128) matmuls per batch instead of Nl tiny
# per-column matmuls, and the pairwise loop is pure VPU work.
# The pooled (1, 2D) row is then pushed through fc1->fc2->fc3->out inside the
# same kernel (bf16 weights/operands, f32 accumulation).  The 2-wide output
# layer is padded to 128 lanes so the final store is lane-dense; the wrapper
# slices it back to 2 columns.  Dropout layers are inference-mode identities.
# ---------------------------------------------------------------------------
def _fused_kernel(vtd_ref, vld_ref,
                  wt_ref, bt_ref, wl_ref, bl_ref, wa_ref, ba_ref,
                  w1_ref, b1_ref, w2_ref, b2_ref, w3_ref, b3_ref,
                  w4_ref, b4_ref,
                  t_atte_ref, l_atte_ref, pred_ref):
    vtd = vtd_ref[0]                      # (Nt, D) f32
    vld = vld_ref[0]                      # (Nl, D) f32
    nt = vtd.shape[0]
    nl = vld.shape[0]

    t_att = jnp.dot(vtd, wt_ref[...], preferred_element_type=jnp.float32) + bt_ref[...]
    l_att = jnp.dot(vld, wl_ref[...], preferred_element_type=jnp.float32) + bl_ref[...]

    # Pairwise LeakyReLU sums (pure VPU; no matmul, bias-add or concat of the
    # big attention tensor inside the loop anymore).
    sum_t = jnp.zeros((nt, DIM), jnp.float32)          # sum over j of LR(t_i + l_j)
    l_rows = []
    for j in range(nl):                                # static, Nl is small
        p_j = _leaky_relu(t_att + l_att[j:j + 1, :])   # (Nt, D)
        sum_t = sum_t + p_j
        l_rows.append(jnp.sum(p_j, axis=0, keepdims=True))
    sum_l = jnp.concatenate(l_rows, axis=0)            # (Nl, D), sum over i

    wa = wa_ref[...]
    ba = ba_ref[...]
    t_atte = jax.nn.sigmoid(
        jnp.dot(sum_t, wa, preferred_element_type=jnp.float32) * (1.0 / nl) + ba)
    l_atte = jax.nn.sigmoid(
        jnp.dot(sum_l, wa, preferred_element_type=jnp.float32) * (1.0 / nt) + ba)

    t_atte_ref[0] = t_atte
    l_atte_ref[0] = l_atte

    # pooled = [sum_i v_t_d*(0.5+t_atte), sum_j v_l_d*(0.5+l_atte)]  -> (1, 2D)
    pooled_t = jnp.sum(vtd * (t_atte + 0.5), axis=0, keepdims=True)
    pooled_l = jnp.sum(vld * (l_atte + 0.5), axis=0, keepdims=True)
    pooled = jnp.concatenate([pooled_t, pooled_l], axis=1)          # (1, 2D)

    # Fused MLP head: bf16 matmul operands, f32 accumulation, f32 bias/activations.
    h = _leaky_relu(jnp.dot(pooled.astype(jnp.bfloat16), w1_ref[...],
                            preferred_element_type=jnp.float32) + b1_ref[...])
    h = _leaky_relu(jnp.dot(h.astype(jnp.bfloat16), w2_ref[...],
                            preferred_element_type=jnp.float32) + b2_ref[...])
    h = _leaky_relu(jnp.dot(h.astype(jnp.bfloat16), w3_ref[...],
                            preferred_element_type=jnp.float32) + b3_ref[...])
    pred_ref[0] = jnp.dot(h.astype(jnp.bfloat16), w4_ref[...],
                          preferred_element_type=jnp.float32) + b4_ref[...]


def fused_attention_mlp(v_t_d, v_l_d, p):
    B, Nt, D = v_t_d.shape
    Nl = v_l_d.shape[1]
    const2 = lambda b: (0, 0)

    mm_flops = (2 * D * D * 2 * (Nt + Nl)
                + 2 * (2 * D * H1 + H1 * H2 + H2 * H3 + H3 * OUT_PAD))
    mlp_w_bytes = 2 * (2 * D * H1 + H1 * H2 + H2 * H3 + H3 * OUT_PAD)   # bf16
    cost = pl.CostEstimate(
        flops=B * mm_flops,
        transcendentals=B * (Nt + Nl) * D,
        bytes_accessed=(2 * B * (Nt + Nl) * D * 4 + B * OUT_PAD * 4
                        + 3 * D * D * 4 + 3 * D * 4
                        + mlp_w_bytes + (H1 + H2 + H3 + OUT_PAD) * 4))

    t_atte, l_atte, pred_pad = pl.pallas_call(
        _fused_kernel,
        out_shape=(
            jax.ShapeDtypeStruct((B, Nt, D), jnp.float32),
            jax.ShapeDtypeStruct((B, Nl, D), jnp.float32),
            jax.ShapeDtypeStruct((B, 1, OUT_PAD), jnp.float32),
        ),
        grid=(B,),
        in_specs=[
            pl.BlockSpec((1, Nt, D), lambda b: (b, 0, 0)),
            pl.BlockSpec((1, Nl, D), lambda b: (b, 0, 0)),
            pl.BlockSpec((D, D), const2), pl.BlockSpec((1, D), const2),
            pl.BlockSpec((D, D), const2), pl.BlockSpec((1, D), const2),
            pl.BlockSpec((D, D), const2), pl.BlockSpec((1, D), const2),
            pl.BlockSpec((2 * D, H1), const2), pl.BlockSpec((1, H1), const2),
            pl.BlockSpec((H1, H2), const2), pl.BlockSpec((1, H2), const2),
            pl.BlockSpec((H2, H3), const2), pl.BlockSpec((1, H3), const2),
            pl.BlockSpec((H3, OUT_PAD), const2), pl.BlockSpec((1, OUT_PAD), const2),
        ],
        out_specs=(
            pl.BlockSpec((1, Nt, D), lambda b: (b, 0, 0)),
            pl.BlockSpec((1, Nl, D), lambda b: (b, 0, 0)),
            pl.BlockSpec((1, 1, OUT_PAD), lambda b: (b, 0, 0)),
        ),
        compiler_params=pltpu.CompilerParams(dimension_semantics=("parallel",)),
        cost_estimate=cost,
    )(v_t_d, v_l_d,
      p["wt"], p["bt"], p["wl"], p["bl"], p["wa"], p["ba"],
      p["w1"], p["b1"], p["w2"], p["b2"], p["w3"], p["b3"],
      p["w4p"], p["b4p"])

    predict = pred_pad.reshape(B, OUT_PAD)[:, :2]
    return predict, t_atte, l_atte


def prepare_params(params):
    """One-time parameter prep: MLP weights to bf16 (MXU-native, halves weight
    DMA traffic); pad the 2-wide output layer to 128 lane-dense columns.
    Attention weights stay f32 so the returned attention maps keep f32 accuracy."""
    p = {k: params[k] for k in ("wt", "bt", "wl", "bl", "wa", "ba",
                                "b1", "b2", "b3")}
    p["w1"] = params["w1"].astype(jnp.bfloat16)
    p["w2"] = params["w2"].astype(jnp.bfloat16)
    p["w3"] = params["w3"].astype(jnp.bfloat16)
    w4p = jnp.zeros((H3, OUT_PAD), jnp.float32).at[:, :2].set(params["w4"])
    b4p = jnp.zeros((1, OUT_PAD), jnp.float32).at[:, :2].set(params["b4"])
    p["w4p"] = w4p.astype(jnp.bfloat16)
    p["b4p"] = b4p
    return p


# ---------------------------------------------------------------------------
# Full forward (concat glue in plain JAX, everything else in one Pallas call).
# TODO(synk): the five sub-encoders (ligase_ligand_model, ...) are not defined
# in the reference module, so they are treated as identity encoders whose
# outputs (B, S, dim) are fed in directly.
# ---------------------------------------------------------------------------
@jax.jit
def my_model_forward(v0_ligase_ligand, v1_target_ligand, v2_linker,
                     v_target, v_ligase, params):
    v_d = jnp.concatenate([v1_target_ligand, v2_linker, v0_ligase_ligand], axis=1)
    v_t_d = jnp.concatenate([v_target, v_d], axis=1)
    v_l_d = jnp.concatenate([v_ligase, v_d], axis=1)
    # dropout1/2/3 are identity in eval/inference mode.
    return fused_attention_mlp(v_t_d, v_l_d, params)


def init_linear(key, in_dim, out_dim):
    kw, kb = jax.random.split(key)
    bound = 1.0 / (in_dim ** 0.5)
    w = jax.random.uniform(kw, (in_dim, out_dim), jnp.float32, -bound, bound)
    b = jax.random.uniform(kb, (1, out_dim), jnp.float32, -bound, bound)
    return w, b


if __name__ == "__main__":
    key = jax.random.PRNGKey(0)
    keys = jax.random.split(key, 12)
    B = 2

    # Sub-encoder outputs (identity encoders), channels-last (B, S, DIM).
    v0 = jax.random.normal(keys[0], (B, 2, DIM), jnp.float32)   # ligase_ligand
    v1 = jax.random.normal(keys[1], (B, 2, DIM), jnp.float32)   # target_ligand
    v2 = jax.random.normal(keys[2], (B, 2, DIM), jnp.float32)   # linker
    vt = jax.random.normal(keys[3], (B, 3, DIM), jnp.float32)   # target
    vl = jax.random.normal(keys[4], (B, 3, DIM), jnp.float32)   # ligase

    wt, bt = init_linear(keys[5], DIM, DIM)          # target_attention_layer
    wl_, bl_ = init_linear(keys[6], DIM, DIM)        # ligase_attention_layer
    wa, ba = init_linear(keys[7], DIM, DIM)          # attention_layer
    w1, b1 = init_linear(keys[8], DIM * 2, H1)       # fc1
    w2, b2 = init_linear(keys[9], H1, H2)            # fc2
    w3, b3 = init_linear(keys[10], H2, H3)           # fc3
    w4, b4 = init_linear(keys[11], H3, 2)            # out

    raw_params = dict(wt=wt, bt=bt, wl=wl_, bl=bl_, wa=wa, ba=ba,
                      w1=w1, b1=b1, w2=w2, b2=b2, w3=w3, b3=b3, w4=w4, b4=b4)
    params = prepare_params(raw_params)

    predict, target_atte, ligase_atte = my_model_forward(v0, v1, v2, vt, vl, params)
    jax.block_until_ready((predict, target_atte, ligase_atte))

    assert predict.shape == (B, 2)
    assert target_atte.shape == (B, 3 + 2 + 2 + 2, DIM)
    assert ligase_atte.shape == (B, 3 + 2 + 2 + 2, DIM)
    print("KERNEL_OK")
</pallas_src>

<mosaic_0001>
module attributes {stable_mosaic.version = 11 : i64} {
  func.func @_fused_kernel(%arg0: i32, %arg1: memref<1x9x128xf32, #tpu.memory_space<vmem>>, %arg2: memref<1x9x128xf32, #tpu.memory_space<vmem>>, %arg3: memref<128x128xf32, #tpu.memory_space<vmem>>, %arg4: memref<1x128xf32, #tpu.memory_space<vmem>>, %arg5: memref<128x128xf32, #tpu.memory_space<vmem>>, %arg6: memref<1x128xf32, #tpu.memory_space<vmem>>, %arg7: memref<128x128xf32, #tpu.memory_space<vmem>>, %arg8: memref<1x128xf32, #tpu.memory_space<vmem>>, %arg9: memref<256x1024xbf16, #tpu.memory_space<vmem>>, %arg10: memref<1x1024xf32, #tpu.memory_space<vmem>>, %arg11: memref<1024x512xbf16, #tpu.memory_space<vmem>>, %arg12: memref<1x512xf32, #tpu.memory_space<vmem>>, %arg13: memref<512x256xbf16, #tpu.memory_space<vmem>>, %arg14: memref<1x256xf32, #tpu.memory_space<vmem>>, %arg15: memref<256x128xbf16, #tpu.memory_space<vmem>>, %arg16: memref<1x128xf32, #tpu.memory_space<vmem>>, %arg17: memref<1x9x128xf32, #tpu.memory_space<vmem>>, %arg18: memref<1x9x128xf32, #tpu.memory_space<vmem>>, %arg19: memref<1x1x128xf32, #tpu.memory_space<vmem>>) attributes {dimension_semantics = [#tpu.dimension_semantics<parallel>], iteration_bounds = array<i64: 2>, scalar_prefetch = 0 : i64, scratch_operands = 0 : i64, tpu.core_type = #tpu.core_type<tc>, window_params = [{transform_indices = @transform_0, window_bounds = array<i64: 1, 9, 128>}, {transform_indices = @transform_1, window_bounds = array<i64: 1, 9, 128>}, {pipeline_mode = #tpu.pipeline_mode<synchronous>, transform_indices = @transform_2, window_bounds = array<i64: 128, 128>}, {pipeline_mode = #tpu.pipeline_mode<synchronous>, transform_indices = @transform_3, window_bounds = array<i64: 1, 128>}, {pipeline_mode = #tpu.pipeline_mode<synchronous>, transform_indices = @transform_4, window_bounds = array<i64: 128, 128>}, {pipeline_mode = #tpu.pipeline_mode<synchronous>, transform_indices = @transform_5, window_bounds = array<i64: 1, 128>}, {pipeline_mode = #tpu.pipeline_mode<synchronous>, transform_indices = @transform_6, window_bounds = array<i64: 128, 128>}, {pipeline_mode = #tpu.pipeline_mode<synchronous>, transform_indices = @transform_7, window_bounds = array<i64: 1, 128>}, {pipeline_mode = #tpu.pipeline_mode<synchronous>, transform_indices = @transform_8, window_bounds = array<i64: 256, 1024>}, {pipeline_mode = #tpu.pipeline_mode<synchronous>, transform_indices = @transform_9, window_bounds = array<i64: 1, 1024>}, {pipeline_mode = #tpu.pipeline_mode<synchronous>, transform_indices = @transform_10, window_bounds = array<i64: 1024, 512>}, {pipeline_mode = #tpu.pipeline_mode<synchronous>, transform_indices = @transform_11, window_bounds = array<i64: 1, 512>}, {pipeline_mode = #tpu.pipeline_mode<synchronous>, transform_indices = @transform_12, window_bounds = array<i64: 512, 256>}, {pipeline_mode = #tpu.pipeline_mode<synchronous>, transform_indices = @transform_13, window_bounds = array<i64: 1, 256>}, {pipeline_mode = #tpu.pipeline_mode<synchronous>, transform_indices = @transform_14, window_bounds = array<i64: 256, 128>}, {pipeline_mode = #tpu.pipeline_mode<synchronous>, transform_indices = @transform_15, window_bounds = array<i64: 1, 128>}, {transform_indices = @transform_16, window_bounds = array<i64: 1, 9, 128>}, {transform_indices = @transform_17, window_bounds = array<i64: 1, 9, 128>}, {transform_indices = @transform_18, window_bounds = array<i64: 1, 1, 128>}]} {
    %c0 = arith.constant 0 : index
    %c0_0 = arith.constant 0 : index
    %c0_1 = arith.constant 0 : index
    %0 = vector.load %arg1[%c0, %c0_0, %c0_1] : memref<1x9x128xf32, #tpu.memory_space<vmem>>, vector<1x9x128xf32>
    %1 = vector.shape_cast %0 : vector<1x9x128xf32> to vector<9x128xf32>
    %c0_2 = arith.constant 0 : index
    %c0_3 = arith.constant 0 : index
    %c0_4 = arith.constant 0 : index
    %2 = vector.load %arg2[%c0_2, %c0_3, %c0_4] : memref<1x9x128xf32, #tpu.memory_space<vmem>>, vector<1x9x128xf32>
    %3 = vector.shape_cast %2 : vector<1x9x128xf32> to vector<9x128xf32>
    %c0_5 = arith.constant 0 : index
    %c0_6 = arith.constant 0 : index
    %4 = vector.load %arg3[%c0_5, %c0_6] : memref<128x128xf32, #tpu.memory_space<vmem>>, vector<128x128xf32>
    %cst = arith.constant dense<0.000000e+00> : vector<9x128xf32>
    %5 = tpu.matmul %1, %4, %cst {dimension_numbers = #tpu.dot_dimension_numbers<[1], [0], [0], [1], [0, 0, 1, 1], [], []>} : vector<9x128xf32>, vector<128x128xf32>, vector<9x128xf32> -> vector<9x128xf32>
    %c0_7 = arith.constant 0 : index
    %c0_8 = arith.constant 0 : index
    %6 = vector.load %arg4[%c0_7, %c0_8] : memref<1x128xf32, #tpu.memory_space<vmem>>, vector<1x128xf32>
    %7 = vector.broadcast %6 : vector<1x128xf32> to vector<9x128xf32>
    %8 = arith.addf %5, %7 : vector<9x128xf32>
    %c0_9 = arith.constant 0 : index
    %c0_10 = arith.constant 0 : index
    %9 = vector.load %arg5[%c0_9, %c0_10] : memref<128x128xf32, #tpu.memory_space<vmem>>, vector<128x128xf32>
    %cst_11 = arith.constant dense<0.000000e+00> : vector<9x128xf32>
    %10 = tpu.matmul %3, %9, %cst_11 {dimension_numbers = #tpu.dot_dimension_numbers<[1], [0], [0], [1], [0, 0, 1, 1], [], []>} : vector<9x128xf32>, vector<128x128xf32>, vector<9x128xf32> -> vector<9x128xf32>
    %c0_12 = arith.constant 0 : index
    %c0_13 = arith.constant 0 : index
    %11 = vector.load %arg6[%c0_12, %c0_13] : memref<1x128xf32, #tpu.memory_space<vmem>>, vector<1x128xf32>
    %12 = vector.broadcast %11 : vector<1x128xf32> to vector<9x128xf32>
    %13 = arith.addf %10, %12 : vector<9x128xf32>
    %cst_14 = arith.constant 0.000000e+00 : f32
    %14 = vector.broadcast %cst_14 : f32 to vector<9x128xf32>
    %15 = vector.extract_strided_slice %13 {offsets = [0, 0], sizes = [1, 128], strides = [1, 1]} : vector<9x128xf32> to vector<1x128xf32>
    %16 = vector.broadcast %15 : vector<1x128xf32> to vector<9x128xf32>
    %17 = arith.addf %8, %16 : vector<9x128xf32>
    %cst_15 = arith.constant 0.000000e+00 : f32
    %18 = vector.broadcast %cst_15 : f32 to vector<9x128xf32>
    %19 = arith.cmpf oge, %17, %18 : vector<9x128xf32>
    %cst_16 = arith.constant 0.00999999977 : f32
    %20 = vector.broadcast %cst_16 : f32 to vector<9x128xf32>
    %21 = arith.mulf %20, %17 : vector<9x128xf32>
    %22 = arith.select %19, %17, %21 : vector<9x128xi1>, vector<9x128xf32>
    %23 = arith.addf %14, %22 : vector<9x128xf32>
    %cst_17 = arith.constant dense<0.000000e+00> : vector<128xf32>
    %24 = vector.multi_reduction <add>, %22, %cst_17 [0] : vector<9x128xf32> to vector<128xf32>
    %25 = vector.shape_cast %24 : vector<128xf32> to vector<1x128xf32>
    %26 = vector.extract_strided_slice %13 {offsets = [1, 0], sizes = [1, 128], strides = [1, 1]} : vector<9x128xf32> to vector<1x128xf32>
    %27 = vector.broadcast %26 : vector<1x128xf32> to vector<9x128xf32>
    %28 = arith.addf %8, %27 : vector<9x128xf32>
    %cst_18 = arith.constant 0.000000e+00 : f32
    %29 = vector.broadcast %cst_18 : f32 to vector<9x128xf32>
    %30 = arith.cmpf oge, %28, %29 : vector<9x128xf32>
    %cst_19 = arith.constant 0.00999999977 : f32
    %31 = vector.broadcast %cst_19 : f32 to vector<9x128xf32>
    %32 = arith.mulf %31, %28 : vector<9x128xf32>
    %33 = arith.select %30, %28, %32 : vector<9x128xi1>, vector<9x128xf32>
    %34 = arith.addf %23, %33 : vector<9x128xf32>
    %cst_20 = arith.constant dense<0.000000e+00> : vector<128xf32>
    %35 = vector.multi_reduction <add>, %33, %cst_20 [0] : vector<9x128xf32> to vector<128xf32>
    %36 = vector.shape_cast %35 : vector<128xf32> to vector<1x128xf32>
    %37 = vector.extract_strided_slice %13 {offsets = [2, 0], sizes = [1, 128], strides = [1, 1]} : vector<9x128xf32> to vector<1x128xf32>
    %38 = vector.broadcast %37 : vector<1x128xf32> to vector<9x128xf32>
    %39 = arith.addf %8, %38 : vector<9x128xf32>
    %cst_21 = arith.constant 0.000000e+00 : f32
    %40 = vector.broadcast %cst_21 : f32 to vector<9x128xf32>
    %41 = arith.cmpf oge, %39, %40 : vector<9x128xf32>
    %cst_22 = arith.constant 0.00999999977 : f32
    %42 = vector.broadcast %cst_22 : f32 to vector<9x128xf32>
    %43 = arith.mulf %42, %39 : vector<9x128xf32>
    %44 = arith.select %41, %39, %43 : vector<9x128xi1>, vector<9x128xf32>
    %45 = arith.addf %34, %44 : vector<9x128xf32>
    %cst_23 = arith.constant dense<0.000000e+00> : vector<128xf32>
    %46 = vector.multi_reduction <add>, %44, %cst_23 [0] : vector<9x128xf32> to vector<128xf32>
    %47 = vector.shape_cast %46 : vector<128xf32> to vector<1x128xf32>
    %48 = vector.extract_strided_slice %13 {offsets = [3, 0], sizes = [1, 128], strides = [1, 1]} : vector<9x128xf32> to vector<1x128xf32>
    %49 = vector.broadcast %48 : vector<1x128xf32> to vector<9x128xf32>
    %50 = arith.addf %8, %49 : vector<9x128xf32>
    %cst_24 = arith.constant 0.000000e+00 : f32
    %51 = vector.broadcast %cst_24 : f32 to vector<9x128xf32>
    %52 = arith.cmpf oge, %50, %51 : vector<9x128xf32>
    %cst_25 = arith.constant 0.00999999977 : f32
    %53 = vector.broadcast %cst_25 : f32 to vector<9x128xf32>
    %54 = arith.mulf %53, %50 : vector<9x128xf32>
    %55 = arith.select %52, %50, %54 : vector<9x128xi1>, vector<9x128xf32>
    %56 = arith.addf %45, %55 : vector<9x128xf32>
    %cst_26 = arith.constant dense<0.000000e+00> : vector<128xf32>
    %57 = vector.multi_reduction <add>, %55, %cst_26 [0] : vector<9x128xf32> to vector<128xf32>
    %58 = vector.shape_cast %57 : vector<128xf32> to vector<1x128xf32>
    %59 = vector.extract_strided_slice %13 {offsets = [4, 0], sizes = [1, 128], strides = [1, 1]} : vector<9x128xf32> to vector<1x128xf32>
    %60 = vector.broadcast %59 : vector<1x128xf32> to vector<9x128xf32>
    %61 = arith.addf %8, %60 : vector<9x128xf32>
    %cst_27 = arith.constant 0.000000e+00 : f32
    %62 = vector.broadcast %cst_27 : f32 to vector<9x128xf32>
    %63 = arith.cmpf oge, %61, %62 : vector<9x128xf32>
    %cst_28 = arith.constant 0.00999999977 : f32
    %64 = vector.broadcast %cst_28 : f32 to vector<9x128xf32>
    %65 = arith.mulf %64, %61 : vector<9x128xf32>
    %66 = arith.select %63, %61, %65 : vector<9x128xi1>, vector<9x128xf32>
    %67 = arith.addf %56, %66 : vector<9x128xf32>
    %cst_29 = arith.constant dense<0.000000e+00> : vector<128xf32>
    %68 = vector.multi_reduction <add>, %66, %cst_29 [0] : vector<9x128xf32> to vector<128xf32>
    %69 = vector.shape_cast %68 : vector<128xf32> to vector<1x128xf32>
    %70 = vector.extract_strided_slice %13 {offsets = [5, 0], sizes = [1, 128], strides = [1, 1]} : vector<9x128xf32> to vector<1x128xf32>
    %71 = vector.broadcast %70 : vector<1x128xf32> to vector<9x128xf32>
    %72 = arith.addf %8, %71 : vector<9x128xf32>
    %cst_30 = arith.constant 0.000000e+00 : f32
    %73 = vector.broadcast %cst_30 : f32 to vector<9x128xf32>
    %74 = arith.cmpf oge, %72, %73 : vector<9x128xf32>
    %cst_31 = arith.constant 0.00999999977 : f32
    %75 = vector.broadcast %cst_31 : f32 to vector<9x128xf32>
    %76 = arith.mulf %75, %72 : vector<9x128xf32>
    %77 = arith.select %74, %72, %76 : vector<9x128xi1>, vector<9x128xf32>
    %78 = arith.addf %67, %77 : vector<9x128xf32>
    %cst_32 = arith.constant dense<0.000000e+00> : vector<128xf32>
    %79 = vector.multi_reduction <add>, %77, %cst_32 [0] : vector<9x128xf32> to vector<128xf32>
    %80 = vector.shape_cast %79 : vector<128xf32> to vector<1x128xf32>
    %81 = vector.extract_strided_slice %13 {offsets = [6, 0], sizes = [1, 128], strides = [1, 1]} : vector<9x128xf32> to vector<1x128xf32>
    %82 = vector.broadcast %81 : vector<1x128xf32> to vector<9x128xf32>
    %83 = arith.addf %8, %82 : vector<9x128xf32>
    %cst_33 = arith.constant 0.000000e+00 : f32
    %84 = vector.broadcast %cst_33 : f32 to vector<9x128xf32>
    %85 = arith.cmpf oge, %83, %84 : vector<9x128xf32>
    %cst_34 = arith.constant 0.00999999977 : f32
    %86 = vector.broadcast %cst_34 : f32 to vector<9x128xf32>
    %87 = arith.mulf %86, %83 : vector<9x128xf32>
    %88 = arith.select %85, %83, %87 : vector<9x128xi1>, vector<9x128xf32>
    %89 = arith.addf %78, %88 : vector<9x128xf32>
    %cst_35 = arith.constant dense<0.000000e+00> : vector<128xf32>
    %90 = vector.multi_reduction <add>, %88, %cst_35 [0] : vector<9x128xf32> to vector<128xf32>
    %91 = vector.shape_cast %90 : vector<128xf32> to vector<1x128xf32>
    %92 = vector.extract_strided_slice %13 {offsets = [7, 0], sizes = [1, 128], strides = [1, 1]} : vector<9x128xf32> to vector<1x128xf32>
    %93 = vector.broadcast %92 : vector<1x128xf32> to vector<9x128xf32>
    %94 = arith.addf %8, %93 : vector<9x128xf32>
    %cst_36 = arith.constant 0.000000e+00 : f32
    %95 = vector.broadcast %cst_36 : f32 to vector<9x128xf32>
    %96 = arith.cmpf oge, %94, %95 : vector<9x128xf32>
    %cst_37 = arith.constant 0.00999999977 : f32
    %97 = vector.broadcast %cst_37 : f32 to vector<9x128xf32>
    %98 = arith.mulf %97, %94 : vector<9x128xf32>
    %99 = arith.select %96, %94, %98 : vector<9x128xi1>, vector<9x128xf32>
    %100 = arith.addf %89, %99 : vector<9x128xf32>
    %cst_38 = arith.constant dense<0.000000e+00> : vector<128xf32>
    %101 = vector.multi_reduction <add>, %99, %cst_38 [0] : vector<9x128xf32> to vector<128xf32>
    %102 = vector.shape_cast %101 : vector<128xf32> to vector<1x128xf32>
    %103 = vector.extract_strided_slice %13 {offsets = [8, 0], sizes = [1, 128], strides = [1, 1]} : vector<9x128xf32> to vector<1x128xf32>
    %104 = vector.broadcast %103 : vector<1x128xf32> to vector<9x128xf32>
    %105 = arith.addf %8, %104 : vector<9x128xf32>
    %cst_39 = arith.constant 0.000000e+00 : f32
    %106 = vector.broadcast %cst_39 : f32 to vector<9x128xf32>
    %107 = arith.cmpf oge, %105, %106 : vector<9x128xf32>
    %cst_40 = arith.constant 0.00999999977 : f32
    %108 = vector.broadcast %cst_40 : f32 to vector<9x128xf32>
    %109 = arith.mulf %108, %105 : vector<9x128xf32>
    %110 = arith.select %107, %105, %109 : vector<9x128xi1>, vector<9x128xf32>
    %111 = arith.addf %100, %110 : vector<9x128xf32>
    %cst_41 = arith.constant dense<0.000000e+00> : vector<128xf32>
    %112 = vector.multi_reduction <add>, %110, %cst_41 [0] : vector<9x128xf32> to vector<128xf32>
    %113 = vector.shape_cast %112 : vector<128xf32> to vector<1x128xf32>
    %114 = tpu.concatenate %25, %36, %47, %58, %69, %80, %91, %102, %113 in 0 : vector<1x128xf32>, vector<1x128xf32>, vector<1x128xf32>, vector<1x128xf32>, vector<1x128xf32>, vector<1x128xf32>, vector<1x128xf32>, vector<1x128xf32>, vector<1x128xf32> -> vector<9x128xf32>
    %c0_42 = arith.constant 0 : index
    %c0_43 = arith.constant 0 : index
    %115 = vector.load %arg7[%c0_42, %c0_43] : memref<128x128xf32, #tpu.memory_space<vmem>>, vector<128x128xf32>
    %c0_44 = arith.constant 0 : index
    %c0_45 = arith.constant 0 : index
    %116 = vector.load %arg8[%c0_44, %c0_45] : memref<1x128xf32, #tpu.memory_space<vmem>>, vector<1x128xf32>
    %cst_46 = arith.constant dense<0.000000e+00> : vector<9x128xf32>
    %117 = tpu.matmul %111, %115, %cst_46 {dimension_numbers = #tpu.dot_dimension_numbers<[1], [0], [0], [1], [0, 0, 1, 1], [], []>} : vector<9x128xf32>, vector<128x128xf32>, vector<9x128xf32> -> vector<9x128xf32>
    %cst_47 = arith.constant 0.111111112 : f32
    %118 = vector.broadcast %cst_47 : f32 to vector<9x128xf32>
    %119 = arith.mulf %117, %118 : vector<9x128xf32>
    %120 = vector.broadcast %116 : vector<1x128xf32> to vector<9x128xf32>
    %121 = arith.addf %119, %120 : vector<9x128xf32>
    %122 = arith.negf %121 : vector<9x128xf32>
    %123 = math.exp %122 : vector<9x128xf32>
    %cst_48 = arith.constant 1.000000e+00 : f32
    %124 = vector.broadcast %cst_48 : f32 to vector<9x128xf32>
    %125 = arith.addf %124, %123 : vector<9x128xf32>
    %126 = arith.divf %124, %125 : vector<9x128xf32>
    %cst_49 = arith.constant dense<0.000000e+00> : vector<9x128xf32>
    %127 = tpu.matmul %114, %115, %cst_49 {dimension_numbers = #tpu.dot_dimension_numbers<[1], [0], [0], [1], [0, 0, 1, 1], [], []>} : vector<9x128xf32>, vector<128x128xf32>, vector<9x128xf32> -> vector<9x128xf32>
    %cst_50 = arith.constant 0.111111112 : f32
    %128 = vector.broadcast %cst_50 : f32 to vector<9x128xf32>
    %129 = arith.mulf %127, %128 : vector<9x128xf32>
    %130 = vector.broadcast %116 : vector<1x128xf32> to vector<9x128xf32>
    %131 = arith.addf %129, %130 : vector<9x128xf32>
    %132 = arith.negf %131 : vector<9x128xf32>
    %133 = math.exp %132 : vector<9x128xf32>
    %cst_51 = arith.constant 1.000000e+00 : f32
    %134 = vector.broadcast %cst_51 : f32 to vector<9x128xf32>
    %135 = arith.addf %134, %133 : vector<9x128xf32>
    %136 = arith.divf %134, %135 : vector<9x128xf32>
    %c0_52 = arith.constant 0 : index
    %c0_53 = arith.constant 0 : index
    %c0_54 = arith.constant 0 : index
    %137 = vector.load %arg17[%c0_52, %c0_53, %c0_54] : memref<1x9x128xf32, #tpu.memory_space<vmem>>, vector<1x9x128xf32>
    %138 = vector.shape_cast %137 : vector<1x9x128xf32> to vector<9x128xf32>
    %139 = vector.shape_cast %126 : vector<9x128xf32> to vector<1x9x128xf32>
    tpu.vector_store %arg17[%c0_52, %c0_53, %c0_54], %139 {strides = array<i32>} : memref<1x9x128xf32, #tpu.memory_space<vmem>>, vector<1x9x128xf32>,
    %c0_55 = arith.constant 0 : index
    %c0_56 = arith.constant 0 : index
    %c0_57 = arith.constant 0 : index
    %140 = vector.load %arg18[%c0_55, %c0_56, %c0_57] : memref<1x9x128xf32, #tpu.memory_space<vmem>>, vector<1x9x128xf32>
    %141 = vector.shape_cast %140 : vector<1x9x128xf32> to vector<9x128xf32>
    %142 = vector.shape_cast %136 : vector<9x128xf32> to vector<1x9x128xf32>
    tpu.vector_store %arg18[%c0_55, %c0_56, %c0_57], %142 {strides = array<i32>} : memref<1x9x128xf32, #tpu.memory_space<vmem>>, vector<1x9x128xf32>,
    %cst_58 = arith.constant 5.000000e-01 : f32
    %143 = vector.broadcast %cst_58 : f32 to vector<9x128xf32>
    %144 = arith.addf %126, %143 : vector<9x128xf32>
    %145 = arith.mulf %1, %144 : vector<9x128xf32>
    %cst_59 = arith.constant dense<0.000000e+00> : vector<128xf32>
    %146 = vector.multi_reduction <add>, %145, %cst_59 [0] : vector<9x128xf32> to vector<128xf32>
    %147 = vector.shape_cast %146 : vector<128xf32> to vector<1x128xf32>
    %cst_60 = arith.constant 5.000000e-01 : f32
    %148 = vector.broadcast %cst_60 : f32 to vector<9x128xf32>
    %149 = arith.addf %136, %148 : vector<9x128xf32>
    %150 = arith.mulf %3, %149 : vector<9x128xf32>
    %cst_61 = arith.constant dense<0.000000e+00> : vector<128xf32>
    %151 = vector.multi_reduction <add>, %150, %cst_61 [0] : vector<9x128xf32> to vector<128xf32>
    %152 = vector.shape_cast %151 : vector<128xf32> to vector<1x128xf32>
    %153 = tpu.concatenate %147, %152 in 1 : vector<1x128xf32>, vector<1x128xf32> -> vector<1x256xf32>
    %154 = arith.truncf %153 : vector<1x256xf32> to vector<1x256xbf16>
    %c0_62 = arith.constant 0 : index
    %c0_63 = arith.constant 0 : index
    %155 = vector.load %arg9[%c0_62, %c0_63] : memref<256x1024xbf16, #tpu.memory_space<vmem>>, vector<256x1024xbf16>
    %cst_64 = arith.constant dense<0.000000e+00> : vector<1x1024xf32>
    %156 = tpu.matmul %154, %155, %cst_64 {dimension_numbers = #tpu.dot_dimension_numbers<[1], [0], [0], [1], [0, 0, 1, 1], [], []>} : vector<1x256xbf16>, vector<256x1024xbf16>, vector<1x1024xf32> -> vector<1x1024xf32>
    %c0_65 = arith.constant 0 : index
    %c0_66 = arith.constant 0 : index
    %157 = vector.load %arg10[%c0_65, %c0_66] : memref<1x1024xf32, #tpu.memory_space<vmem>>, vector<1x1024xf32>
    %158 = arith.addf %156, %157 : vector<1x1024xf32>
    %cst_67 = arith.constant 0.000000e+00 : f32
    %159 = vector.broadcast %cst_67 : f32 to vector<1x1024xf32>
    %160 = arith.cmpf oge, %158, %159 : vector<1x1024xf32>
    %cst_68 = arith.constant 0.00999999977 : f32
    %161 = vector.broadcast %cst_68 : f32 to vector<1x1024xf32>
    %162 = arith.mulf %161, %158 : vector<1x1024xf32>
    %163 = arith.select %160, %158, %162 : vector<1x1024xi1>, vector<1x1024xf32>
    %164 = arith.truncf %163 : vector<1x1024xf32> to vector<1x1024xbf16>
    %c0_69 = arith.constant 0 : index
    %c0_70 = arith.constant 0 : index
    %165 = vector.load %arg11[%c0_69, %c0_70] : memref<1024x512xbf16, #tpu.memory_space<vmem>>, vector<1024x512xbf16>
    %cst_71 = arith.constant dense<0.000000e+00> : vector<1x512xf32>
    %166 = tpu.matmul %164, %165, %cst_71 {dimension_numbers = #tpu.dot_dimension_numbers<[1], [0], [0], [1], [0, 0, 1, 1], [], []>} : vector<1x1024xbf16>, vector<1024x512xbf16>, vector<1x512xf32> -> vector<1x512xf32>
    %c0_72 = arith.constant 0 : index
    %c0_73 = arith.constant 0 : index
    %167 = vector.load %arg12[%c0_72, %c0_73] : memref<1x512xf32, #tpu.memory_space<vmem>>, vector<1x512xf32>
    %168 = arith.addf %166, %167 : vector<1x512xf32>
    %cst_74 = arith.constant 0.000000e+00 : f32
    %169 = vector.broadcast %cst_74 : f32 to vector<1x512xf32>
    %170 = arith.cmpf oge, %168, %169 : vector<1x512xf32>
    %cst_75 = arith.constant 0.00999999977 : f32
    %171 = vector.broadcast %cst_75 : f32 to vector<1x512xf32>
    %172 = arith.mulf %171, %168 : vector<1x512xf32>
    %173 = arith.select %170, %168, %172 : vector<1x512xi1>, vector<1x512xf32>
    %174 = arith.truncf %173 : vector<1x512xf32> to vector<1x512xbf16>
    %c0_76 = arith.constant 0 : index
    %c0_77 = arith.constant 0 : index
    %175 = vector.load %arg13[%c0_76, %c0_77] : memref<512x256xbf16, #tpu.memory_space<vmem>>, vector<512x256xbf16>
    %cst_78 = arith.constant dense<0.000000e+00> : vector<1x256xf32>
    %176 = tpu.matmul %174, %175, %cst_78 {dimension_numbers = #tpu.dot_dimension_numbers<[1], [0], [0], [1], [0, 0, 1, 1], [], []>} : vector<1x512xbf16>, vector<512x256xbf16>, vector<1x256xf32> -> vector<1x256xf32>
    %c0_79 = arith.constant 0 : index
    %c0_80 = arith.constant 0 : index
    %177 = vector.load %arg14[%c0_79, %c0_80] : memref<1x256xf32, #tpu.memory_space<vmem>>, vector<1x256xf32>
    %178 = arith.addf %176, %177 : vector<1x256xf32>
    %cst_81 = arith.constant 0.000000e+00 : f32
    %179 = vector.broadcast %cst_81 : f32 to vector<1x256xf32>
    %180 = arith.cmpf oge, %178, %179 : vector<1x256xf32>
    %cst_82 = arith.constant 0.00999999977 : f32
    %181 = vector.broadcast %cst_82 : f32 to vector<1x256xf32>
    %182 = arith.mulf %181, %178 : vector<1x256xf32>
    %183 = arith.select %180, %178, %182 : vector<1x256xi1>, vector<1x256xf32>
    %184 = arith.truncf %183 : vector<1x256xf32> to vector<1x256xbf16>
    %c0_83 = arith.constant 0 : index
    %c0_84 = arith.constant 0 : index
    %185 = vector.load %arg15[%c0_83, %c0_84] : memref<256x128xbf16, #tpu.memory_space<vmem>>, vector<256x128xbf16>
    %cst_85 = arith.constant dense<0.000000e+00> : vector<1x128xf32>
    %186 = tpu.matmul %184, %185, %cst_85 {dimension_numbers = #tpu.dot_dimension_numbers<[1], [0], [0], [1], [0, 0, 1, 1], [], []>} : vector<1x256xbf16>, vector<256x128xbf16>, vector<1x128xf32> -> vector<1x128xf32>
    %c0_86 = arith.constant 0 : index
    %c0_87 = arith.constant 0 : index
    %187 = vector.load %arg16[%c0_86, %c0_87] : memref<1x128xf32, #tpu.memory_space<vmem>>, vector<1x128xf32>
    %188 = arith.addf %186, %187 : vector<1x128xf32>
    %c0_88 = arith.constant 0 : index
    %c0_89 = arith.constant 0 : index
    %c0_90 = arith.constant 0 : index
    %189 = vector.load %arg19[%c0_88, %c0_89, %c0_90] : memref<1x1x128xf32, #tpu.memory_space<vmem>>, vector<1x1x128xf32>
    %190 = vector.shape_cast %189 : vector<1x1x128xf32> to vector<1x128xf32>
    %191 = vector.shape_cast %188 : vector<1x128xf32> to vector<1x1x128xf32>
    tpu.vector_store %arg19[%c0_88, %c0_89, %c0_90], %191 {strides = array<i32>} : memref<1x1x128xf32, #tpu.memory_space<vmem>>, vector<1x1x128xf32>,
    return
  }
  func.func @transform_0(%arg0: i32) -> (i32, i32, i32) {
    %c0_i32 = arith.constant 0 : i32
    %c0_i32_0 = arith.constant 0 : i32
    %c0_i32_1 = arith.constant 0 : i32
    return %arg0, %c0_i32, %c0_i32_0 : i32, i32, i32
  }
  func.func @transform_1(%arg0: i32) -> (i32, i32, i32) {
    %c0_i32 = arith.constant 0 : i32
    %c0_i32_0 = arith.constant 0 : i32
    %c0_i32_1 = arith.constant 0 : i32
    return %arg0, %c0_i32, %c0_i32_0 : i32, i32, i32
  }
  func.func @transform_2(%arg0: i32) -> (i32, i32) {
    %c0_i32 = arith.constant 0 : i32
    %c0_i32_0 = arith.constant 0 : i32
    %c0_i32_1 = arith.constant 0 : i32
    return %c0_i32, %c0_i32_0 : i32, i32
  }
  func.func @transform_3(%arg0: i32) -> (i32, i32) {
    %c0_i32 = arith.constant 0 : i32
    %c0_i32_0 = arith.constant 0 : i32
    %c0_i32_1 = arith.constant 0 : i32
    return %c0_i32, %c0_i32_0 : i32, i32
  }
  func.func @transform_4(%arg0: i32) -> (i32, i32) {
    %c0_i32 = arith.constant 0 : i32
    %c0_i32_0 = arith.constant 0 : i32
    %c0_i32_1 = arith.constant 0 : i32
    return %c0_i32, %c0_i32_0 : i32, i32
  }
  func.func @transform_5(%arg0: i32) -> (i32, i32) {
    %c0_i32 = arith.constant 0 : i32
    %c0_i32_0 = arith.constant 0 : i32
    %c0_i32_1 = arith.constant 0 : i32
    return %c0_i32, %c0_i32_0 : i32, i32
  }
  func.func @transform_6(%arg0: i32) -> (i32, i32) {
    %c0_i32 = arith.constant 0 : i32
    %c0_i32_0 = arith.constant 0 : i32
    %c0_i32_1 = arith.constant 0 : i32
    return %c0_i32, %c0_i32_0 : i32, i32
  }
  func.func @transform_7(%arg0: i32) -> (i32, i32) {
    %c0_i32 = arith.constant 0 : i32
    %c0_i32_0 = arith.constant 0 : i32
    %c0_i32_1 = arith.constant 0 : i32
    return %c0_i32, %c0_i32_0 : i32, i32
  }
  func.func @transform_8(%arg0: i32) -> (i32, i32) {
    %c0_i32 = arith.constant 0 : i32
    %c0_i32_0 = arith.constant 0 : i32
    %c0_i32_1 = arith.constant 0 : i32
    return %c0_i32, %c0_i32_0 : i32, i32
  }
  func.func @transform_9(%arg0: i32) -> (i32, i32) {
    %c0_i32 = arith.constant 0 : i32
    %c0_i32_0 = arith.constant 0 : i32
    %c0_i32_1 = arith.constant 0 : i32
    return %c0_i32, %c0_i32_0 : i32, i32
  }
  func.func @transform_10(%arg0: i32) -> (i32, i32) {
    %c0_i32 = arith.constant 0 : i32
    %c0_i32_0 = arith.constant 0 : i32
    %c0_i32_1 = arith.constant 0 : i32
    return %c0_i32, %c0_i32_0 : i32, i32
  }
  func.func @transform_11(%arg0: i32) -> (i32, i32) {
    %c0_i32 = arith.constant 0 : i32
    %c0_i32_0 = arith.constant 0 : i32
    %c0_i32_1 = arith.constant 0 : i32
    return %c0_i32, %c0_i32_0 : i32, i32
  }
  func.func @transform_12(%arg0: i32) -> (i32, i32) {
    %c0_i32 = arith.constant 0 : i32
    %c0_i32_0 = arith.constant 0 : i32
    %c0_i32_1 = arith.constant 0 : i32
    return %c0_i32, %c0_i32_0 : i32, i32
  }
  func.func @transform_13(%arg0: i32) -> (i32, i32) {
    %c0_i32 = arith.constant 0 : i32
    %c0_i32_0 = arith.constant 0 : i32
    %c0_i32_1 = arith.constant 0 : i32
    return %c0_i32, %c0_i32_0 : i32, i32
  }
  func.func @transform_14(%arg0: i32) -> (i32, i32) {
    %c0_i32 = arith.constant 0 : i32
    %c0_i32_0 = arith.constant 0 : i32
    %c0_i32_1 = arith.constant 0 : i32
    return %c0_i32, %c0_i32_0 : i32, i32
  }
  func.func @transform_15(%arg0: i32) -> (i32, i32) {
    %c0_i32 = arith.constant 0 : i32
    %c0_i32_0 = arith.constant 0 : i32
    %c0_i32_1 = arith.constant 0 : i32
    return %c0_i32, %c0_i32_0 : i32, i32
  }
  func.func @transform_16(%arg0: i32) -> (i32, i32, i32) {
    %c0_i32 = arith.constant 0 : i32
    %c0_i32_0 = arith.constant 0 : i32
    %c0_i32_1 = arith.constant 0 : i32
    return %arg0, %c0_i32, %c0_i32_0 : i32, i32, i32
  }
  func.func @transform_17(%arg0: i32) -> (i32, i32, i32) {
    %c0_i32 = arith.constant 0 : i32
    %c0_i32_0 = arith.constant 0 : i32
    %c0_i32_1 = arith.constant 0 : i32
    return %arg0, %c0_i32, %c0_i32_0 : i32, i32, i32
  }
  func.func @transform_18(%arg0: i32) -> (i32, i32, i32) {
    %c0_i32 = arith.constant 0 : i32
    %c0_i32_0 = arith.constant 0 : i32
    %c0_i32_1 = arith.constant 0 : i32
    return %arg0, %c0_i32, %c0_i32_0 : i32, i32, i32
  }
}

</mosaic_0001>

<llo_original>
// kernel: my_model_forward.1
$region0: #{my_model_forward.1}
  #allocation0 [shape = 'u32[]', space=smem, size = 0x4, offset = 0x4, fixed_abs, tag = 'smem constant byte address 0x4 - core index']
  #allocation1 [shape = 'u32[144,128]{1,0:T(1,128)}', space=vmem, size = 0x12000, scoped, tag = 'internal scratch']
  %s0 = inlined_call_operand.vmem [shape: f32[2,9,128], index: 0, kind: input, shape index: {}]
  %s1 = inlined_call_operand.vmem [shape: f32[2,9,128], index: 1, kind: input, shape index: {}]
  %s2 = inlined_call_operand.vmem [shape: f32[128,128], index: 2, kind: input, shape index: {}]
  %s3 = inlined_call_operand.vmem [shape: f32[1,128], index: 3, kind: input, shape index: {}]
  %s4 = inlined_call_operand.hbm [shape: f32[128,128], index: 4, kind: input, shape index: {}]
  %s5 = inlined_call_operand.vmem [shape: f32[1,128], index: 5, kind: input, shape index: {}]
  %s6 = inlined_call_operand.hbm [shape: f32[128,128], index: 6, kind: input, shape index: {}]
  %s7 = inlined_call_operand.vmem [shape: f32[1,128], index: 7, kind: input, shape index: {}]
  %s8 = inlined_call_operand.hbm [shape: bf16[256,1024], index: 8, kind: input, shape index: {}]
  %s9 = inlined_call_operand.vmem [shape: f32[1,1024], index: 9, kind: input, shape index: {}]
  %s10 = inlined_call_operand.hbm [shape: bf16[1024,512], index: 10, kind: input, shape index: {}]
  %s11 = inlined_call_operand.vmem [shape: f32[1,512], index: 11, kind: input, shape index: {}]
  %s12 = inlined_call_operand.hbm [shape: bf16[512,256], index: 12, kind: input, shape index: {}]
  %s13 = inlined_call_operand.vmem [shape: f32[1,256], index: 13, kind: input, shape index: {}]
  %s14 = inlined_call_operand.hbm [shape: bf16[256,128], index: 14, kind: input, shape index: {}]
  %s15 = inlined_call_operand.vmem [shape: f32[1,128], index: 15, kind: input, shape index: {}]
  %s16 = inlined_call_operand.vmem [shape: f32[2,9,128], index: 16, kind: output, shape index: {0}]
  %s17 = inlined_call_operand.vmem [shape: f32[2,9,128], index: 17, kind: output, shape index: {1}]
  %s18 = inlined_call_operand.hbm [shape: f32[2,1,128], index: 18, kind: output, shape index: {2}]
  %19 = xla_tuple %s16, %s17, %s18
  %s20 = sld [smem:[#allocation0]]
  $region137: #{my_model_forward.1} parent=0
    _
  %s22 = ssub.s32 1, %s20
  %s23 = scalar_select 0, %s22, %s20
  $region1: #{my_model_forward.1} parent=0
    #allocation2 [shape = 'u8[65536]{0}', space=vmem, size = 0x10000, scoped, tag = 'input window, operand 4, single buffered']
    #allocation3 [shape = 's32[2]{0}', space=sflag, size = 0x8, scoped, tag = 'scoped memory for my_model_forward.1']
    #allocation4 [shape = 's32[2]{0}', space=sflag, size = 0x8, scoped, tag = 'scoped memory for my_model_forward.1']
    #allocation5 [shape = 'u8[65536]{0}', space=vmem, size = 0x10000, scoped, tag = 'input window, operand 6, single buffered']
    #allocation6 [shape = 's32[1]{0}', space=sflag, size = 0x4, scoped, tag = 'scoped memory for my_model_forward.1']
    #allocation7 [shape = 'u8[524288]{0}', space=vmem, size = 0x80000, scoped, tag = 'input window, operand 8, single buffered']
    #allocation8 [shape = 'u8[1048576]{0}', space=vmem, size = 0x100000, scoped, tag = 'input window, operand 10, single buffered']
    #allocation9 [shape = 's32[1]{0}', space=sflag, size = 0x4, scoped, tag = 'scoped memory for my_model_forward.1']
    #allocation10 [shape = 'u8[262144]{0}', space=vmem, size = 0x40000, scoped, tag = 'input window, operand 12, single buffered']
    #allocation11 [shape = 'u8[65536]{0}', space=vmem, size = 0x10000, scoped, tag = 'input window, operand 14, single buffered']
    #allocation12 [shape = 's32[1]{0}', space=sflag, size = 0x4, scoped, tag = 'scoped memory for my_model_forward.1']
    #allocation13 [shape = 'u8[1024]{0}', space=vmem, size = 0x400, scoped, tag = 'output window, operand 2']
    %24 = vsyncpa [#allocation3], 0
    %25 = vsyncpa [#allocation6], 0
    %26 = vsyncpa [#allocation9], 0
    %27 = vsyncpa [#allocation12], 0
    %28 = vsyncpa [#allocation4], 0
    %s29 = scalar_lea.sflag [#allocation4], 1
    %30 = vsyncpa %s29, 0
    loop: start=0, step=1, limit=4
    $region2: #{my_model_forward.1} parent=1 // loop_pre_header
      _
    $region3: #{my_model_forward.1} parent=1 // loop_header
      %s32 = sphi 0, %s36
      %p33 = scmp.ge.s32.totalorder %s32, 4
      %s42 = sphi 0, %s44
      %s45 = sphi 0, %s42
      %s46 = sphi 0, %s45
      %s62 = sphi 0, %s46
      %s68 = sphi 0, %s70
      %s71 = sphi 0, %s68
      %s72 = sphi 0, %s71
      %s88 = sphi 0, %s72
      %s92 = sphi 0, %s92
      %s94 = sphi 0, %s92
      %s95 = sphi 0, %s94
      %s109 = sphi 0, %s95
      %s113 = sphi 0, %s113
      %s115 = sphi 0, %s113
      %s116 = sphi 0, %s115
      %s130 = sphi 0, %s116
      %s134 = sphi 0, %s134
      %s136 = sphi 0, %s134
      %s137 = sphi 0, %s136
      %s151 = sphi 0, %s137
      %s155 = sphi 0, %s155
      %s157 = sphi 0, %s155
      %s158 = sphi 0, %s157
      %s172 = sphi 0, %s158
      %s176 = sphi 0, %s176
      %s178 = sphi 0, %s176
      %s179 = sphi 0, %s178
      %s193 = sphi 0, %s179
      %s197 = sphi 0, %s197
      %s199 = sphi 0, %s197
      %s200 = sphi 0, %s199
      %s214 = sphi 0, %s200
      %s218 = sphi 0, %s218
      %s220 = sphi 0, %s218
      %s221 = sphi 0, %s220
      %s235 = sphi 0, %s221
      %s239 = sphi 0, %s239
      %s241 = sphi 0, %s239
      %s242 = sphi 0, %s241
      %s256 = sphi 0, %s242
      %s260 = sphi 0, %s260
      %s262 = sphi 0, %s260
      %s263 = sphi 0, %s262
      %s277 = sphi 0, %s263
      %s281 = sphi 0, %s281
      %s283 = sphi 0, %s281
      %s284 = sphi 0, %s283
      %s298 = sphi 0, %s284
      %s302 = sphi 0, %s302
      %s304 = sphi 0, %s302
      %s305 = sphi 0, %s304
      %s319 = sphi 0, %s305
      %s323 = sphi 0, %s323
      %s325 = sphi 0, %s323
      %s326 = sphi 0, %s325
      %s340 = sphi 0, %s326
      %s344 = sphi 0, %s344
      %s346 = sphi 0, %s344
      %s347 = sphi 0, %s346
      %s361 = sphi 0, %s347
      %s365 = sphi 0, %s365
      %s367 = sphi 0, %s365
      %s368 = sphi 0, %s367
      %s382 = sphi 0, %s368
      %s388 = sphi 0, %s390
      %s391 = sphi 0, %s388
      %s392 = sphi 0, %s391
      %s408 = sphi 0, %s392
      %s414 = sphi 0, %s416
      %s417 = sphi 0, %s414
      %s418 = sphi 0, %s417
      %s434 = sphi 0, %s418
      %s440 = sphi 0, %s442
      %s443 = sphi 0, %s440
      %s444 = sphi 0, %s443
      %s460 = sphi 0, %s444
    $region4: #{my_model_forward.1} parent=1 // loop_header_branch
      %35 = sbr.rel (%p33) target = $region8
    $region5: #{my_model_forward.1} parent=1 // loop_body
      %s37 = ssub.s32 %s32, 1
      %s38 = ssub.s32 %s32, 2
      %s39 = sadd.s32 %s32, 1
      %s40 = ssub.s32 %s32, %s39
      %p41 = scmp.eq.s32.totalorder %s40, 0
      %s43 = sadd.s32 %s42, 1
      %s44 = scalar_select %p41, %s42, %s43
      %p47 = pneg %p41
      %p48 = scmp.eq.s32.totalorder %s32, 1
      %p49 = por %p47, %p48
      %p50 = scmp.ne.s32.totalorder %s42, %s45
      %p51 = scmp.eq.s32.totalorder %s32, 0
      %p52 = por %p50, %p51
      %p53 = scmp.ne.s32.totalorder %s42, %s45
      %p54 = scmp.eq.s32.totalorder %s37, 1
      %p55 = por %p53, %p54
      %p56 = scmp.ne.s32.totalorder %s45, %s46
      %p57 = scmp.eq.s32.totalorder %s37, 0
      %p58 = por %p56, %p57
      %p59 = scmp.ne.s32.totalorder %s45, %s46
      %p60 = scmp.eq.s32.totalorder %s38, 1
      %p61 = por %p59, %p60
      %p63 = scmp.ne.s32.totalorder %s46, %s62
      %p64 = scmp.eq.s32.totalorder %s38, 0
      %p65 = por %p63, %p64
      %s66 = ssub.s32 %s32, %s39
      %p67 = scmp.eq.s32.totalorder %s66, 0
      %s69 = sadd.s32 %s68, 1
      %s70 = scalar_select %p67, %s68, %s69
      %p73 = pneg %p67
      %p74 = scmp.eq.s32.totalorder %s32, 1
      %p75 = por %p73, %p74
      %p76 = scmp.ne.s32.totalorder %s68, %s71
      %p77 = scmp.eq.s32.totalorder %s32, 0
      %p78 = por %p76, %p77
      %p79 = scmp.ne.s32.totalorder %s68, %s71
      %p80 = scmp.eq.s32.totalorder %s37, 1
      %p81 = por %p79, %p80
      %p82 = scmp.ne.s32.totalorder %s71, %s72
      %p83 = scmp.eq.s32.totalorder %s37, 0
      %p84 = por %p82, %p83
      %p85 = scmp.ne.s32.totalorder %s71, %s72
      %p86 = scmp.eq.s32.totalorder %s38, 1
      %p87 = por %p85, %p86
      %p89 = scmp.ne.s32.totalorder %s72, %s88
      %p90 = scmp.eq.s32.totalorder %s38, 0
      %p91 = por %p89, %p90
      %s93 = sadd.s32 %s92, 1
      %p96 = scmp.eq.s32.totalorder %s32, 1
      %p97 = scmp.ne.s32.totalorder %s92, %s94
      %p98 = scmp.eq.s32.totalorder %s32, 0
      %p99 = por %p97, %p98
      %p100 = scmp.ne.s32.totalorder %s92, %s94
      %p101 = scmp.eq.s32.totalorder %s37, 1
      %p102 = por %p100, %p101
      %p103 = scmp.ne.s32.totalorder %s94, %s95
      %p104 = scmp.eq.s32.totalorder %s37, 0
      %p105 = por %p103, %p104
      %p106 = scmp.ne.s32.totalorder %s94, %s95
      %p107 = scmp.eq.s32.totalorder %s38, 1
      %p108 = por %p106, %p107
      %p110 = scmp.ne.s32.totalorder %s95, %s109
      %p111 = scmp.eq.s32.totalorder %s38, 0
      %p112 = por %p110, %p111
      %s114 = sadd.s32 %s113, 1
      %p117 = scmp.eq.s32.totalorder %s32, 1
      %p118 = scmp.ne.s32.totalorder %s113, %s115
      %p119 = scmp.eq.s32.totalorder %s32, 0
      %p120 = por %p118, %p119
      %p121 = scmp.ne.s32.totalorder %s113, %s115
      %p122 = scmp.eq.s32.totalorder %s37, 1
      %p123 = por %p121, %p122
      %p124 = scmp.ne.s32.totalorder %s115, %s116
      %p125 = scmp.eq.s32.totalorder %s37, 0
      %p126 = por %p124, %p125
      %p127 = scmp.ne.s32.totalorder %s115, %s116
      %p128 = scmp.eq.s32.totalorder %s38, 1
      %p129 = por %p127, %p128
      %p131 = scmp.ne.s32.totalorder %s116, %s130
      %p132 = scmp.eq.s32.totalorder %s38, 0
      %p133 = por %p131, %p132
      %s135 = sadd.s32 %s134, 1
      %p138 = scmp.eq.s32.totalorder %s32, 1
      %p139 = scmp.ne.s32.totalorder %s134, %s136
      %p140 = scmp.eq.s32.totalorder %s32, 0
      %p141 = por %p139, %p140
      %p142 = scmp.ne.s32.totalorder %s134, %s136
      %p143 = scmp.eq.s32.totalorder %s37, 1
      %p144 = por %p142, %p143
      %p145 = scmp.ne.s32.totalorder %s136, %s137
      %p146 = scmp.eq.s32.totalorder %s37, 0
      %p147 = por %p145, %p146
      %p148 = scmp.ne.s32.totalorder %s136, %s137
      %p149 = scmp.eq.s32.totalorder %s38, 1
      %p150 = por %p148, %p149
      %p152 = scmp.ne.s32.totalorder %s137, %s151
      %p153 = scmp.eq.s32.totalorder %s38, 0
      %p154 = por %p152, %p153
      %s156 = sadd.s32 %s155, 1
      %p159 = scmp.eq.s32.totalorder %s32, 1
      %p160 = scmp.ne.s32.totalorder %s155, %s157
      %p161 = scmp.eq.s32.totalorder %s32, 0
      %p162 = por %p160, %p161
      %p163 = scmp.ne.s32.totalorder %s155, %s157
      %p164 = scmp.eq.s32.totalorder %s37, 1
      %p165 = por %p163, %p164
      %p166 = scmp.ne.s32.totalorder %s157, %s158
      %p167 = scmp.eq.s32.totalorder %s37, 0
      %p168 = por %p166, %p167
      %p169 = scmp.ne.s32.totalorder %s157, %s158
      %p170 = scmp.eq.s32.totalorder %s38, 1
      %p171 = por %p169, %p170
      %p173 = scmp.ne.s32.totalorder %s158, %s172
      %p174 = scmp.eq.s32.totalorder %s38, 0
      %p175 = por %p173, %p174
      %s177 = sadd.s32 %s176, 1
      %p180 = scmp.eq.s32.totalorder %s32, 1
      %p181 = scmp.ne.s32.totalorder %s176, %s178
      %p182 = scmp.eq.s32.totalorder %s32, 0
      %p183 = por %p181, %p182
      %p184 = scmp.ne.s32.totalorder %s176, %s178
      %p185 = scmp.eq.s32.totalorder %s37, 1
      %p186 = por %p184, %p185
      %p187 = scmp.ne.s32.totalorder %s178, %s179
      %p188 = scmp.eq.s32.totalorder %s37, 0
      %p189 = por %p187, %p188
      %p190 = scmp.ne.s32.totalorder %s178, %s179
      %p191 = scmp.eq.s32.totalorder %s38, 1
      %p192 = por %p190, %p191
      %p194 = scmp.ne.s32.totalorder %s179, %s193
      %p195 = scmp.eq.s32.totalorder %s38, 0
      %p196 = por %p194, %p195
      %s198 = sadd.s32 %s197, 1
      %p201 = scmp.eq.s32.totalorder %s32, 1
      %p202 = scmp.ne.s32.totalorder %s197, %s199
      %p203 = scmp.eq.s32.totalorder %s32, 0
      %p204 = por %p202, %p203
      %p205 = scmp.ne.s32.totalorder %s197, %s199
      %p206 = scmp.eq.s32.totalorder %s37, 1
      %p207 = por %p205, %p206
      %p208 = scmp.ne.s32.totalorder %s199, %s200
      %p209 = scmp.eq.s32.totalorder %s37, 0
      %p210 = por %p208, %p209
      %p211 = scmp.ne.s32.totalorder %s199, %s200
      %p212 = scmp.eq.s32.totalorder %s38, 1
      %p213 = por %p211, %p212
      %p215 = scmp.ne.s32.totalorder %s200, %s214
      %p216 = scmp.eq.s32.totalorder %s38, 0
      %p217 = por %p215, %p216
      %s219 = sadd.s32 %s218, 1
      %p222 = scmp.eq.s32.totalorder %s32, 1
      %p223 = scmp.ne.s32.totalorder %s218, %s220
      %p224 = scmp.eq.s32.totalorder %s32, 0
      %p225 = por %p223, %p224
      %p226 = scmp.ne.s32.totalorder %s218, %s220
      %p227 = scmp.eq.s32.totalorder %s37, 1
      %p228 = por %p226, %p227
      %p229 = scmp.ne.s32.totalorder %s220, %s221
      %p230 = scmp.eq.s32.totalorder %s37, 0
      %p231 = por %p229, %p230
      %p232 = scmp.ne.s32.totalorder %s220, %s221
      %p233 = scmp.eq.s32.totalorder %s38, 1
      %p234 = por %p232, %p233
      %p236 = scmp.ne.s32.totalorder %s221, %s235
      %p237 = scmp.eq.s32.totalorder %s38, 0
      %p238 = por %p236, %p237
      %s240 = sadd.s32 %s239, 1
      %p243 = scmp.eq.s32.totalorder %s32, 1
      %p244 = scmp.ne.s32.totalorder %s239, %s241
      %p245 = scmp.eq.s32.totalorder %s32, 0
      %p246 = por %p244, %p245
      %p247 = scmp.ne.s32.totalorder %s239, %s241
      %p248 = scmp.eq.s32.totalorder %s37, 1
      %p249 = por %p247, %p248
      %p250 = scmp.ne.s32.totalorder %s241, %s242
      %p251 = scmp.eq.s32.totalorder %s37, 0
      %p252 = por %p250, %p251
      %p253 = scmp.ne.s32.totalorder %s241, %s242
      %p254 = scmp.eq.s32.totalorder %s38, 1
      %p255 = por %p253, %p254
      %p257 = scmp.ne.s32.totalorder %s242, %s256
      %p258 = scmp.eq.s32.totalorder %s38, 0
      %p259 = por %p257, %p258
      %s261 = sadd.s32 %s260, 1
      %p264 = scmp.eq.s32.totalorder %s32, 1
      %p265 = scmp.ne.s32.totalorder %s260, %s262
      %p266 = scmp.eq.s32.totalorder %s32, 0
      %p267 = por %p265, %p266
      %p268 = scmp.ne.s32.totalorder %s260, %s262
      %p269 = scmp.eq.s32.totalorder %s37, 1
      %p270 = por %p268, %p269
      %p271 = scmp.ne.s32.totalorder %s262, %s263
      %p272 = scmp.eq.s32.totalorder %s37, 0
      %p273 = por %p271, %p272
      %p274 = scmp.ne.s32.totalorder %s262, %s263
      %p275 = scmp.eq.s32.totalorder %s38, 1
      %p276 = por %p274, %p275
      %p278 = scmp.ne.s32.totalorder %s263, %s277
      %p279 = scmp.eq.s32.totalorder %s38, 0
      %p280 = por %p278, %p279
      %s282 = sadd.s32 %s281, 1
      %p285 = scmp.eq.s32.totalorder %s32, 1
      %p286 = scmp.ne.s32.totalorder %s281, %s283
      %p287 = scmp.eq.s32.totalorder %s32, 0
      %p288 = por %p286, %p287
      %p289 = scmp.ne.s32.totalorder %s281, %s283
      %p290 = scmp.eq.s32.totalorder %s37, 1
      %p291 = por %p289, %p290
      %p292 = scmp.ne.s32.totalorder %s283, %s284
      %p293 = scmp.eq.s32.totalorder %s37, 0
      %p294 = por %p292, %p293
      %p295 = scmp.ne.s32.totalorder %s283, %s284
      %p296 = scmp.eq.s32.totalorder %s38, 1
      %p297 = por %p295, %p296
      %p299 = scmp.ne.s32.totalorder %s284, %s298
      %p300 = scmp.eq.s32.totalorder %s38, 0
      %p301 = por %p299, %p300
      %s303 = sadd.s32 %s302, 1
      %p306 = scmp.eq.s32.totalorder %s32, 1
      %p307 = scmp.ne.s32.totalorder %s302, %s304
      %p308 = scmp.eq.s32.totalorder %s32, 0
      %p309 = por %p307, %p308
      %p310 = scmp.ne.s32.totalorder %s302, %s304
      %p311 = scmp.eq.s32.totalorder %s37, 1
      %p312 = por %p310, %p311
      %p313 = scmp.ne.s32.totalorder %s304, %s305
      %p314 = scmp.eq.s32.totalorder %s37, 0
      %p315 = por %p313, %p314
      %p316 = scmp.ne.s32.totalorder %s304, %s305
      %p317 = scmp.eq.s32.totalorder %s38, 1
      %p318 = por %p316, %p317
      %p320 = scmp.ne.s32.totalorder %s305, %s319
      %p321 = scmp.eq.s32.totalorder %s38, 0
      %p322 = por %p320, %p321
      %s324 = sadd.s32 %s323, 1
      %p327 = scmp.eq.s32.totalorder %s32, 1
      %p328 = scmp.ne.s32.totalorder %s323, %s325
      %p329 = scmp.eq.s32.totalorder %s32, 0
      %p330 = por %p328, %p329
      %p331 = scmp.ne.s32.totalorder %s323, %s325
      %p332 = scmp.eq.s32.totalorder %s37, 1
      %p333 = por %p331, %p332
      %p334 = scmp.ne.s32.totalorder %s325, %s326
      %p335 = scmp.eq.s32.totalorder %s37, 0
      %p336 = por %p334, %p335
      %p337 = scmp.ne.s32.totalorder %s325, %s326
      %p338 = scmp.eq.s32.totalorder %s38, 1
      %p339 = por %p337, %p338
      %p341 = scmp.ne.s32.totalorder %s326, %s340
      %p342 = scmp.eq.s32.totalorder %s38, 0
      %p343 = por %p341, %p342
      %s345 = sadd.s32 %s344, 1
      %p348 = scmp.eq.s32.totalorder %s32, 1
      %p349 = scmp.ne.s32.totalorder %s344, %s346
      %p350 = scmp.eq.s32.totalorder %s32, 0
      %p351 = por %p349, %p350
      %p352 = scmp.ne.s32.totalorder %s344, %s346
      %p353 = scmp.eq.s32.totalorder %s37, 1
      %p354 = por %p352, %p353
      %p355 = scmp.ne.s32.totalorder %s346, %s347
      %p356 = scmp.eq.s32.totalorder %s37, 0
      %p357 = por %p355, %p356
      %p358 = scmp.ne.s32.totalorder %s346, %s347
      %p359 = scmp.eq.s32.totalorder %s38, 1
      %p360 = por %p358, %p359
      %p362 = scmp.ne.s32.totalorder %s347, %s361
      %p363 = scmp.eq.s32.totalorder %s38, 0
      %p364 = por %p362, %p363
      %s366 = sadd.s32 %s365, 1
      %p369 = scmp.eq.s32.totalorder %s32, 1
      %p370 = scmp.ne.s32.totalorder %s365, %s367
      %p371 = scmp.eq.s32.totalorder %s32, 0
      %p372 = por %p370, %p371
      %p373 = scmp.ne.s32.totalorder %s365, %s367
      %p374 = scmp.eq.s32.totalorder %s37, 1
      %p375 = por %p373, %p374
      %p376 = scmp.ne.s32.totalorder %s367, %s368
      %p377 = scmp.eq.s32.totalorder %s37, 0
      %p378 = por %p376, %p377
      %p379 = scmp.ne.s32.totalorder %s367, %s368
      %p380 = scmp.eq.s32.totalorder %s38, 1
      %p381 = por %p379, %p380
      %p383 = scmp.ne.s32.totalorder %s368, %s382
      %p384 = scmp.eq.s32.totalorder %s38, 0
      %p385 = por %p383, %p384
      %s386 = ssub.s32 %s32, %s39
      %p387 = scmp.eq.s32.totalorder %s386, 0
      %s389 = sadd.s32 %s388, 1
      %s390 = scalar_select %p387, %s388, %s389
      %p393 = pneg %p387
      %p394 = scmp.eq.s32.totalorder %s32, 1
      %p395 = por %p393, %p394
      %p396 = scmp.ne.s32.totalorder %s388, %s391
      %p397 = scmp.eq.s32.totalorder %s32, 0
      %p398 = por %p396, %p397
      %p399 = scmp.ne.s32.totalorder %s388, %s391
      %p400 = scmp.eq.s32.totalorder %s37, 1
      %p401 = por %p399, %p400
      %p402 = scmp.ne.s32.totalorder %s391, %s392
      %p403 = scmp.eq.s32.totalorder %s37, 0
      %p404 = por %p402, %p403
      %p405 = scmp.ne.s32.totalorder %s391, %s392
      %p406 = scmp.eq.s32.totalorder %s38, 1
      %p407 = por %p405, %p406
      %p409 = scmp.ne.s32.totalorder %s392, %s408
      %p410 = scmp.eq.s32.totalorder %s38, 0
      %p411 = por %p409, %p410
      %s412 = ssub.s32 %s32, %s39
      %p413 = scmp.eq.s32.totalorder %s412, 0
      %s415 = sadd.s32 %s414, 1
      %s416 = scalar_select %p413, %s414, %s415
      %p419 = pneg %p413
      %p420 = scmp.eq.s32.totalorder %s32, 1
      %p421 = por %p419, %p420
      %p422 = scmp.ne.s32.totalorder %s414, %s417
      %p423 = scmp.eq.s32.totalorder %s32, 0
      %p424 = por %p422, %p423
      %p425 = scmp.ne.s32.totalorder %s414, %s417
      %p426 = scmp.eq.s32.totalorder %s37, 1
      %p427 = por %p425, %p426
      %p428 = scmp.ne.s32.totalorder %s417, %s418
      %p429 = scmp.eq.s32.totalorder %s37, 0
      %p430 = por %p428, %p429
      %p431 = scmp.ne.s32.totalorder %s417, %s418
      %p432 = scmp.eq.s32.totalorder %s38, 1
      %p433 = por %p431, %p432
      %p435 = scmp.ne.s32.totalorder %s418, %s434
      %p436 = scmp.eq.s32.totalorder %s38, 0
      %p437 = por %p435, %p436
      %s438 = ssub.s32 %s32, %s39
      %p439 = scmp.eq.s32.totalorder %s438, 0
      %s441 = sadd.s32 %s440, 1
      %s442 = scalar_select %p439, %s440, %s441
      %p445 = pneg %p439
      %p446 = scmp.eq.s32.totalorder %s32, 1
      %p447 = por %p445, %p446
      %p448 = scmp.ne.s32.totalorder %s440, %s443
      %p449 = scmp.eq.s32.totalorder %s32, 0
      %p450 = por %p448, %p449
      %p451 = scmp.ne.s32.totalorder %s440, %s443
      %p452 = scmp.eq.s32.totalorder %s37, 1
      %p453 = por %p451, %p452
      %p454 = scmp.ne.s32.totalorder %s443, %s444
      %p455 = scmp.eq.s32.totalorder %s37, 0
      %p456 = por %p454, %p455
      %p457 = scmp.ne.s32.totalorder %s443, %s444
      %p458 = scmp.eq.s32.totalorder %s38, 1
      %p459 = por %p457, %p458
      %p461 = scmp.ne.s32.totalorder %s444, %s460
      %p462 = scmp.eq.s32.totalorder %s38, 0
      %p463 = por %p461, %p462
      %p464 = scmp.le.s32.totalorder 1, %s32
      %p465 = scmp.lt.s32.totalorder %s32, 3
      %p466 = pnand %p464, %p465
      %p467 = pneg %p466
      // Predicated region
      $region9: #{my_model_forward.1} parent=5 // pred_check
        _
      $region10: #{my_model_forward.1} parent=5 // pred_check_branch
        %469 = sbr.rel (%p466) target = $region12
      $region11: #{my_model_forward.1} parent=5 // pred_region
        %s470 = ssub.s32 %s32, 1
        // Predicated region
        $region13: #{my_model_forward.1} parent=11 // pred_check
          %p471 = pneg %p105
        $region14: #{my_model_forward.1} parent=11 // pred_check_branch
          %473 = sbr.rel (%p471) target = $region16
        $region15: #{my_model_forward.1} parent=11 // pred_region
          _
        $region16: #{my_model_forward.1} parent=11 // pred_fallthru
          _
        // Predicated region
        $region17: #{my_model_forward.1} parent=11 // pred_check
          %p474 = pneg %p126
        $region18: #{my_model_forward.1} parent=11 // pred_check_branch
          %476 = sbr.rel (%p474) target = $region20
        $region19: #{my_model_forward.1} parent=11 // pred_region
          _
        $region20: #{my_model_forward.1} parent=11 // pred_fallthru
          _
        // Predicated region
        $region21: #{my_model_forward.1} parent=11 // pred_check
          %p477 = pneg %p147
        $region22: #{my_model_forward.1} parent=11 // pred_check_branch
          %479 = sbr.rel (%p477) target = $region24
        $region23: #{my_model_forward.1} parent=11 // pred_region
          %s481 = ssub.s32 2048, 2048
          %482 = vsyncadd [#allocation3], %s481
          %s483 = sshll.u32 [#allocation2], 4
          %s484 = int_to_ptr.vmem [resolvable:$true] %s483
          %489 = dma.hbm_to_vmem [thread:$0]  %s4, 2048, %s484, [#allocation3], 128, 128, 8
        $region24: #{my_model_forward.1} parent=11 // pred_fallthru
          _
        // Predicated region
        $region25: #{my_model_forward.1} parent=11 // pred_check
          %p490 = pneg %p168
        $region26: #{my_model_forward.1} parent=11 // pred_check_branch
          %492 = sbr.rel (%p490) target = $region28
        $region27: #{my_model_forward.1} parent=11 // pred_region
          _
        $region28: #{my_model_forward.1} parent=11 // pred_fallthru
          _
        // Predicated region
        $region29: #{my_model_forward.1} parent=11 // pred_check
          %p493 = pneg %p189
        $region30: #{my_model_forward.1} parent=11 // pred_check_branch
          %495 = sbr.rel (%p493) target = $region32
        $region31: #{my_model_forward.1} parent=11 // pred_region
          %s497 = ssub.s32 2048, 2048
          %498 = vsyncadd [#allocation6], %s497
          %s499 = sshll.u32 [#allocation5], 4
          %s500 = int_to_ptr.vmem [resolvable:$true] %s499
          %505 = dma.hbm_to_vmem [thread:$0]  %s6, 2048, %s500, [#allocation6], 128, 128, 8
        $region32: #{my_model_forward.1} parent=11 // pred_fallthru
          _
        // Predicated region
        $region33: #{my_model_forward.1} parent=11 // pred_check
          %p506 = pneg %p210
        $region34: #{my_model_forward.1} parent=11 // pred_check_branch
          %508 = sbr.rel (%p506) target = $region36
        $region35: #{my_model_forward.1} parent=11 // pred_region
          _
        $region36: #{my_model_forward.1} parent=11 // pred_fallthru
          _
        // Predicated region
        $region37: #{my_model_forward.1} parent=11 // pred_check
          %p509 = pneg %p231
        $region38: #{my_model_forward.1} parent=11 // pred_check_branch
          %511 = sbr.rel (%p509) target = $region40
        $region39: #{my_model_forward.1} parent=11 // pred_region
          %s513 = ssub.s32 16384, 16384
          %514 = vsyncadd [#allocation6], %s513
          %s515 = sshll.u32 [#allocation7], 4
          %s516 = int_to_ptr.vmem [resolvable:$true] %s515
          %521 = dma.hbm_to_vmem [thread:$0]  %s8, 16384, %s516, [#allocation6], 512, 512, 32
        $region40: #{my_model_forward.1} parent=11 // pred_fallthru
          _
        // Predicated region
        $region41: #{my_model_forward.1} parent=11 // pred_check
          %p522 = pneg %p252
        $region42: #{my_model_forward.1} parent=11 // pred_check_branch
          %524 = sbr.rel (%p522) target = $region44
        $region43: #{my_model_forward.1} parent=11 // pred_region
          _
        $region44: #{my_model_forward.1} parent=11 // pred_fallthru
          _
        // Predicated region
        $region45: #{my_model_forward.1} parent=11 // pred_check
          %p525 = pneg %p273
        $region46: #{my_model_forward.1} parent=11 // pred_check_branch
          %527 = sbr.rel (%p525) target = $region48
        $region47: #{my_model_forward.1} parent=11 // pred_region
          %s529 = ssub.s32 32768, 32768
          %530 = vsyncadd [#allocation9], %s529
          %s531 = sshll.u32 [#allocation8], 4
          %s532 = int_to_ptr.vmem [resolvable:$true] %s531
          %537 = dma.hbm_to_vmem [thread:$0]  %s10, 32768, %s532, [#allocation9], 256, 256, 16
        $region48: #{my_model_forward.1} parent=11 // pred_fallthru
          _
        // Predicated region
        $region49: #{my_model_forward.1} parent=11 // pred_check
          %p538 = pneg %p294
        $region50: #{my_model_forward.1} parent=11 // pred_check_branch
          %540 = sbr.rel (%p538) target = $region52
        $region51: #{my_model_forward.1} parent=11 // pred_region
          _
        $region52: #{my_model_forward.1} parent=11 // pred_fallthru
          _
        // Predicated region
        $region53: #{my_model_forward.1} parent=11 // pred_check
          %p541 = pneg %p315
        $region54: #{my_model_forward.1} parent=11 // pred_check_branch
          %543 = sbr.rel (%p541) target = $region56
        $region55: #{my_model_forward.1} parent=11 // pred_region
          %s545 = ssub.s32 8192, 8192
          %546 = vsyncadd [#allocation9], %s545
          %s547 = sshll.u32 [#allocation10], 4
          %s548 = int_to_ptr.vmem [resolvable:$true] %s547
          %553 = dma.hbm_to_vmem [thread:$0]  %s12, 8192, %s548, [#allocation9], 128, 128, 8
        $region56: #{my_model_forward.1} parent=11 // pred_fallthru
          _
        // Predicated region
        $region57: #{my_model_forward.1} parent=11 // pred_check
          %p554 = pneg %p336
        $region58: #{my_model_forward.1} parent=11 // pred_check_branch
          %556 = sbr.rel (%p554) target = $region60
        $region59: #{my_model_forward.1} parent=11 // pred_region
          _
        $region60: #{my_model_forward.1} parent=11 // pred_fallthru
          _
        // Predicated region
        $region61: #{my_model_forward.1} parent=11 // pred_check
          %p557 = pneg %p357
        $region62: #{my_model_forward.1} parent=11 // pred_check_branch
          %559 = sbr.rel (%p557) target = $region64
        $region63: #{my_model_forward.1} parent=11 // pred_region
          %s561 = ssub.s32 2048, 2048
          %562 = vsyncadd [#allocation12], %s561
          %s563 = sshll.u32 [#allocation11], 4
          %s564 = int_to_ptr.vmem [resolvable:$true] %s563
          %569 = dma.hbm_to_vmem [thread:$0]  %s14, 2048, %s564, [#allocation12], 64, 64, 4
        $region64: #{my_model_forward.1} parent=11 // pred_fallthru
          _
        // Predicated region
        $region65: #{my_model_forward.1} parent=11 // pred_check
          %p570 = pneg %p378
        $region66: #{my_model_forward.1} parent=11 // pred_check_branch
          %572 = sbr.rel (%p570) target = $region68
        $region67: #{my_model_forward.1} parent=11 // pred_region
          _
        $region68: #{my_model_forward.1} parent=11 // pred_fallthru
          _
      $region12: #{my_model_forward.1} parent=5 // pred_fallthru
        _
      %p573 = scmp.lt.s32.totalorder %s32, 2
      // Predicated region
      $region69: #{my_model_forward.1} parent=5 // pred_check
        %p574 = pneg %p573
      $region70: #{my_model_forward.1} parent=5 // pred_check_branch
        %576 = sbr.rel (%p574) target = $region72
      $region71: #{my_model_forward.1} parent=5 // pred_region
        // Predicated region
        $region73: #{my_model_forward.1} parent=71 // pred_check
          %p577 = pneg %p52
        $region74: #{my_model_forward.1} parent=71 // pred_check_branch
          %579 = sbr.rel (%p577) target = $region76
        $region75: #{my_model_forward.1} parent=71 // pred_region
          %p580 = scmp.lt.s32.totalorder %s32, 1
          %s581 = scalar_select %p580, %s32, 1
          %s582 = smul.addr %s581, 2
          %s583 = smul.addr %s582, 8
          %s584 = scalar_lea.vmem %s0, %s583
        $region76: #{my_model_forward.1} parent=71 // pred_fallthru
          _
        // Predicated region
        $region77: #{my_model_forward.1} parent=71 // pred_check
          %p585 = pneg %p78
        $region78: #{my_model_forward.1} parent=71 // pred_check_branch
          %587 = sbr.rel (%p585) target = $region80
        $region79: #{my_model_forward.1} parent=71 // pred_region
          %p588 = scmp.lt.s32.totalorder %s32, 1
          %s589 = scalar_select %p588, %s32, 1
          %s590 = smul.addr %s589, 2
          %s591 = smul.addr %s590, 8
          %s592 = scalar_lea.vmem %s1, %s591
        $region80: #{my_model_forward.1} parent=71 // pred_fallthru
          _
      $region72: #{my_model_forward.1} parent=5 // pred_fallthru
        _
      %p593 = scmp.le.s32.totalorder 1, %s32
      %p594 = scmp.lt.s32.totalorder %s32, 3
      %p595 = pnand %p593, %p594
      %p596 = pneg %p595
      // Predicated region
      $region81: #{my_model_forward.1} parent=5 // pred_check
        _
      $region82: #{my_model_forward.1} parent=5 // pred_check_branch
        %598 = sbr.rel (%p595) target = $region84
      $region83: #{my_model_forward.1} parent=5 // pred_region
        %s599 = ssub.s32 %s32, 1
        // Predicated region
        $region85: #{my_model_forward.1} parent=83 // pred_check
          %p600 = pneg %p147
        $region86: #{my_model_forward.1} parent=83 // pred_check_branch
          %602 = sbr.rel (%p600) target = $region88
        $region87: #{my_model_forward.1} parent=83 // pred_region
          %603 = dma.done [#allocation3], 2048
        $region88: #{my_model_forward.1} parent=83 // pred_fallthru
          _
        // Predicated region
        $region89: #{my_model_forward.1} parent=83 // pred_check
          %p604 = pneg %p189
        $region90: #{my_model_forward.1} parent=83 // pred_check_branch
          %606 = sbr.rel (%p604) target = $region92
        $region91: #{my_model_forward.1} parent=83 // pred_region
          %607 = dma.done [#allocation6], 2048
        $region92: #{my_model_forward.1} parent=83 // pred_fallthru
          _
        // Predicated region
        $region93: #{my_model_forward.1} parent=83 // pred_check
          %p608 = pneg %p231
        $region94: #{my_model_forward.1} parent=83 // pred_check_branch
          %610 = sbr.rel (%p608) target = $region96
        $region95: #{my_model_forward.1} parent=83 // pred_region
          %611 = dma.done [#allocation6], 16384
        $region96: #{my_model_forward.1} parent=83 // pred_fallthru
          _
        // Predicated region
        $region97: #{my_model_forward.1} parent=83 // pred_check
          %p612 = pneg %p273
        $region98: #{my_model_forward.1} parent=83 // pred_check_branch
          %614 = sbr.rel (%p612) target = $region100
        $region99: #{my_model_forward.1} parent=83 // pred_region
          %615 = dma.done [#allocation9], 32768
        $region100: #{my_model_forward.1} parent=83 // pred_fallthru
          _
        // Predicated region
        $region101: #{my_model_forward.1} parent=83 // pred_check
          %p616 = pneg %p315
        $region102: #{my_model_forward.1} parent=83 // pred_check_branch
          %618 = sbr.rel (%p616) target = $region104
        $region103: #{my_model_forward.1} parent=83 // pred_region
          %619 = dma.done [#allocation9], 8192
        $region104: #{my_model_forward.1} parent=83 // pred_fallthru
          _
        // Predicated region
        $region105: #{my_model_forward.1} parent=83 // pred_check
          %p620 = pneg %p357
        $region106: #{my_model_forward.1} parent=83 // pred_check_branch
          %622 = sbr.rel (%p620) target = $region108
        $region107: #{my_model_forward.1} parent=83 // pred_region
          %623 = dma.done [#allocation12], 2048
        $region108: #{my_model_forward.1} parent=83 // pred_fallthru
          _
        %p624 = scmp.lt.s32.totalorder %s37, 1
        %s625 = scalar_select %p624, %s37, 1
        %s626 = smul.addr %s625, 2
        %s627 = smul.addr %s626, 8
        %s628 = scalar_lea.vmem %s0, %s627
        %p629 = pneg %p58
        %p630 = pneg %p55
        %p631 = scmp.lt.s32.totalorder %s37, 1
        %s632 = scalar_select %p631, %s37, 1
        %s633 = smul.addr %s632, 2
        %s634 = smul.addr %s633, 8
        %s635 = scalar_lea.vmem %s1, %s634
        %p636 = pneg %p84
        %p637 = pneg %p81
        %p638 = pneg %p105
        %p639 = pneg %p102
        %p640 = pneg %p126
        %p641 = pneg %p123
        %p642 = pneg %p147
        %p643 = pneg %p144
        %p644 = pneg %p168
        %p645 = pneg %p165
        %p646 = pneg %p189
        %p647 = pneg %p186
        %p648 = pneg %p210
        %p649 = pneg %p207
        %p650 = pneg %p231
        %p651 = pneg %p228
        %p652 = pneg %p252
        %p653 = pneg %p249
        %p654 = pneg %p273
        %p655 = pneg %p270
        %p656 = pneg %p294
        %p657 = pneg %p291
        %p658 = pneg %p315
        %p659 = pneg %p312
        %p660 = pneg %p336
        %p661 = pneg %p333
        %p662 = pneg %p357
        %p663 = pneg %p354
        %p664 = pneg %p378
        %p665 = pneg %p375
        %p666 = pneg %p404
        %p667 = pneg %p401
        %p668 = scmp.lt.s32.totalorder %s37, 1
        %s669 = scalar_select %p668, %s37, 1
        %s670 = smul.addr %s669, 2
        %s671 = smul.addr %s670, 8
        %s672 = scalar_lea.vmem %s16, %s671
        %p673 = pneg %p430
        %p674 = pneg %p427
        %p675 = scmp.lt.s32.totalorder %s37, 1
        %s676 = scalar_select %p675, %s37, 1
        %s677 = smul.addr %s676, 2
        %s678 = smul.addr %s677, 8
        %s679 = scalar_lea.vmem %s17, %s678
        %p680 = pneg %p456
        %p681 = pneg %p453
        %s682 = sand.u32 %s443, 1
        %s683 = scalar_lea.sflag [#allocation4], %s682
        %s684 = sand.u32 %s443, 1
        %s685 = scalar_lea.vmem [#allocation13], %s684
        %p686 = scmp.lt.s32.totalorder %s37, 1
        %s687 = scalar_select %p686, %s37, 1
        %s688 = smul.addr %s687, 2
        %s689 = smul.addr %s688, 8
        %s690 = scalar_lea.vmem %s0, %s689
        %p691 = scmp.lt.s32.totalorder %s37, 1
        %s692 = scalar_select %p691, %s37, 1
        %s693 = smul.addr %s692, 2
        %s694 = smul.addr %s693, 8
        %s695 = scalar_lea.vmem %s1, %s694
        %p696 = scmp.lt.s32.totalorder %s37, 1
        %s697 = scalar_select %p696, %s37, 1
        %s698 = smul.addr %s697, 2
        %s699 = smul.addr %s698, 8
        %s700 = scalar_lea.vmem %s16, %s699
        %p701 = scmp.lt.s32.totalorder %s37, 1
        %s702 = scalar_select %p701, %s37, 1
        %s703 = smul.addr %s702, 2
        %s704 = smul.addr %s703, 8
        %s705 = scalar_lea.vmem %s17, %s704
        %v707 = vld [vmem:[%s690] sm:$0xff]
        %v708 = vld [vmem:[%s690 + $0x8] sm:$0x1]
        %v709 = vld [vmem:[%s695] sm:$0xff]
        %v710 = vld [vmem:[%s695 + $0x8] sm:$0x1]
        %v711 = vld [vmem:[%s2] sm:$0xff]
        %v712 = vld [vmem:[%s2 + $0x8] sm:$0xff]
        %v713 = vld [vmem:[%s2 + $0x10] sm:$0xff]
        %v714 = vld [vmem:[%s2 + $0x18] sm:$0xff]
        %v715 = vld [vmem:[%s2 + $0x20] sm:$0xff]
        %v716 = vld [vmem:[%s2 + $0x28] sm:$0xff]
        %v717 = vld [vmem:[%s2 + $0x30] sm:$0xff]
        %v718 = vld [vmem:[%s2 + $0x38] sm:$0xff]
        %v719 = vld [vmem:[%s2 + $0x40] sm:$0xff]
        %v720 = vld [vmem:[%s2 + $0x48] sm:$0xff]
        %v721 = vld [vmem:[%s2 + $0x50] sm:$0xff]
        %v722 = vld [vmem:[%s2 + $0x58] sm:$0xff]
        %v723 = vld [vmem:[%s2 + $0x60] sm:$0xff]
        %v724 = vld [vmem:[%s2 + $0x68] sm:$0xff]
        %v725 = vld [vmem:[%s2 + $0x70] sm:$0xff]
        %v726 = vld [vmem:[%s2 + $0x78] sm:$0xff]
        %v727 = vld [vmem:[%s3] sm:$0x1]
        %v729 = vlaneseq
        %v730 = vshrl.u32 %v729, 7
        %v731 = vsub.s32 0, %v730
        %v732 = vrot.slane %v727, %v731
        %734 = vmatprep.subr.mxu0 0.0
        %735 = vmatpush1.msra.mxu0 %v711
        %736 = vmatprep.subr.mxu0 0.0
        %737 = vmatpush1.msra.mxu0 %v712
        %738 = vmatprep.subr.mxu0 0.0
        %739 = vmatpush1.msra.mxu0 %v713
        %740 = vmatprep.subr.mxu0 0.0
        %741 = vmatpush1.msra.mxu0 %v714
        %742 = vmatprep.subr.mxu0 0.0
        %743 = vmatpush1.msra.mxu0 %v715
        %744 = vmatprep.subr.mxu0 0.0
        %745 = vmatpush1.msra.mxu0 %v716
        %746 = vmatprep.subr.mxu0 0.0
        %747 = vmatpush1.msra.mxu0 %v717
        %748 = vmatprep.subr.mxu0 0.0
        %749 = vmatpush1.msra.mxu0 %v718
        %750 = vmatprep.subr.mxu0 0.0
        %751 = vmatpush1.msra.mxu0 %v719
        %752 = vmatprep.subr.mxu0 0.0
        %753 = vmatpush1.msra.mxu0 %v720
        %754 = vmatprep.subr.mxu0 0.0
        %755 = vmatpush1.msra.mxu0 %v721
        %756 = vmatprep.subr.mxu0 0.0
        %757 = vmatpush1.msra.mxu0 %v722
        %758 = vmatprep.subr.mxu0 0.0
        %759 = vmatpush1.msra.mxu0 %v723
        %760 = vmatprep.subr.mxu0 0.0
        %761 = vmatpush1.msra.mxu0 %v724
        %762 = vmatprep.subr.mxu0 0.0
        %763 = vmatpush1.msra.mxu0 %v725
        %764 = vmatprep.subr.mxu0 0.0
        %765 = vmatpush1.msra.mxu0 %v726
        %766 = vmatprep.subr.mxu0 0.0
        %767 = vmatpush1.msra.mxu0 0.0
        %768 = vmatprep.subr.mxu0 0.0
        %769 = vmatpush1.msra.mxu0 0.0
        %770 = vmatprep.subr.mxu0 0.0
        %771 = vmatpush1.msra.mxu0 0.0
        %772 = vmatprep.subr.mxu0 0.0
        %773 = vmatpush1.msra.mxu0 0.0
        %774 = vmatprep.subr.mxu0 0.0
        %775 = vmatpush1.msra.mxu0 0.0
        %776 = vmatprep.subr.mxu0 0.0
        %777 = vmatpush1.msra.mxu0 0.0
        %778 = vmatprep.subr.mxu0 0.0
        %779 = vmatpush1.msra.mxu0 0.0
        %780 = vmatprep.subr.mxu0 0.0
        %781 = vmatpush1.msra.mxu0 0.0
        %782 = vmatprep.subr.mxu0 0.0
        %783 = vmatpush1.msra.mxu0 0.0
        %784 = vmatprep.subr.mxu0 0.0
        %785 = vmatpush1.msra.mxu0 0.0
        %786 = vmatprep.subr.mxu0 0.0
        %787 = vmatpush1.msra.mxu0 0.0
        %788 = vmatprep.subr.mxu0 0.0
        %789 = vmatpush1.msra.mxu0 0.0
        %790 = vmatprep.subr.mxu0 0.0
        %791 = vmatpush1.msra.mxu0 0.0
        %792 = vmatprep.subr.mxu0 0.0
        %793 = vmatpush1.msra.mxu0 0.0
        %794 = vmatprep.subr.mxu0 0.0
        %795 = vmatpush1.msra.mxu0 0.0
        %796 = vmatprep.subr.mxu0 0.0
        %797 = vmatpush1.msra.mxu0 0.0
        %798 = vmatprep.mubr.f32.mxu0 0.0
        %799 = vmatmul.mubr.f32.gmra.mrb[0].mxu0 %v707
        %v800 = vpop.f32.mrb[0].mxu0
        %v801 = vadd.f32 %v732, %v800
        %v802 = vpop.f32.mrb[0].mxu0
        %803 = vmatprep.mubr.f32.mxu0 0.0
        %804 = vmatmul.mubr.f32.gmra.mrb[0].mxu0 %v708
        %v805 = vpop.f32.mrb[0].mxu0
        %v806 = vadd.f32 %v732, %v805
        %v807 = vpop.f32.mrb[0].mxu0
        %808 = vdwg.mxu0
        %v809 = vld [vmem:[#allocation2] sm:$0xff]
        %v810 = vld [vmem:[#allocation2 + $0x8] sm:$0xff]
        %v811 = vld [vmem:[#allocation2 + $0x10] sm:$0xff]
        %v812 = vld [vmem:[#allocation2 + $0x18] sm:$0xff]
        %v813 = vld [vmem:[#allocation2 + $0x20] sm:$0xff]
        %v814 = vld [vmem:[#allocation2 + $0x28] sm:$0xff]
        %v815 = vld [vmem:[#allocation2 + $0x30] sm:$0xff]
        %v816 = vld [vmem:[#allocation2 + $0x38] sm:$0xff]
        %v817 = vld [vmem:[#allocation2 + $0x40] sm:$0xff]
        %v818 = vld [vmem:[#allocation2 + $0x48] sm:$0xff]
        %v819 = vld [vmem:[#allocation2 + $0x50] sm:$0xff]
        %v820 = vld [vmem:[#allocation2 + $0x58] sm:$0xff]
        %v821 = vld [vmem:[#allocation2 + $0x60] sm:$0xff]
        %v822 = vld [vmem:[#allocation2 + $0x68] sm:$0xff]
        %v823 = vld [vmem:[#allocation2 + $0x70] sm:$0xff]
        %v824 = vld [vmem:[#allocation2 + $0x78] sm:$0xff]
        %v825 = vld [vmem:[%s5] sm:$0x1]
        %v827 = vlaneseq
        %v828 = vshrl.u32 %v827, 7
        %v829 = vsub.s32 0, %v828
        %v830 = vrot.slane %v825, %v829
        %832 = vmatprep.subr.mxu0 0.0
        %833 = vmatpush1.msra.mxu0 %v809
        %834 = vmatprep.subr.mxu0 0.0
        %835 = vmatpush1.msra.mxu0 %v810
        %836 = vmatprep.subr.mxu0 0.0
        %837 = vmatpush1.msra.mxu0 %v811
        %838 = vmatprep.subr.mxu0 0.0
        %839 = vmatpush1.msra.mxu0 %v812
        %840 = vmatprep.subr.mxu0 0.0
        %841 = vmatpush1.msra.mxu0 %v813
        %842 = vmatprep.subr.mxu0 0.0
        %843 = vmatpush1.msra.mxu0 %v814
        %844 = vmatprep.subr.mxu0 0.0
        %845 = vmatpush1.msra.mxu0 %v815
        %846 = vmatprep.subr.mxu0 0.0
        %847 = vmatpush1.msra.mxu0 %v816
        %848 = vmatprep.subr.mxu0 0.0
        %849 = vmatpush1.msra.mxu0 %v817
        %850 = vmatprep.subr.mxu0 0.0
        %851 = vmatpush1.msra.mxu0 %v818
        %852 = vmatprep.subr.mxu0 0.0
        %853 = vmatpush1.msra.mxu0 %v819
        %854 = vmatprep.subr.mxu0 0.0
        %855 = vmatpush1.msra.mxu0 %v820
        %856 = vmatprep.subr.mxu0 0.0
        %857 = vmatpush1.msra.mxu0 %v821
        %858 = vmatprep.subr.mxu0 0.0
        %859 = vmatpush1.msra.mxu0 %v822
        %860 = vmatprep.subr.mxu0 0.0
        %861 = vmatpush1.msra.mxu0 %v823
        %862 = vmatprep.subr.mxu0 0.0
        %863 = vmatpush1.msra.mxu0 %v824
        %864 = vmatprep.subr.mxu0 0.0
        %865 = vmatpush1.msra.mxu0 0.0
        %866 = vmatprep.subr.mxu0 0.0
        %867 = vmatpush1.msra.mxu0 0.0
        %868 = vmatprep.subr.mxu0 0.0
        %869 = vmatpush1.msra.mxu0 0.0
        %870 = vmatprep.subr.mxu0 0.0
        %871 = vmatpush1.msra.mxu0 0.0
        %872 = vmatprep.subr.mxu0 0.0
        %873 = vmatpush1.msra.mxu0 0.0
        %874 = vmatprep.subr.mxu0 0.0
        %875 = vmatpush1.msra.mxu0 0.0
        %876 = vmatprep.subr.mxu0 0.0
        %877 = vmatpush1.msra.mxu0 0.0
        %878 = vmatprep.subr.mxu0 0.0
        %879 = vmatpush1.msra.mxu0 0.0
        %880 = vmatprep.subr.mxu0 0.0
        %881 = vmatpush1.msra.mxu0 0.0
        %882 = vmatprep.subr.mxu0 0.0
        %883 = vmatpush1.msra.mxu0 0.0
        %884 = vmatprep.subr.mxu0 0.0
        %885 = vmatpush1.msra.mxu0 0.0
        %886 = vmatprep.subr.mxu0 0.0
        %887 = vmatpush1.msra.mxu0 0.0
        %888 = vmatprep.subr.mxu0 0.0
        %889 = vmatpush1.msra.mxu0 0.0
        %890 = vmatprep.subr.mxu0 0.0
        %891 = vmatpush1.msra.mxu0 0.0
        %892 = vmatprep.subr.mxu0 0.0
        %893 = vmatpush1.msra.mxu0 0.0
        %894 = vmatprep.subr.mxu0 0.0
        %895 = vmatpush1.msra.mxu0 0.0
        %896 = vmatprep.mubr.f32.mxu0 0.0
        %897 = vmatmul.mubr.f32.gmra.mrb[0].mxu0 %v709
        %v898 = vpop.f32.mrb[0].mxu0
        %v899 = vadd.f32 %v830, %v898
        %v900 = vpop.f32.mrb[0].mxu0
        %901 = vmatprep.mubr.f32.mxu0 0.0
        %902 = vmatmul.mubr.f32.gmra.mrb[0].mxu0 %v710
        %v903 = vpop.f32.mrb[0].mxu0
        %v904 = vadd.f32 %v830, %v903
        %v905 = vpop.f32.mrb[0].mxu0
        %906 = vdwg.mxu0
        %v907 = vlaneseq
        %v908 = vshrl.u32 %v907, 7
        %v909 = vsub.s32 0, %v908
        %v910 = vrot.slane %v899, %v909
        %v911 = vadd.f32 %v801, %v910
        %v912 = vadd.f32 %v806, %v910
        %vm913 = vcmp.ge.f32.partialorder %v911, 0.0
        %vm914 = vcmp.ge.f32.partialorder %v912, 0.0
        %v915 = vmul.f32 %v911, 0.01
        %v916 = vmul.f32 %v912, 0.01
        %v917 = vsel %vm913, %v911, %v915
        %v918 = vsel %vm914, %v912, %v916
        %v919 = vadd.f32 %v917, 0.0
        %v920 = vadd.f32 %v918, 0.0
        %vm921 = vcmask 1040384
        %v922 = vsel %vm921, %v918, 0.0
        %v923 = vadd.f32 %v917, %v922
        %v924 = vrot.slane %v923, 4
        %v925 = vadd.f32 %v923, %v924
        %v926 = vrot.slane %v925, 2
        %v927 = vadd.f32 %v925, %v926
        %v928 = vrot.slane %v927, 1
        %v929 = vadd.f32 %v927, %v928
        %v930 = vlaneseq
        %v931 = vshrl.u32 %v930, 7
        %v932 = vsub.s32 1, %v931
        %v933 = vrot.slane %v899, %v932
        %v934 = vadd.f32 %v801, %v933
        %v935 = vadd.f32 %v806, %v933
        %vm936 = vcmp.ge.f32.partialorder %v934, 0.0
        %vm937 = vcmp.ge.f32.partialorder %v935, 0.0
        %v938 = vmul.f32 %v934, 0.01
        %v939 = vmul.f32 %v935, 0.01
        %v940 = vsel %vm936, %v934, %v938
        %v941 = vsel %vm937, %v935, %v939
        %v942 = vadd.f32 %v919, %v940
        %v943 = vadd.f32 %v920, %v941
        %v944 = vsel %vm921, %v941, 0.0
        %v945 = vadd.f32 %v940, %v944
        %v946 = vrot.slane %v945, 4
        %v947 = vadd.f32 %v945, %v946
        %v948 = vrot.slane %v947, 2
        %v949 = vadd.f32 %v947, %v948
        %v950 = vrot.slane %v949, 1
        %v951 = vadd.f32 %v949, %v950
        %v952 = vlaneseq
        %v953 = vshrl.u32 %v952, 7
        %v954 = vsub.s32 2, %v953
        %v955 = vrot.slane %v899, %v954
        %v956 = vadd.f32 %v801, %v955
        %v957 = vadd.f32 %v806, %v955
        %vm958 = vcmp.ge.f32.partialorder %v956, 0.0
        %vm959 = vcmp.ge.f32.partialorder %v957, 0.0
        %v960 = vmul.f32 %v956, 0.01
        %v961 = vmul.f32 %v957, 0.01
        %v962 = vsel %vm958, %v956, %v960
        %v963 = vsel %vm959, %v957, %v961
        %v964 = vadd.f32 %v942, %v962
        %v965 = vadd.f32 %v943, %v963
        %v966 = vsel %vm921, %v963, 0.0
        %v967 = vadd.f32 %v962, %v966
        %v968 = vrot.slane %v967, 4
        %v969 = vadd.f32 %v967, %v968
        %v970 = vrot.slane %v969, 2
        %v971 = vadd.f32 %v969, %v970
        %v972 = vrot.slane %v971, 1
        %v973 = vadd.f32 %v971, %v972
        %v974 = vlaneseq
        %v975 = vshrl.u32 %v974, 7
        %v976 = vsub.s32 3, %v975
        %v977 = vrot.slane %v899, %v976
        %v978 = vadd.f32 %v801, %v977
        %v979 = vadd.f32 %v806, %v977
        %vm980 = vcmp.ge.f32.partialorder %v978, 0.0
        %vm981 = vcmp.ge.f32.partialorder %v979, 0.0
        %v982 = vmul.f32 %v978, 0.01
        %v983 = vmul.f32 %v979, 0.01
        %v984 = vsel %vm980, %v978, %v982
        %v985 = vsel %vm981, %v979, %v983
        %v986 = vadd.f32 %v964, %v984
        %v987 = vadd.f32 %v965, %v985
        %v988 = vsel %vm921, %v985, 0.0
        %v989 = vadd.f32 %v984, %v988
        %v990 = vrot.slane %v989, 4
        %v991 = vadd.f32 %v989, %v990
        %v992 = vrot.slane %v991, 2
        %v993 = vadd.f32 %v991, %v992
        %v994 = vrot.slane %v993, 1
        %v995 = vadd.f32 %v993, %v994
        %v996 = vlaneseq
        %v997 = vshrl.u32 %v996, 7
        %v998 = vsub.s32 4, %v997
        %v999 = vrot.slane %v899, %v998
        %v1000 = vadd.f32 %v801, %v999
        %v1001 = vadd.f32 %v806, %v999
        %vm1002 = vcmp.ge.f32.partialorder %v1000, 0.0
        %vm1003 = vcmp.ge.f32.partialorder %v1001, 0.0
        %v1004 = vmul.f32 %v1000, 0.01
        %v1005 = vmul.f32 %v1001, 0.01
        %v1006 = vsel %vm1002, %v1000, %v1004
        %v1007 = vsel %vm1003, %v1001, %v1005
        %v1008 = vadd.f32 %v986, %v1006
        %v1009 = vadd.f32 %v987, %v1007
        %v1010 = vsel %vm921, %v1007, 0.0
        %v1011 = vadd.f32 %v1006, %v1010
        %v1012 = vrot.slane %v1011, 4
        %v1013 = vadd.f32 %v1011, %v1012
        %v1014 = vrot.slane %v1013, 2
        %v1015 = vadd.f32 %v1013, %v1014
        %v1016 = vrot.slane %v1015, 1
        %v1017 = vadd.f32 %v1015, %v1016
        %v1018 = vlaneseq
        %v1019 = vshrl.u32 %v1018, 7
        %v1020 = vsub.s32 5, %v1019
        %v1021 = vrot.slane %v899, %v1020
        %v1022 = vadd.f32 %v801, %v1021
        %v1023 = vadd.f32 %v806, %v1021
        %vm1024 = vcmp.ge.f32.partialorder %v1022, 0.0
        %vm1025 = vcmp.ge.f32.partialorder %v1023, 0.0
        %v1026 = vmul.f32 %v1022, 0.01
        %v1027 = vmul.f32 %v1023, 0.01
        %v1028 = vsel %vm1024, %v1022, %v1026
        %v1029 = vsel %vm1025, %v1023, %v1027
        %v1030 = vadd.f32 %v1008, %v1028
        %v1031 = vadd.f32 %v1009, %v1029
        %v1032 = vsel %vm921, %v1029, 0.0
        %v1033 = vadd.f32 %v1028, %v1032
        %v1034 = vrot.slane %v1033, 4
        %v1035 = vadd.f32 %v1033, %v1034
        %v1036 = vrot.slane %v1035, 2
        %v1037 = vadd.f32 %v1035, %v1036
        %v1038 = vrot.slane %v1037, 1
        %v1039 = vadd.f32 %v1037, %v1038
        %v1040 = vlaneseq
        %v1041 = vshrl.u32 %v1040, 7
        %v1042 = vsub.s32 6, %v1041
        %v1043 = vrot.slane %v899, %v1042
        %v1044 = vadd.f32 %v801, %v1043
        %v1045 = vadd.f32 %v806, %v1043
        %vm1046 = vcmp.ge.f32.partialorder %v1044, 0.0
        %vm1047 = vcmp.ge.f32.partialorder %v1045, 0.0
        %v1048 = vmul.f32 %v1044, 0.01
        %v1049 = vmul.f32 %v1045, 0.01
        %v1050 = vsel %vm1046, %v1044, %v1048
        %v1051 = vsel %vm1047, %v1045, %v1049
        %v1052 = vadd.f32 %v1030, %v1050
        %v1053 = vadd.f32 %v1031, %v1051
        %v1054 = vsel %vm921, %v1051, 0.0
        %v1055 = vadd.f32 %v1050, %v1054
        %v1056 = vrot.slane %v1055, 4
        %v1057 = vadd.f32 %v1055, %v1056
        %v1058 = vrot.slane %v1057, 2
        %v1059 = vadd.f32 %v1057, %v1058
        %v1060 = vrot.slane %v1059, 1
        %v1061 = vadd.f32 %v1059, %v1060
        %v1062 = vlaneseq
        %v1063 = vshrl.u32 %v1062, 7
        %v1064 = vsub.s32 7, %v1063
        %v1065 = vrot.slane %v899, %v1064
        %v1066 = vadd.f32 %v801, %v1065
        %v1067 = vadd.f32 %v806, %v1065
        %vm1068 = vcmp.ge.f32.partialorder %v1066, 0.0
        %vm1069 = vcmp.ge.f32.partialorder %v1067, 0.0
        %v1070 = vmul.f32 %v1066, 0.01
        %v1071 = vmul.f32 %v1067, 0.01
        %v1072 = vsel %vm1068, %v1066, %v1070
        %v1073 = vsel %vm1069, %v1067, %v1071
        %v1074 = vadd.f32 %v1052, %v1072
        %v1075 = vadd.f32 %v1053, %v1073
        %v1076 = vsel %vm921, %v1073, 0.0
        %v1077 = vadd.f32 %v1072, %v1076
        %v1078 = vrot.slane %v1077, 4
        %v1079 = vadd.f32 %v1077, %v1078
        %v1080 = vrot.slane %v1079, 2
        %v1081 = vadd.f32 %v1079, %v1080
        %v1082 = vrot.slane %v1081, 1
        %v1083 = vadd.f32 %v1081, %v1082
        %v1084 = vlaneseq
        %v1085 = vshrl.u32 %v1084, 7
        %v1086 = vsub.s32 0, %v1085
        %v1087 = vrot.slane %v904, %v1086
        %v1088 = vadd.f32 %v801, %v1087
        %v1089 = vadd.f32 %v806, %v1087
        %vm1090 = vcmp.ge.f32.partialorder %v1088, 0.0
        %vm1091 = vcmp.ge.f32.partialorder %v1089, 0.0
        %v1092 = vmul.f32 %v1088, 0.01
        %v1093 = vmul.f32 %v1089, 0.01
        %v1094 = vsel %vm1090, %v1088, %v1092
        %v1095 = vsel %vm1091, %v1089, %v1093
        %v1096 = vadd.f32 %v1074, %v1094
        %v1097 = vadd.f32 %v1075, %v1095
        %v1098 = vsel %vm921, %v1095, 0.0
        %v1099 = vadd.f32 %v1094, %v1098
        %v1100 = vrot.slane %v1099, 4
        %v1101 = vadd.f32 %v1099, %v1100
        %v1102 = vrot.slane %v1101, 2
        %v1103 = vadd.f32 %v1101, %v1102
        %v1104 = vrot.slane %v1103, 1
        %v1105 = vadd.f32 %v1103, %v1104
        %v1106 = vsel %vm921, %v929, %v951
        %vm1107 = vcmask 1041408
        %v1108 = vsel %vm1107, %v1106, %v973
        %vm1109 = vcmask 1042432
        %v1110 = vsel %vm1109, %v1108, %v995
        %vm1111 = vcmask 1043456
        %v1112 = vsel %vm1111, %v1110, %v1017
        %vm1113 = vcmask 1044480
        %v1114 = vsel %vm1113, %v1112, %v1039
        %vm1115 = vcmask 1045504
        %v1116 = vsel %vm1115, %v1114, %v1061
        %vm1117 = vcmask 1046528
        %v1118 = vsel %vm1117, %v1116, %v1083
        %v1119 = vld [vmem:[#allocation5] sm:$0xff]
        %v1120 = vld [vmem:[#allocation5 + $0x8] sm:$0xff]
        %v1121 = vld [vmem:[#allocation5 + $0x10] sm:$0xff]
        %v1122 = vld [vmem:[#allocation5 + $0x18] sm:$0xff]
        %v1123 = vld [vmem:[#allocation5 + $0x20] sm:$0xff]
        %v1124 = vld [vmem:[#allocation5 + $0x28] sm:$0xff]
        %v1125 = vld [vmem:[#allocation5 + $0x30] sm:$0xff]
        %v1126 = vld [vmem:[#allocation5 + $0x38] sm:$0xff]
        %v1127 = vld [vmem:[#allocation5 + $0x40] sm:$0xff]
        %v1128 = vld [vmem:[#allocation5 + $0x48] sm:$0xff]
        %v1129 = vld [vmem:[#allocation5 + $0x50] sm:$0xff]
        %v1130 = vld [vmem:[#allocation5 + $0x58] sm:$0xff]
        %v1131 = vld [vmem:[#allocation5 + $0x60] sm:$0xff]
        %v1132 = vld [vmem:[#allocation5 + $0x68] sm:$0xff]
        %v1133 = vld [vmem:[#allocation5 + $0x70] sm:$0xff]
        %v1134 = vld [vmem:[#allocation5 + $0x78] sm:$0xff]
        %v1135 = vld [vmem:[%s7] sm:$0x1]
        %1136 = vmatprep.subr.mxu0 0.0
        %1137 = vmatpush1.msra.mxu0 %v1119
        %1138 = vmatprep.subr.mxu0 0.0
        %1139 = vmatpush1.msra.mxu0 %v1120
        %1140 = vmatprep.subr.mxu0 0.0
        %1141 = vmatpush1.msra.mxu0 %v1121
        %1142 = vmatprep.subr.mxu0 0.0
        %1143 = vmatpush1.msra.mxu0 %v1122
        %1144 = vmatprep.subr.mxu0 0.0
        %1145 = vmatpush1.msra.mxu0 %v1123
        %1146 = vmatprep.subr.mxu0 0.0
        %1147 = vmatpush1.msra.mxu0 %v1124
        %1148 = vmatprep.subr.mxu0 0.0
        %1149 = vmatpush1.msra.mxu0 %v1125
        %1150 = vmatprep.subr.mxu0 0.0
        %1151 = vmatpush1.msra.mxu0 %v1126
        %1152 = vmatprep.subr.mxu0 0.0
        %1153 = vmatpush1.msra.mxu0 %v1127
        %1154 = vmatprep.subr.mxu0 0.0
        %1155 = vmatpush1.msra.mxu0 %v1128
        %1156 = vmatprep.subr.mxu0 0.0
        %1157 = vmatpush1.msra.mxu0 %v1129
        %1158 = vmatprep.subr.mxu0 0.0
        %1159 = vmatpush1.msra.mxu0 %v1130
        %1160 = vmatprep.subr.mxu0 0.0
        %1161 = vmatpush1.msra.mxu0 %v1131
        %1162 = vmatprep.subr.mxu0 0.0
        %1163 = vmatpush1.msra.mxu0 %v1132
        %1164 = vmatprep.subr.mxu0 0.0
        %1165 = vmatpush1.msra.mxu0 %v1133
        %1166 = vmatprep.subr.mxu0 0.0
        %1167 = vmatpush1.msra.mxu0 %v1134
        %1168 = vmatprep.subr.mxu0 0.0
        %1169 = vmatpush1.msra.mxu0 0.0
        %1170 = vmatprep.subr.mxu0 0.0
        %1171 = vmatpush1.msra.mxu0 0.0
        %1172 = vmatprep.subr.mxu0 0.0
        %1173 = vmatpush1.msra.mxu0 0.0
        %1174 = vmatprep.subr.mxu0 0.0
        %1175 = vmatpush1.msra.mxu0 0.0
        %1176 = vmatprep.subr.mxu0 0.0
        %1177 = vmatpush1.msra.mxu0 0.0
        %1178 = vmatprep.subr.mxu0 0.0
        %1179 = vmatpush1.msra.mxu0 0.0
        %1180 = vmatprep.subr.mxu0 0.0
        %1181 = vmatpush1.msra.mxu0 0.0
        %1182 = vmatprep.subr.mxu0 0.0
        %1183 = vmatpush1.msra.mxu0 0.0
        %1184 = vmatprep.subr.mxu0 0.0
        %1185 = vmatpush1.msra.mxu0 0.0
        %1186 = vmatprep.subr.mxu0 0.0
        %1187 = vmatpush1.msra.mxu0 0.0
        %1188 = vmatprep.subr.mxu0 0.0
        %1189 = vmatpush1.msra.mxu0 0.0
        %1190 = vmatprep.subr.mxu0 0.0
        %1191 = vmatpush1.msra.mxu0 0.0
        %1192 = vmatprep.subr.mxu0 0.0
        %1193 = vmatpush1.msra.mxu0 0.0
        %1194 = vmatprep.subr.mxu0 0.0
        %1195 = vmatpush1.msra.mxu0 0.0
        %1196 = vmatprep.subr.mxu0 0.0
        %1197 = vmatpush1.msra.mxu0 0.0
        %1198 = vmatprep.subr.mxu0 0.0
        %1199 = vmatpush1.msra.mxu0 0.0
        %1200 = vmatprep.mubr.f32.mxu0 0.0
        %1201 = vmatmul.mubr.f32.gmra.mrb[0].mxu0 %v1096
        %v1202 = vpop.f32.mrb[0].mxu0
        %v1203 = vadd.f32 0.0, %v1202
        %v1204 = vpop.f32.mrb[0].mxu0
        %1205 = vmatprep.mubr.f32.mxu0 0.0
        %1206 = vmatmul.mubr.f32.gmra.mrb[0].mxu0 %v1097
        %v1207 = vpop.f32.mrb[0].mxu0
        %v1208 = vadd.f32 0.0, %v1207
        %v1209 = vpop.f32.mrb[0].mxu0
        %1210 = vdwg.mxu0
        %v1211 = vmul.f32 %v1203, 0.11111111
        %v1212 = vmul.f32 %v1208, 0.11111111
        %v1214 = vlaneseq
        %v1215 = vshrl.u32 %v1214, 7
        %v1216 = vsub.s32 0, %v1215
        %v1217 = vrot.slane %v1135, %v1216
        %v1219 = vadd.f32 %v1211, %v1217
        %v1220 = vadd.f32 %v1212, %v1217
        %v1221 = vxor.u32 %v1219, 2147483648
        %v1222 = vxor.u32 %v1220, 2147483648
        %v1223 = vmul.f32 %v1221, 1.442695
        %v1224 = vpow.pop %v1223
        %v1225 = vmul.f32 %v1222, 1.442695
        %v1226 = vpow.pop %v1225
        %v1227 = vadd.f32 %v1224, 1.0
        %v1228 = vadd.f32 %v1226, 1.0
        %v1229 = vrcp.pop %v1227
        %v1230 = vmul.f32 1.0, %v1229
        %v1231 = vrcp.pop %v1228
        %v1232 = vmul.f32 1.0, %v1231
        %1233 = vmatprep.subr.mxu0 0.0
        %1234 = vmatpush1.msra.mxu0 %v1119
        %1235 = vmatprep.subr.mxu0 0.0
        %1236 = vmatpush1.msra.mxu0 %v1120
        %1237 = vmatprep.subr.mxu0 0.0
        %1238 = vmatpush1.msra.mxu0 %v1121
        %1239 = vmatprep.subr.mxu0 0.0
        %1240 = vmatpush1.msra.mxu0 %v1122
        %1241 = vmatprep.subr.mxu0 0.0
        %1242 = vmatpush1.msra.mxu0 %v1123
        %1243 = vmatprep.subr.mxu0 0.0
        %1244 = vmatpush1.msra.mxu0 %v1124
        %1245 = vmatprep.subr.mxu0 0.0
        %1246 = vmatpush1.msra.mxu0 %v1125
        %1247 = vmatprep.subr.mxu0 0.0
        %1248 = vmatpush1.msra.mxu0 %v1126
        %1249 = vmatprep.subr.mxu0 0.0
        %1250 = vmatpush1.msra.mxu0 %v1127
        %1251 = vmatprep.subr.mxu0 0.0
        %1252 = vmatpush1.msra.mxu0 %v1128
        %1253 = vmatprep.subr.mxu0 0.0
        %1254 = vmatpush1.msra.mxu0 %v1129
        %1255 = vmatprep.subr.mxu0 0.0
        %1256 = vmatpush1.msra.mxu0 %v1130
        %1257 = vmatprep.subr.mxu0 0.0
        %1258 = vmatpush1.msra.mxu0 %v1131
        %1259 = vmatprep.subr.mxu0 0.0
        %1260 = vmatpush1.msra.mxu0 %v1132
        %1261 = vmatprep.subr.mxu0 0.0
        %1262 = vmatpush1.msra.mxu0 %v1133
        %1263 = vmatprep.subr.mxu0 0.0
        %1264 = vmatpush1.msra.mxu0 %v1134
        %1265 = vmatprep.subr.mxu0 0.0
        %1266 = vmatpush1.msra.mxu0 0.0
        %1267 = vmatprep.subr.mxu0 0.0
        %1268 = vmatpush1.msra.mxu0 0.0
        %1269 = vmatprep.subr.mxu0 0.0
        %1270 = vmatpush1.msra.mxu0 0.0
        %1271 = vmatprep.subr.mxu0 0.0
        %1272 = vmatpush1.msra.mxu0 0.0
        %1273 = vmatprep.subr.mxu0 0.0
        %1274 = vmatpush1.msra.mxu0 0.0
        %1275 = vmatprep.subr.mxu0 0.0
        %1276 = vmatpush1.msra.mxu0 0.0
        %1277 = vmatprep.subr.mxu0 0.0
        %1278 = vmatpush1.msra.mxu0 0.0
        %1279 = vmatprep.subr.mxu0 0.0
        %1280 = vmatpush1.msra.mxu0 0.0
        %1281 = vmatprep.subr.mxu0 0.0
        %1282 = vmatpush1.msra.mxu0 0.0
        %1283 = vmatprep.subr.mxu0 0.0
        %1284 = vmatpush1.msra.mxu0 0.0
        %1285 = vmatprep.subr.mxu0 0.0
        %1286 = vmatpush1.msra.mxu0 0.0
        %1287 = vmatprep.subr.mxu0 0.0
        %1288 = vmatpush1.msra.mxu0 0.0
        %1289 = vmatprep.subr.mxu0 0.0
        %1290 = vmatpush1.msra.mxu0 0.0
        %1291 = vmatprep.subr.mxu0 0.0
        %1292 = vmatpush1.msra.mxu0 0.0
        %1293 = vmatprep.subr.mxu0 0.0
        %1294 = vmatpush1.msra.mxu0 0.0
        %1295 = vmatprep.subr.mxu0 0.0
        %1296 = vmatpush1.msra.mxu0 0.0
        %1297 = vmatprep.mubr.f32.mxu0 0.0
        %1298 = vmatmul.mubr.f32.gmra.mrb[0].mxu0 %v1118
        %v1299 = vpop.f32.mrb[0].mxu0
        %v1300 = vadd.f32 0.0, %v1299
        %v1301 = vpop.f32.mrb[0].mxu0
        %1302 = vmatprep.mubr.f32.mxu0 0.0
        %1303 = vmatmul.mubr.f32.gmra.mrb[0].mxu0 %v1105
        %v1304 = vpop.f32.mrb[0].mxu0
        %v1305 = vadd.f32 0.0, %v1304
        %v1306 = vpop.f32.mrb[0].mxu0
        %1307 = vdwg.mxu0
        %v1308 = vmul.f32 %v1300, 0.11111111
        %v1309 = vmul.f32 %v1305, 0.11111111
        %v1310 = vadd.f32 %v1308, %v1217
        %v1311 = vadd.f32 %v1309, %v1217
        %v1312 = vxor.u32 %v1310, 2147483648
        %v1313 = vxor.u32 %v1311, 2147483648
        %v1314 = vmul.f32 %v1312, 1.442695
        %v1315 = vpow.pop %v1314
        %v1316 = vmul.f32 %v1313, 1.442695
        %v1317 = vpow.pop %v1316
        %v1318 = vadd.f32 %v1315, 1.0
        %v1319 = vadd.f32 %v1317, 1.0
        %v1320 = vrcp.pop %v1318
        %v1321 = vmul.f32 1.0, %v1320
        %v1322 = vrcp.pop %v1319
        %v1323 = vmul.f32 1.0, %v1322
        %1324 = vst [vmem:[%s700] sm:$0xff] %v1230
        %1325 = vst [vmem:[%s700 + $0x8] sm:$0x1] %v1232
        %1326 = vst [vmem:[%s705] sm:$0xff] %v1321
        %1327 = vst [vmem:[%s705 + $0x8] sm:$0x1] %v1323
        %v1328 = vadd.f32 %v1230, 0.5
        %v1329 = vadd.f32 %v1232, 0.5
        %v1330 = vmul.f32 %v707, %v1328
        %v1331 = vmul.f32 %v708, %v1329
        %v1332 = vsel %vm921, %v1331, 0.0
        %v1333 = vadd.f32 %v1330, %v1332
        %v1334 = vrot.slane %v1333, 4
        %v1335 = vadd.f32 %v1333, %v1334
        %v1336 = vrot.slane %v1335, 2
        %v1337 = vadd.f32 %v1335, %v1336
        %v1338 = vrot.slane %v1337, 1
        %v1339 = vadd.f32 %v1337, %v1338
        %v1340 = vadd.f32 %v1321, 0.5
        %v1341 = vadd.f32 %v1323, 0.5
        %v1342 = vmul.f32 %v709, %v1340
        %v1343 = vmul.f32 %v710, %v1341
        %v1344 = vsel %vm921, %v1343, 0.0
        %v1345 = vadd.f32 %v1342, %v1344
        %v1346 = vrot.slane %v1345, 4
        %v1347 = vadd.f32 %v1345, %v1346
        %v1348 = vrot.slane %v1347, 2
        %v1349 = vadd.f32 %v1347, %v1348
        %v1350 = vrot.slane %v1349, 1
        %v1351 = vadd.f32 %v1349, %v1350
        %v1352 = vpack.c.bf16 %v1339, %v1339
        %v1353 = vpack.c.bf16 %v1351, %v1351
        %v1354 = vld [vmem:[#allocation7] sm:$0xff]
        %v1355 = vld [vmem:[#allocation7 + $0x8] sm:$0xff]
        %v1356 = vld [vmem:[#allocation7 + $0x10] sm:$0xff]
        %v1357 = vld [vmem:[#allocation7 + $0x18] sm:$0xff]
        %v1358 = vld [vmem:[#allocation7 + $0x20] sm:$0xff]
        %v1359 = vld [vmem:[#allocation7 + $0x28] sm:$0xff]
        %v1360 = vld [vmem:[#allocation7 + $0x30] sm:$0xff]
        %v1361 = vld [vmem:[#allocation7 + $0x38] sm:$0xff]
        %v1362 = vld [vmem:[#allocation7 + $0x40] sm:$0xff]
        %v1363 = vld [vmem:[#allocation7 + $0x48] sm:$0xff]
        %v1364 = vld [vmem:[#allocation7 + $0x50] sm:$0xff]
        %v1365 = vld [vmem:[#allocation7 + $0x58] sm:$0xff]
        %v1366 = vld [vmem:[#allocation7 + $0x60] sm:$0xff]
        %v1367 = vld [vmem:[#allocation7 + $0x68] sm:$0xff]
        %v1368 = vld [vmem:[#allocation7 + $0x70] sm:$0xff]
        %v1369 = vld [vmem:[#allocation7 + $0x78] sm:$0xff]
        %v1370 = vld [vmem:[#allocation7 + $0x80] sm:$0xff]
        %v1371 = vld [vmem:[#allocation7 + $0x88] sm:$0xff]
        %v1372 = vld [vmem:[#allocation7 + $0x90] sm:$0xff]
        %v1373 = vld [vmem:[#allocation7 + $0x98] sm:$0xff]
        %v1374 = vld [vmem:[#allocation7 + $0xa0] sm:$0xff]
        %v1375 = vld [vmem:[#allocation7 + $0xa8] sm:$0xff]
        %v1376 = vld [vmem:[#allocation7 + $0xb0] sm:$0xff]
        %v1377 = vld [vmem:[#allocation7 + $0xb8] sm:$0xff]
        %v1378 = vld [vmem:[#allocation7 + $0xc0] sm:$0xff]
        %v1379 = vld [vmem:[#allocation7 + $0xc8] sm:$0xff]
        %v1380 = vld [vmem:[#allocation7 + $0xd0] sm:$0xff]
        %v1381 = vld [vmem:[#allocation7 + $0xd8] sm:$0xff]
        %v1382 = vld [vmem:[#allocation7 + $0xe0] sm:$0xff]
        %v1383 = vld [vmem:[#allocation7 + $0xe8] sm:$0xff]
        %v1384 = vld [vmem:[#allocation7 + $0xf0] sm:$0xff]
        %v1385 = vld [vmem:[#allocation7 + $0xf8] sm:$0xff]
        %v1386 = vld [vmem:[#allocation7 + $0x100] sm:$0xff]
        %v1387 = vld [vmem:[#allocation7 + $0x108] sm:$0xff]
        %v1388 = vld [vmem:[#allocation7 + $0x110] sm:$0xff]
        %v1389 = vld [vmem:[#allocation7 + $0x118] sm:$0xff]
        %v1390 = vld [vmem:[#allocation7 + $0x120] sm:$0xff]
        %v1391 = vld [vmem:[#allocation7 + $0x128] sm:$0xff]
        %v1392 = vld [vmem:[#allocation7 + $0x130] sm:$0xff]
        %v1393 = vld [vmem:[#allocation7 + $0x138] sm:$0xff]
        %v1394 = vld [vmem:[#allocation7 + $0x140] sm:$0xff]
        %v1395 = vld [vmem:[#allocation7 + $0x148] sm:$0xff]
        %v1396 = vld [vmem:[#allocation7 + $0x150] sm:$0xff]
        %v1397 = vld [vmem:[#allocation7 + $0x158] sm:$0xff]
        %v1398 = vld [vmem:[#allocation7 + $0x160] sm:$0xff]
        %v1399 = vld [vmem:[#allocation7 + $0x168] sm:$0xff]
        %v1400 = vld [vmem:[#allocation7 + $0x170] sm:$0xff]
        %v1401 = vld [vmem:[#allocation7 + $0x178] sm:$0xff]
        %v1402 = vld [vmem:[#allocation7 + $0x180] sm:$0xff]
        %v1403 = vld [vmem:[#allocation7 + $0x188] sm:$0xff]
        %v1404 = vld [vmem:[#allocation7 + $0x190] sm:$0xff]
        %v1405 = vld [vmem:[#allocation7 + $0x198] sm:$0xff]
        %v1406 = vld [vmem:[#allocation7 + $0x1a0] sm:$0xff]
        %v1407 = vld [vmem:[#allocation7 + $0x1a8] sm:$0xff]
        %v1408 = vld [vmem:[#allocation7 + $0x1b0] sm:$0xff]
        %v1409 = vld [vmem:[#allocation7 + $0x1b8] sm:$0xff]
        %v1410 = vld [vmem:[#allocation7 + $0x1c0] sm:$0xff]
        %v1411 = vld [vmem:[#allocation7 + $0x1c8] sm:$0xff]
        %v1412 = vld [vmem:[#allocation7 + $0x1d0] sm:$0xff]
        %v1413 = vld [vmem:[#allocation7 + $0x1d8] sm:$0xff]
        %v1414 = vld [vmem:[#allocation7 + $0x1e0] sm:$0xff]
        %v1415 = vld [vmem:[#allocation7 + $0x1e8] sm:$0xff]
        %v1416 = vld [vmem:[#allocation7 + $0x1f0] sm:$0xff]
        %v1417 = vld [vmem:[#allocation7 + $0x1f8] sm:$0xff]
        %v1418 = vld [vmem:[#allocation7 + $0x200] sm:$0xff]
        %v1419 = vld [vmem:[#allocation7 + $0x208] sm:$0xff]
        %v1420 = vld [vmem:[#allocation7 + $0x210] sm:$0xff]
        %v1421 = vld [vmem:[#allocation7 + $0x218] sm:$0xff]
        %v1422 = vld [vmem:[#allocation7 + $0x220] sm:$0xff]
        %v1423 = vld [vmem:[#allocation7 + $0x228] sm:$0xff]
        %v1424 = vld [vmem:[#allocation7 + $0x230] sm:$0xff]
        %v1425 = vld [vmem:[#allocation7 + $0x238] sm:$0xff]
        %v1426 = vld [vmem:[#allocation7 + $0x240] sm:$0xff]
        %v1427 = vld [vmem:[#allocation7 + $0x248] sm:$0xff]
        %v1428 = vld [vmem:[#allocation7 + $0x250] sm:$0xff]
        %v1429 = vld [vmem:[#allocation7 + $0x258] sm:$0xff]
        %v1430 = vld [vmem:[#allocation7 + $0x260] sm:$0xff]
        %v1431 = vld [vmem:[#allocation7 + $0x268] sm:$0xff]
        %v1432 = vld [vmem:[#allocation7 + $0x270] sm:$0xff]
        %v1433 = vld [vmem:[#allocation7 + $0x278] sm:$0xff]
        %v1434 = vld [vmem:[#allocation7 + $0x280] sm:$0xff]
        %v1435 = vld [vmem:[#allocation7 + $0x288] sm:$0xff]
        %v1436 = vld [vmem:[#allocation7 + $0x290] sm:$0xff]
        %v1437 = vld [vmem:[#allocation7 + $0x298] sm:$0xff]
        %v1438 = vld [vmem:[#allocation7 + $0x2a0] sm:$0xff]
        %v1439 = vld [vmem:[#allocation7 + $0x2a8] sm:$0xff]
        %v1440 = vld [vmem:[#allocation7 + $0x2b0] sm:$0xff]
        %v1441 = vld [vmem:[#allocation7 + $0x2b8] sm:$0xff]
        %v1442 = vld [vmem:[#allocation7 + $0x2c0] sm:$0xff]
        %v1443 = vld [vmem:[#allocation7 + $0x2c8] sm:$0xff]
        %v1444 = vld [vmem:[#allocation7 + $0x2d0] sm:$0xff]
        %v1445 = vld [vmem:[#allocation7 + $0x2d8] sm:$0xff]
        %v1446 = vld [vmem:[#allocation7 + $0x2e0] sm:$0xff]
        %v1447 = vld [vmem:[#allocation7 + $0x2e8] sm:$0xff]
        %v1448 = vld [vmem:[#allocation7 + $0x2f0] sm:$0xff]
        %v1449 = vld [vmem:[#allocation7 + $0x2f8] sm:$0xff]
        %v1450 = vld [vmem:[#allocation7 + $0x300] sm:$0xff]
        %v1451 = vld [vmem:[#allocation7 + $0x308] sm:$0xff]
        %v1452 = vld [vmem:[#allocation7 + $0x310] sm:$0xff]
        %v1453 = vld [vmem:[#allocation7 + $0x318] sm:$0xff]
        %v1454 = vld [vmem:[#allocation7 + $0x320] sm:$0xff]
        %v1455 = vld [vmem:[#allocation7 + $0x328] sm:$0xff]
        %v1456 = vld [vmem:[#allocation7 + $0x330] sm:$0xff]
        %v1457 = vld [vmem:[#allocation7 + $0x338] sm:$0xff]
        %v1458 = vld [vmem:[#allocation7 + $0x340] sm:$0xff]
        %v1459 = vld [vmem:[#allocation7 + $0x348] sm:$0xff]
        %v1460 = vld [vmem:[#allocation7 + $0x350] sm:$0xff]
        %v1461 = vld [vmem:[#allocation7 + $0x358] sm:$0xff]
        %v1462 = vld [vmem:[#allocation7 + $0x360] sm:$0xff]
        %v1463 = vld [vmem:[#allocation7 + $0x368] sm:$0xff]
        %v1464 = vld [vmem:[#allocation7 + $0x370] sm:$0xff]
        %v1465 = vld [vmem:[#allocation7 + $0x378] sm:$0xff]
        %v1466 = vld [vmem:[#allocation7 + $0x380] sm:$0xff]
        %v1467 = vld [vmem:[#allocation7 + $0x388] sm:$0xff]
        %v1468 = vld [vmem:[#allocation7 + $0x390] sm:$0xff]
        %v1469 = vld [vmem:[#allocation7 + $0x398] sm:$0xff]
        %v1470 = vld [vmem:[#allocation7 + $0x3a0] sm:$0xff]
        %v1471 = vld [vmem:[#allocation7 + $0x3a8] sm:$0xff]
        %v1472 = vld [vmem:[#allocation7 + $0x3b0] sm:$0xff]
        %v1473 = vld [vmem:[#allocation7 + $0x3b8] sm:$0xff]
        %v1474 = vld [vmem:[#allocation7 + $0x3c0] sm:$0xff]
        %v1475 = vld [vmem:[#allocation7 + $0x3c8] sm:$0xff]
        %v1476 = vld [vmem:[#allocation7 + $0x3d0] sm:$0xff]
        %v1477 = vld [vmem:[#allocation7 + $0x3d8] sm:$0xff]
        %v1478 = vld [vmem:[#allocation7 + $0x3e0] sm:$0xff]
        %v1479 = vld [vmem:[#allocation7 + $0x3e8] sm:$0xff]
        %v1480 = vld [vmem:[#allocation7 + $0x3f0] sm:$0xff]
        %v1481 = vld [vmem:[#allocation7 + $0x3f8] sm:$0xff]
        %v1482 = vld [vmem:[%s9] sm:$0xff]
        %v1611 = vunpack.c.l.b16 %v1354
        %v1612 = vunpack.c.h.b16 %v1354
        %v1613 = vunpack.c.l.b16 %v1355
        %v1614 = vunpack.c.h.b16 %v1355
        %v1615 = vunpack.c.l.b16 %v1356
        %v1616 = vunpack.c.h.b16 %v1356
        %v1617 = vunpack.c.l.b16 %v1357
        %v1618 = vunpack.c.h.b16 %v1357
        %v1619 = vunpack.c.l.b16 %v1358
        %v1620 = vunpack.c.h.b16 %v1358
        %v1621 = vunpack.c.l.b16 %v1359
        %v1622 = vunpack.c.h.b16 %v1359
        %v1623 = vunpack.c.l.b16 %v1360
        %v1624 = vunpack.c.h.b16 %v1360
        %v1625 = vunpack.c.l.b16 %v1361
        %v1626 = vunpack.c.h.b16 %v1361
        %v1627 = vunpack.c.l.b16 %v1362
        %v1628 = vunpack.c.h.b16 %v1362
        %v1629 = vunpack.c.l.b16 %v1363
        %v1630 = vunpack.c.h.b16 %v1363
        %v1631 = vunpack.c.l.b16 %v1364
        %v1632 = vunpack.c.h.b16 %v1364
        %v1633 = vunpack.c.l.b16 %v1365
        %v1634 = vunpack.c.h.b16 %v1365
        %v1635 = vunpack.c.l.b16 %v1366
        %v1636 = vunpack.c.h.b16 %v1366
        %v1637 = vunpack.c.l.b16 %v1367
        %v1638 = vunpack.c.h.b16 %v1367
        %v1639 = vunpack.c.l.b16 %v1368
        %v1640 = vunpack.c.h.b16 %v1368
        %v1641 = vunpack.c.l.b16 %v1369
        %v1642 = vunpack.c.h.b16 %v1369
        %v1643 = vunpack.c.l.b16 %v1370
        %v1644 = vunpack.c.h.b16 %v1370
        %v1645 = vunpack.c.l.b16 %v1371
        %v1646 = vunpack.c.h.b16 %v1371
        %v1647 = vunpack.c.l.b16 %v1372
        %v1648 = vunpack.c.h.b16 %v1372
        %v1649 = vunpack.c.l.b16 %v1373
        %v1650 = vunpack.c.h.b16 %v1373
        %v1651 = vunpack.c.l.b16 %v1374
        %v1652 = vunpack.c.h.b16 %v1374
        %v1653 = vunpack.c.l.b16 %v1375
        %v1654 = vunpack.c.h.b16 %v1375
        %v1655 = vunpack.c.l.b16 %v1376
        %v1656 = vunpack.c.h.b16 %v1376
        %v1657 = vunpack.c.l.b16 %v1377
        %v1658 = vunpack.c.h.b16 %v1377
        %v1659 = vunpack.c.l.b16 %v1378
        %v1660 = vunpack.c.h.b16 %v1378
        %v1661 = vunpack.c.l.b16 %v1379
        %v1662 = vunpack.c.h.b16 %v1379
        %v1663 = vunpack.c.l.b16 %v1380
        %v1664 = vunpack.c.h.b16 %v1380
        %v1665 = vunpack.c.l.b16 %v1381
        %v1666 = vunpack.c.h.b16 %v1381
        %v1667 = vunpack.c.l.b16 %v1382
        %v1668 = vunpack.c.h.b16 %v1382
        %v1669 = vunpack.c.l.b16 %v1383
        %v1670 = vunpack.c.h.b16 %v1383
        %v1671 = vunpack.c.l.b16 %v1384
        %v1672 = vunpack.c.h.b16 %v1384
        %v1673 = vunpack.c.l.b16 %v1385
        %v1674 = vunpack.c.h.b16 %v1385
        %v1675 = vunpack.c.l.b16 %v1386
        %v1676 = vunpack.c.h.b16 %v1386
        %v1677 = vunpack.c.l.b16 %v1387
        %v1678 = vunpack.c.h.b16 %v1387
        %v1679 = vunpack.c.l.b16 %v1388
        %v1680 = vunpack.c.h.b16 %v1388
        %v1681 = vunpack.c.l.b16 %v1389
        %v1682 = vunpack.c.h.b16 %v1389
        %v1683 = vunpack.c.l.b16 %v1390
        %v1684 = vunpack.c.h.b16 %v1390
        %v1685 = vunpack.c.l.b16 %v1391
        %v1686 = vunpack.c.h.b16 %v1391
        %v1687 = vunpack.c.l.b16 %v1392
        %v1688 = vunpack.c.h.b16 %v1392
        %v1689 = vunpack.c.l.b16 %v1393
        %v1690 = vunpack.c.h.b16 %v1393
        %v1691 = vunpack.c.l.b16 %v1394
        %v1692 = vunpack.c.h.b16 %v1394
        %v1693 = vunpack.c.l.b16 %v1395
        %v1694 = vunpack.c.h.b16 %v1395
        %v1695 = vunpack.c.l.b16 %v1396
        %v1696 = vunpack.c.h.b16 %v1396
        %v1697 = vunpack.c.l.b16 %v1397
        %v1698 = vunpack.c.h.b16 %v1397
        %v1699 = vunpack.c.l.b16 %v1398
        %v1700 = vunpack.c.h.b16 %v1398
        %v1701 = vunpack.c.l.b16 %v1399
        %v1702 = vunpack.c.h.b16 %v1399
        %v1703 = vunpack.c.l.b16 %v1400
        %v1704 = vunpack.c.h.b16 %v1400
        %v1705 = vunpack.c.l.b16 %v1401
        %v1706 = vunpack.c.h.b16 %v1401
        %v1707 = vunpack.c.l.b16 %v1402
        %v1708 = vunpack.c.h.b16 %v1402
        %v1709 = vunpack.c.l.b16 %v1403
        %v1710 = vunpack.c.h.b16 %v1403
        %v1711 = vunpack.c.l.b16 %v1404
        %v1712 = vunpack.c.h.b16 %v1404
        %v1713 = vunpack.c.l.b16 %v1405
        %v1714 = vunpack.c.h.b16 %v1405
        %v1715 = vunpack.c.l.b16 %v1406
        %v1716 = vunpack.c.h.b16 %v1406
        %v1717 = vunpack.c.l.b16 %v1407
        %v1718 = vunpack.c.h.b16 %v1407
        %v1719 = vunpack.c.l.b16 %v1408
        %v1720 = vunpack.c.h.b16 %v1408
        %v1721 = vunpack.c.l.b16 %v1409
        %v1722 = vunpack.c.h.b16 %v1409
        %v1723 = vunpack.c.l.b16 %v1410
        %v1724 = vunpack.c.h.b16 %v1410
        %v1725 = vunpack.c.l.b16 %v1411
        %v1726 = vunpack.c.h.b16 %v1411
        %v1727 = vunpack.c.l.b16 %v1412
        %v1728 = vunpack.c.h.b16 %v1412
        %v1729 = vunpack.c.l.b16 %v1413
        %v1730 = vunpack.c.h.b16 %v1413
        %v1731 = vunpack.c.l.b16 %v1414
        %v1732 = vunpack.c.h.b16 %v1414
        %v1733 = vunpack.c.l.b16 %v1415
        %v1734 = vunpack.c.h.b16 %v1415
        %v1735 = vunpack.c.l.b16 %v1416
        %v1736 = vunpack.c.h.b16 %v1416
        %v1737 = vunpack.c.l.b16 %v1417
        %v1738 = vunpack.c.h.b16 %v1417
        %v1739 = vunpack.c.l.b16 %v1418
        %v1740 = vunpack.c.h.b16 %v1418
        %v1741 = vunpack.c.l.b16 %v1419
        %v1742 = vunpack.c.h.b16 %v1419
        %v1743 = vunpack.c.l.b16 %v1420
        %v1744 = vunpack.c.h.b16 %v1420
        %v1745 = vunpack.c.l.b16 %v1421
        %v1746 = vunpack.c.h.b16 %v1421
        %v1747 = vunpack.c.l.b16 %v1422
        %v1748 = vunpack.c.h.b16 %v1422
        %v1749 = vunpack.c.l.b16 %v1423
        %v1750 = vunpack.c.h.b16 %v1423
        %v1751 = vunpack.c.l.b16 %v1424
        %v1752 = vunpack.c.h.b16 %v1424
        %v1753 = vunpack.c.l.b16 %v1425
        %v1754 = vunpack.c.h.b16 %v1425
        %v1755 = vunpack.c.l.b16 %v1426
        %v1756 = vunpack.c.h.b16 %v1426
        %v1757 = vunpack.c.l.b16 %v1427
        %v1758 = vunpack.c.h.b16 %v1427
        %v1759 = vunpack.c.l.b16 %v1428
        %v1760 = vunpack.c.h.b16 %v1428
        %v1761 = vunpack.c.l.b16 %v1429
        %v1762 = vunpack.c.h.b16 %v1429
        %v1763 = vunpack.c.l.b16 %v1430
        %v1764 = vunpack.c.h.b16 %v1430
        %v1765 = vunpack.c.l.b16 %v1431
        %v1766 = vunpack.c.h.b16 %v1431
        %v1767 = vunpack.c.l.b16 %v1432
        %v1768 = vunpack.c.h.b16 %v1432
        %v1769 = vunpack.c.l.b16 %v1433
        %v1770 = vunpack.c.h.b16 %v1433
        %v1771 = vunpack.c.l.b16 %v1434
        %v1772 = vunpack.c.h.b16 %v1434
        %v1773 = vunpack.c.l.b16 %v1435
        %v1774 = vunpack.c.h.b16 %v1435
        %v1775 = vunpack.c.l.b16 %v1436
        %v1776 = vunpack.c.h.b16 %v1436
        %v1777 = vunpack.c.l.b16 %v1437
        %v1778 = vunpack.c.h.b16 %v1437
        %v1779 = vunpack.c.l.b16 %v1438
        %v1780 = vunpack.c.h.b16 %v1438
        %v1781 = vunpack.c.l.b16 %v1439
        %v1782 = vunpack.c.h.b16 %v1439
        %v1783 = vunpack.c.l.b16 %v1440
        %v1784 = vunpack.c.h.b16 %v1440
        %v1785 = vunpack.c.l.b16 %v1441
        %v1786 = vunpack.c.h.b16 %v1441
        %v1787 = vunpack.c.l.b16 %v1442
        %v1788 = vunpack.c.h.b16 %v1442
        %v1789 = vunpack.c.l.b16 %v1443
        %v1790 = vunpack.c.h.b16 %v1443
        %v1791 = vunpack.c.l.b16 %v1444
        %v1792 = vunpack.c.h.b16 %v1444
        %v1793 = vunpack.c.l.b16 %v1445
        %v1794 = vunpack.c.h.b16 %v1445
        %v1795 = vunpack.c.l.b16 %v1446
        %v1796 = vunpack.c.h.b16 %v1446
        %v1797 = vunpack.c.l.b16 %v1447
        %v1798 = vunpack.c.h.b16 %v1447
        %v1799 = vunpack.c.l.b16 %v1448
        %v1800 = vunpack.c.h.b16 %v1448
        %v1801 = vunpack.c.l.b16 %v1449
        %v1802 = vunpack.c.h.b16 %v1449
        %v1803 = vunpack.c.l.b16 %v1450
        %v1804 = vunpack.c.h.b16 %v1450
        %v1805 = vunpack.c.l.b16 %v1451
        %v1806 = vunpack.c.h.b16 %v1451
        %v1807 = vunpack.c.l.b16 %v1452
        %v1808 = vunpack.c.h.b16 %v1452
        %v1809 = vunpack.c.l.b16 %v1453
        %v1810 = vunpack.c.h.b16 %v1453
        %v1811 = vunpack.c.l.b16 %v1454
        %v1812 = vunpack.c.h.b16 %v1454
        %v1813 = vunpack.c.l.b16 %v1455
        %v1814 = vunpack.c.h.b16 %v1455
        %v1815 = vunpack.c.l.b16 %v1456
        %v1816 = vunpack.c.h.b16 %v1456
        %v1817 = vunpack.c.l.b16 %v1457
        %v1818 = vunpack.c.h.b16 %v1457
        %v1819 = vunpack.c.l.b16 %v1458
        %v1820 = vunpack.c.h.b16 %v1458
        %v1821 = vunpack.c.l.b16 %v1459
        %v1822 = vunpack.c.h.b16 %v1459
        %v1823 = vunpack.c.l.b16 %v1460
        %v1824 = vunpack.c.h.b16 %v1460
        %v1825 = vunpack.c.l.b16 %v1461
        %v1826 = vunpack.c.h.b16 %v1461
        %v1827 = vunpack.c.l.b16 %v1462
        %v1828 = vunpack.c.h.b16 %v1462
        %v1829 = vunpack.c.l.b16 %v1463
        %v1830 = vunpack.c.h.b16 %v1463
        %v1831 = vunpack.c.l.b16 %v1464
        %v1832 = vunpack.c.h.b16 %v1464
        %v1833 = vunpack.c.l.b16 %v1465
        %v1834 = vunpack.c.h.b16 %v1465
        %v1835 = vunpack.c.l.b16 %v1466
        %v1836 = vunpack.c.h.b16 %v1466
        %v1837 = vunpack.c.l.b16 %v1467
        %v1838 = vunpack.c.h.b16 %v1467
        %v1839 = vunpack.c.l.b16 %v1468
        %v1840 = vunpack.c.h.b16 %v1468
        %v1841 = vunpack.c.l.b16 %v1469
        %v1842 = vunpack.c.h.b16 %v1469
        %v1843 = vunpack.c.l.b16 %v1470
        %v1844 = vunpack.c.h.b16 %v1470
        %v1845 = vunpack.c.l.b16 %v1471
        %v1846 = vunpack.c.h.b16 %v1471
        %v1847 = vunpack.c.l.b16 %v1472
        %v1848 = vunpack.c.h.b16 %v1472
        %v1849 = vunpack.c.l.b16 %v1473
        %v1850 = vunpack.c.h.b16 %v1473
        %v1851 = vunpack.c.l.b16 %v1474
        %v1852 = vunpack.c.h.b16 %v1474
        %v1853 = vunpack.c.l.b16 %v1475
        %v1854 = vunpack.c.h.b16 %v1475
        %v1855 = vunpack.c.l.b16 %v1476
        %v1856 = vunpack.c.h.b16 %v1476
        %v1857 = vunpack.c.l.b16 %v1477
        %v1858 = vunpack.c.h.b16 %v1477
        %v1859 = vunpack.c.l.b16 %v1478
        %v1860 = vunpack.c.h.b16 %v1478
        %v1861 = vunpack.c.l.b16 %v1479
        %v1862 = vunpack.c.h.b16 %v1479
        %v1863 = vunpack.c.l.b16 %v1480
        %v1864 = vunpack.c.h.b16 %v1480
        %v1865 = vunpack.c.l.b16 %v1481
        %v1866 = vunpack.c.h.b16 %v1481
        %v1867 = vpack.c.b16 %v1619, %v1611
        %v1868 = vpack.c.b16 %v1620, %v1612
        %v1869 = vpack.c.b16 %v1621, %v1613
        %v1870 = vpack.c.b16 %v1622, %v1614
        %v1871 = vpack.c.b16 %v1623, %v1615
        %v1872 = vpack.c.b16 %v1624, %v1616
        %v1873 = vpack.c.b16 %v1625, %v1617
        %v1874 = vpack.c.b16 %v1626, %v1618
        %v1875 = vpack.c.b16 %v1635, %v1627
        %v1876 = vpack.c.b16 %v1636, %v1628
        %v1877 = vpack.c.b16 %v1637, %v1629
        %v1878 = vpack.c.b16 %v1638, %v1630
        %v1879 = vpack.c.b16 %v1639, %v1631
        %v1880 = vpack.c.b16 %v1640, %v1632
        %v1881 = vpack.c.b16 %v1641, %v1633
        %v1882 = vpack.c.b16 %v1642, %v1634
        %v1883 = vpack.c.b16 %v1651, %v1643
        %v1884 = vpack.c.b16 %v1652, %v1644
        %v1885 = vpack.c.b16 %v1653, %v1645
        %v1886 = vpack.c.b16 %v1654, %v1646
        %v1887 = vpack.c.b16 %v1655, %v1647
        %v1888 = vpack.c.b16 %v1656, %v1648
        %v1889 = vpack.c.b16 %v1657, %v1649
        %v1890 = vpack.c.b16 %v1658, %v1650
        %v1891 = vpack.c.b16 %v1667, %v1659
        %v1892 = vpack.c.b16 %v1668, %v1660
        %v1893 = vpack.c.b16 %v1669, %v1661
        %v1894 = vpack.c.b16 %v1670, %v1662
        %v1895 = vpack.c.b16 %v1671, %v1663
        %v1896 = vpack.c.b16 %v1672, %v1664
        %v1897 = vpack.c.b16 %v1673, %v1665
        %v1898 = vpack.c.b16 %v1674, %v1666
        %v1899 = vpack.c.b16 %v1683, %v1675
        %v1900 = vpack.c.b16 %v1684, %v1676
        %v1901 = vpack.c.b16 %v1685, %v1677
        %v1902 = vpack.c.b16 %v1686, %v1678
        %v1903 = vpack.c.b16 %v1687, %v1679
        %v1904 = vpack.c.b16 %v1688, %v1680
        %v1905 = vpack.c.b16 %v1689, %v1681
        %v1906 = vpack.c.b16 %v1690, %v1682
        %v1907 = vpack.c.b16 %v1699, %v1691
        %v1908 = vpack.c.b16 %v1700, %v1692
        %v1909 = vpack.c.b16 %v1701, %v1693
        %v1910 = vpack.c.b16 %v1702, %v1694
        %v1911 = vpack.c.b16 %v1703, %v1695
        %v1912 = vpack.c.b16 %v1704, %v1696
        %v1913 = vpack.c.b16 %v1705, %v1697
        %v1914 = vpack.c.b16 %v1706, %v1698
        %v1915 = vpack.c.b16 %v1715, %v1707
        %v1916 = vpack.c.b16 %v1716, %v1708
        %v1917 = vpack.c.b16 %v1717, %v1709
        %v1918 = vpack.c.b16 %v1718, %v1710
        %v1919 = vpack.c.b16 %v1719, %v1711
        %v1920 = vpack.c.b16 %v1720, %v1712
        %v1921 = vpack.c.b16 %v1721, %v1713
        %v1922 = vpack.c.b16 %v1722, %v1714
        %v1923 = vpack.c.b16 %v1731, %v1723
        %v1924 = vpack.c.b16 %v1732, %v1724
        %v1925 = vpack.c.b16 %v1733, %v1725
        %v1926 = vpack.c.b16 %v1734, %v1726
        %v1927 = vpack.c.b16 %v1735, %v1727
        %v1928 = vpack.c.b16 %v1736, %v1728
        %v1929 = vpack.c.b16 %v1737, %v1729
        %v1930 = vpack.c.b16 %v1738, %v1730
        %v1931 = vpack.c.b16 %v1747, %v1739
        %v1932 = vpack.c.b16 %v1748, %v1740
        %v1933 = vpack.c.b16 %v1749, %v1741
        %v1934 = vpack.c.b16 %v1750, %v1742
        %v1935 = vpack.c.b16 %v1751, %v1743
        %v1936 = vpack.c.b16 %v1752, %v1744
        %v1937 = vpack.c.b16 %v1753, %v1745
        %v1938 = vpack.c.b16 %v1754, %v1746
        %v1939 = vpack.c.b16 %v1763, %v1755
        %v1940 = vpack.c.b16 %v1764, %v1756
        %v1941 = vpack.c.b16 %v1765, %v1757
        %v1942 = vpack.c.b16 %v1766, %v1758
        %v1943 = vpack.c.b16 %v1767, %v1759
        %v1944 = vpack.c.b16 %v1768, %v1760
        %v1945 = vpack.c.b16 %v1769, %v1761
        %v1946 = vpack.c.b16 %v1770, %v1762
        %v1947 = vpack.c.b16 %v1779, %v1771
        %v1948 = vpack.c.b16 %v1780, %v1772
        %v1949 = vpack.c.b16 %v1781, %v1773
        %v1950 = vpack.c.b16 %v1782, %v1774
        %v1951 = vpack.c.b16 %v1783, %v1775
        %v1952 = vpack.c.b16 %v1784, %v1776
        %v1953 = vpack.c.b16 %v1785, %v1777
        %v1954 = vpack.c.b16 %v1786, %v1778
        %v1955 = vpack.c.b16 %v1795, %v1787
        %v1956 = vpack.c.b16 %v1796, %v1788
        %v1957 = vpack.c.b16 %v1797, %v1789
        %v1958 = vpack.c.b16 %v1798, %v1790
        %v1959 = vpack.c.b16 %v1799, %v1791
        %v1960 = vpack.c.b16 %v1800, %v1792
        %v1961 = vpack.c.b16 %v1801, %v1793
        %v1962 = vpack.c.b16 %v1802, %v1794
        %v1963 = vpack.c.b16 %v1811, %v1803
        %v1964 = vpack.c.b16 %v1812, %v1804
        %v1965 = vpack.c.b16 %v1813, %v1805
        %v1966 = vpack.c.b16 %v1814, %v1806
        %v1967 = vpack.c.b16 %v1815, %v1807
        %v1968 = vpack.c.b16 %v1816, %v1808
        %v1969 = vpack.c.b16 %v1817, %v1809
        %v1970 = vpack.c.b16 %v1818, %v1810
        %v1971 = vpack.c.b16 %v1827, %v1819
        %v1972 = vpack.c.b16 %v1828, %v1820
        %v1973 = vpack.c.b16 %v1829, %v1821
        %v1974 = vpack.c.b16 %v1830, %v1822
        %v1975 = vpack.c.b16 %v1831, %v1823
        %v1976 = vpack.c.b16 %v1832, %v1824
        %v1977 = vpack.c.b16 %v1833, %v1825
        %v1978 = vpack.c.b16 %v1834, %v1826
        %v1979 = vpack.c.b16 %v1843, %v1835
        %v1980 = vpack.c.b16 %v1844, %v1836
        %v1981 = vpack.c.b16 %v1845, %v1837
        %v1982 = vpack.c.b16 %v1846, %v1838
        %v1983 = vpack.c.b16 %v1847, %v1839
        %v1984 = vpack.c.b16 %v1848, %v1840
        %v1985 = vpack.c.b16 %v1849, %v1841
        %v1986 = vpack.c.b16 %v1850, %v1842
        %v1987 = vpack.c.b16 %v1859, %v1851
        %v1988 = vpack.c.b16 %v1860, %v1852
        %v1989 = vpack.c.b16 %v1861, %v1853
        %v1990 = vpack.c.b16 %v1862, %v1854
        %v1991 = vpack.c.b16 %v1863, %v1855
        %v1992 = vpack.c.b16 %v1864, %v1856
        %v1993 = vpack.c.b16 %v1865, %v1857
        %v1994 = vpack.c.b16 %v1866, %v1858
        %v2124 = vlaneseq
        %v2125 = vshrl.u32 %v2124, 7
        %v2126 = vsub.s32 0, %v2125
        %v2127 = vrot.slane %v1482, %v2126
        %v2128 = vlaneseq
        %v2129 = vshrl.u32 %v2128, 7
        %v2130 = vsub.s32 1, %v2129
        %v2131 = vrot.slane %v1482, %v2130
        %v2132 = vlaneseq
        %v2133 = vshrl.u32 %v2132, 7
        %v2134 = vsub.s32 2, %v2133
        %v2135 = vrot.slane %v1482, %v2134
        %v2136 = vlaneseq
        %v2137 = vshrl.u32 %v2136, 7
        %v2138 = vsub.s32 3, %v2137
        %v2139 = vrot.slane %v1482, %v2138
        %v2140 = vlaneseq
        %v2141 = vshrl.u32 %v2140, 7
        %v2142 = vsub.s32 4, %v2141
        %v2143 = vrot.slane %v1482, %v2142
        %v2144 = vlaneseq
        %v2145 = vshrl.u32 %v2144, 7
        %v2146 = vsub.s32 5, %v2145
        %v2147 = vrot.slane %v1482, %v2146
        %v2148 = vlaneseq
        %v2149 = vshrl.u32 %v2148, 7
        %v2150 = vsub.s32 6, %v2149
        %v2151 = vrot.slane %v1482, %v2150
        %v2152 = vlaneseq
        %v2153 = vshrl.u32 %v2152, 7
        %v2154 = vsub.s32 7, %v2153
        %v2155 = vrot.slane %v1482, %v2154
        %2164 = vmatprep.subr.bf16.mxu0 %v1868
        %2165 = vmatpush1.bf16.msra.mxu0 %v1867
        %2166 = vmatprep.subr.bf16.mxu0 %v1876
        %2167 = vmatpush1.bf16.msra.mxu0 %v1875
        %2168 = vmatprep.subr.bf16.mxu0 %v1884
        %2169 = vmatpush1.bf16.msra.mxu0 %v1883
        %2170 = vmatprep.subr.bf16.mxu0 %v1892
        %2171 = vmatpush1.bf16.msra.mxu0 %v1891
        %2172 = vmatprep.subr.bf16.mxu0 %v1900
        %2173 = vmatpush1.bf16.msra.mxu0 %v1899
        %2174 = vmatprep.subr.bf16.mxu0 %v1908
        %2175 = vmatpush1.bf16.msra.mxu0 %v1907
        %2176 = vmatprep.subr.bf16.mxu0 %v1916
        %2177 = vmatpush1.bf16.msra.mxu0 %v1915
        %2178 = vmatprep.subr.bf16.mxu0 %v1924
        %2179 = vmatpush1.bf16.msra.mxu0 %v1923
        %2180 = vmatprep.subr.bf16.mxu0 %v1932
        %2181 = vmatpush1.bf16.msra.mxu0 %v1931
        %2182 = vmatprep.subr.bf16.mxu0 %v1940
        %2183 = vmatpush1.bf16.msra.mxu0 %v1939
        %2184 = vmatprep.subr.bf16.mxu0 %v1948
        %2185 = vmatpush1.bf16.msra.mxu0 %v1947
        %2186 = vmatprep.subr.bf16.mxu0 %v1956
        %2187 = vmatpush1.bf16.msra.mxu0 %v1955
        %2188 = vmatprep.subr.bf16.mxu0 %v1964
        %2189 = vmatpush1.bf16.msra.mxu0 %v1963
        %2190 = vmatprep.subr.bf16.mxu0 %v1972
        %2191 = vmatpush1.bf16.msra.mxu0 %v1971
        %2192 = vmatprep.subr.bf16.mxu0 %v1980
        %2193 = vmatpush1.bf16.msra.mxu0 %v1979
        %2194 = vmatprep.subr.bf16.mxu0 %v1988
        %2195 = vmatpush1.bf16.msra.mxu0 %v1987
        %2196 = vmatprep.mubr.bf16.mxu0 %v1353
        %2197 = vmatmul.mubr.bf16.gmra.mrb[0].mxu0 %v1352
        %v2198 = vpop.f32.mrb[0].mxu0
        %v2199 = vadd.f32 %v2127, %v2198
        %v2200 = vpop.f32.mrb[0].mxu0
        %v2201 = vadd.f32 %v2131, %v2200
        %v2202 = vpop.f32.mrb[0].mxu0
        %v2203 = vpop.f32.mrb[0].mxu0
        %2204 = vdwg.mxu0
        %2205 = vmatprep.subr.bf16.mxu0 %v1870
        %2206 = vmatpush1.bf16.msra.mxu0 %v1869
        %2207 = vmatprep.subr.bf16.mxu0 %v1878
        %2208 = vmatpush1.bf16.msra.mxu0 %v1877
        %2209 = vmatprep.subr.bf16.mxu0 %v1886
        %2210 = vmatpush1.bf16.msra.mxu0 %v1885
        %2211 = vmatprep.subr.bf16.mxu0 %v1894
        %2212 = vmatpush1.bf16.msra.mxu0 %v1893
        %2213 = vmatprep.subr.bf16.mxu0 %v1902
        %2214 = vmatpush1.bf16.msra.mxu0 %v1901
        %2215 = vmatprep.subr.bf16.mxu0 %v1910
        %2216 = vmatpush1.bf16.msra.mxu0 %v1909
        %2217 = vmatprep.subr.bf16.mxu0 %v1918
        %2218 = vmatpush1.bf16.msra.mxu0 %v1917
        %2219 = vmatprep.subr.bf16.mxu0 %v1926
        %2220 = vmatpush1.bf16.msra.mxu0 %v1925
        %2221 = vmatprep.subr.bf16.mxu0 %v1934
        %2222 = vmatpush1.bf16.msra.mxu0 %v1933
        %2223 = vmatprep.subr.bf16.mxu0 %v1942
        %2224 = vmatpush1.bf16.msra.mxu0 %v1941
        %2225 = vmatprep.subr.bf16.mxu0 %v1950
        %2226 = vmatpush1.bf16.msra.mxu0 %v1949
        %2227 = vmatprep.subr.bf16.mxu0 %v1958
        %2228 = vmatpush1.bf16.msra.mxu0 %v1957
        %2229 = vmatprep.subr.bf16.mxu0 %v1966
        %2230 = vmatpush1.bf16.msra.mxu0 %v1965
        %2231 = vmatprep.subr.bf16.mxu0 %v1974
        %2232 = vmatpush1.bf16.msra.mxu0 %v1973
        %2233 = vmatprep.subr.bf16.mxu0 %v1982
        %2234 = vmatpush1.bf16.msra.mxu0 %v1981
        %2235 = vmatprep.subr.bf16.mxu0 %v1990
        %2236 = vmatpush1.bf16.msra.mxu0 %v1989
        %2237 = vmatprep.mubr.bf16.mxu0 %v1353
        %2238 = vmatmul.mubr.bf16.gmra.mrb[0].mxu0 %v1352
        %v2239 = vpop.f32.mrb[0].mxu0
        %v2240 = vadd.f32 %v2135, %v2239
        %v2241 = vpop.f32.mrb[0].mxu0
        %v2242 = vadd.f32 %v2139, %v2241
        %v2243 = vpop.f32.mrb[0].mxu0
        %v2244 = vpop.f32.mrb[0].mxu0
        %2245 = vdwg.mxu0
        %2246 = vmatprep.subr.bf16.mxu0 %v1872
        %2247 = vmatpush1.bf16.msra.mxu0 %v1871
        %2248 = vmatprep.subr.bf16.mxu0 %v1880
        %2249 = vmatpush1.bf16.msra.mxu0 %v1879
        %2250 = vmatprep.subr.bf16.mxu0 %v1888
        %2251 = vmatpush1.bf16.msra.mxu0 %v1887
        %2252 = vmatprep.subr.bf16.mxu0 %v1896
        %2253 = vmatpush1.bf16.msra.mxu0 %v1895
        %2254 = vmatprep.subr.bf16.mxu0 %v1904
        %2255 = vmatpush1.bf16.msra.mxu0 %v1903
        %2256 = vmatprep.subr.bf16.mxu0 %v1912
        %2257 = vmatpush1.bf16.msra.mxu0 %v1911
        %2258 = vmatprep.subr.bf16.mxu0 %v1920
        %2259 = vmatpush1.bf16.msra.mxu0 %v1919
        %2260 = vmatprep.subr.bf16.mxu0 %v1928
        %2261 = vmatpush1.bf16.msra.mxu0 %v1927
        %2262 = vmatprep.subr.bf16.mxu0 %v1936
        %2263 = vmatpush1.bf16.msra.mxu0 %v1935
        %2264 = vmatprep.subr.bf16.mxu0 %v1944
        %2265 = vmatpush1.bf16.msra.mxu0 %v1943
        %2266 = vmatprep.subr.bf16.mxu0 %v1952
        %2267 = vmatpush1.bf16.msra.mxu0 %v1951
        %2268 = vmatprep.subr.bf16.mxu0 %v1960
        %2269 = vmatpush1.bf16.msra.mxu0 %v1959
        %2270 = vmatprep.subr.bf16.mxu0 %v1968
        %2271 = vmatpush1.bf16.msra.mxu0 %v1967
        %2272 = vmatprep.subr.bf16.mxu0 %v1976
        %2273 = vmatpush1.bf16.msra.mxu0 %v1975
        %2274 = vmatprep.subr.bf16.mxu0 %v1984
        %2275 = vmatpush1.bf16.msra.mxu0 %v1983
        %2276 = vmatprep.subr.bf16.mxu0 %v1992
        %2277 = vmatpush1.bf16.msra.mxu0 %v1991
        %2278 = vmatprep.mubr.bf16.mxu0 %v1353
        %2279 = vmatmul.mubr.bf16.gmra.mrb[0].mxu0 %v1352
        %v2280 = vpop.f32.mrb[0].mxu0
        %v2281 = vadd.f32 %v2143, %v2280
        %v2282 = vpop.f32.mrb[0].mxu0
        %v2283 = vadd.f32 %v2147, %v2282
        %v2284 = vpop.f32.mrb[0].mxu0
        %v2285 = vpop.f32.mrb[0].mxu0
        %2286 = vdwg.mxu0
        %2287 = vmatprep.subr.bf16.mxu0 %v1874
        %2288 = vmatpush1.bf16.msra.mxu0 %v1873
        %2289 = vmatprep.subr.bf16.mxu0 %v1882
        %2290 = vmatpush1.bf16.msra.mxu0 %v1881
        %2291 = vmatprep.subr.bf16.mxu0 %v1890
        %2292 = vmatpush1.bf16.msra.mxu0 %v1889
        %2293 = vmatprep.subr.bf16.mxu0 %v1898
        %2294 = vmatpush1.bf16.msra.mxu0 %v1897
        %2295 = vmatprep.subr.bf16.mxu0 %v1906
        %2296 = vmatpush1.bf16.msra.mxu0 %v1905
        %2297 = vmatprep.subr.bf16.mxu0 %v1914
        %2298 = vmatpush1.bf16.msra.mxu0 %v1913
        %2299 = vmatprep.subr.bf16.mxu0 %v1922
        %2300 = vmatpush1.bf16.msra.mxu0 %v1921
        %2301 = vmatprep.subr.bf16.mxu0 %v1930
        %2302 = vmatpush1.bf16.msra.mxu0 %v1929
        %2303 = vmatprep.subr.bf16.mxu0 %v1938
        %2304 = vmatpush1.bf16.msra.mxu0 %v1937
        %2305 = vmatprep.subr.bf16.mxu0 %v1946
        %2306 = vmatpush1.bf16.msra.mxu0 %v1945
        %2307 = vmatprep.subr.bf16.mxu0 %v1954
        %2308 = vmatpush1.bf16.msra.mxu0 %v1953
        %2309 = vmatprep.subr.bf16.mxu0 %v1962
        %2310 = vmatpush1.bf16.msra.mxu0 %v1961
        %2311 = vmatprep.subr.bf16.mxu0 %v1970
        %2312 = vmatpush1.bf16.msra.mxu0 %v1969
        %2313 = vmatprep.subr.bf16.mxu0 %v1978
        %2314 = vmatpush1.bf16.msra.mxu0 %v1977
        %2315 = vmatprep.subr.bf16.mxu0 %v1986
        %2316 = vmatpush1.bf16.msra.mxu0 %v1985
        %2317 = vmatprep.subr.bf16.mxu0 %v1994
        %2318 = vmatpush1.bf16.msra.mxu0 %v1993
        %2319 = vmatprep.mubr.bf16.mxu0 %v1353
        %2320 = vmatmul.mubr.bf16.gmra.mrb[0].mxu0 %v1352
        %v2321 = vpop.f32.mrb[0].mxu0
        %v2322 = vadd.f32 %v2151, %v2321
        %v2323 = vpop.f32.mrb[0].mxu0
        %v2324 = vadd.f32 %v2155, %v2323
        %v2325 = vpop.f32.mrb[0].mxu0
        %v2326 = vpop.f32.mrb[0].mxu0
        %2327 = vdwg.mxu0
        %vm2328 = vcmp.ge.f32.partialorder %v2199, 0.0
        %vm2329 = vcmp.ge.f32.partialorder %v2201, 0.0
        %vm2330 = vcmp.ge.f32.partialorder %v2240, 0.0
        %vm2331 = vcmp.ge.f32.partialorder %v2242, 0.0
        %vm2332 = vcmp.ge.f32.partialorder %v2281, 0.0
        %vm2333 = vcmp.ge.f32.partialorder %v2283, 0.0
        %vm2334 = vcmp.ge.f32.partialorder %v2322, 0.0
        %vm2335 = vcmp.ge.f32.partialorder %v2324, 0.0
        %v2336 = vmul.f32 %v2199, 0.01
        %v2337 = vmul.f32 %v2201, 0.01
        %v2338 = vmul.f32 %v2240, 0.01
        %v2339 = vmul.f32 %v2242, 0.01
        %v2340 = vmul.f32 %v2281, 0.01
        %v2341 = vmul.f32 %v2283, 0.01
        %v2342 = vmul.f32 %v2322, 0.01
        %v2343 = vmul.f32 %v2324, 0.01
        %v2344 = vsel %vm2328, %v2199, %v2336
        %v2345 = vsel %vm2329, %v2201, %v2337
        %v2346 = vsel %vm2330, %v2240, %v2338
        %v2347 = vsel %vm2331, %v2242, %v2339
        %v2348 = vsel %vm2332, %v2281, %v2340
        %v2349 = vsel %vm2333, %v2283, %v2341
        %v2350 = vsel %vm2334, %v2322, %v2342
        %v2351 = vsel %vm2335, %v2324, %v2343
        %v2352 = vpack.c.bf16 %v2344, %v2344
        %v2353 = vpack.c.bf16 %v2345, %v2345
        %v2354 = vpack.c.bf16 %v2346, %v2346
        %v2355 = vpack.c.bf16 %v2347, %v2347
        %v2356 = vpack.c.bf16 %v2348, %v2348
        %v2357 = vpack.c.bf16 %v2349, %v2349
        %v2358 = vpack.c.bf16 %v2350, %v2350
        %v2359 = vpack.c.bf16 %v2351, %v2351
        %v2360 = vld [vmem:[#allocation8] sm:$0xff]
        %v2361 = vld [vmem:[#allocation8 + $0x8] sm:$0xff]
        %v2362 = vld [vmem:[#allocation8 + $0x10] sm:$0xff]
        %v2363 = vld [vmem:[#allocation8 + $0x18] sm:$0xff]
        %v2364 = vld [vmem:[#allocation8 + $0x20] sm:$0xff]
        %v2365 = vld [vmem:[#allocation8 + $0x28] sm:$0xff]
        %v2366 = vld [vmem:[#allocation8 + $0x30] sm:$0xff]
        %v2367 = vld [vmem:[#allocation8 + $0x38] sm:$0xff]
        %v2368 = vld [vmem:[#allocation8 + $0x40] sm:$0xff]
        %v2369 = vld [vmem:[#allocation8 + $0x48] sm:$0xff]
        %v2370 = vld [vmem:[#allocation8 + $0x50] sm:$0xff]
        %v2371 = vld [vmem:[#allocation8 + $0x58] sm:$0xff]
        %v2372 = vld [vmem:[#allocation8 + $0x60] sm:$0xff]
        %v2373 = vld [vmem:[#allocation8 + $0x68] sm:$0xff]
        %v2374 = vld [vmem:[#allocation8 + $0x70] sm:$0xff]
        %v2375 = vld [vmem:[#allocation8 + $0x78] sm:$0xff]
        %v2376 = vld [vmem:[#allocation8 + $0x80] sm:$0xff]
        %v2377 = vld [vmem:[#allocation8 + $0x88] sm:$0xff]
        %v2378 = vld [vmem:[#allocation8 + $0x90] sm:$0xff]
        %v2379 = vld [vmem:[#allocation8 + $0x98] sm:$0xff]
        %v2380 = vld [vmem:[#allocation8 + $0xa0] sm:$0xff]
        %v2381 = vld [vmem:[#allocation8 + $0xa8] sm:$0xff]
        %v2382 = vld [vmem:[#allocation8 + $0xb0] sm:$0xff]
        %v2383 = vld [vmem:[#allocation8 + $0xb8] sm:$0xff]
        %v2384 = vld [vmem:[#allocation8 + $0xc0] sm:$0xff]
        %v2385 = vld [vmem:[#allocation8 + $0xc8] sm:$0xff]
        %v2386 = vld [vmem:[#allocation8 + $0xd0] sm:$0xff]
        %v2387 = vld [vmem:[#allocation8 + $0xd8] sm:$0xff]
        %v2388 = vld [vmem:[#allocation8 + $0xe0] sm:$0xff]
        %v2389 = vld [vmem:[#allocation8 + $0xe8] sm:$0xff]
        %v2390 = vld [vmem:[#allocation8 + $0xf0] sm:$0xff]
        %v2391 = vld [vmem:[#allocation8 + $0xf8] sm:$0xff]
        %v2392 = vld [vmem:[#allocation8 + $0x100] sm:$0xff]
        %v2393 = vld [vmem:[#allocation8 + $0x108] sm:$0xff]
        %v2394 = vld [vmem:[#allocation8 + $0x110] sm:$0xff]
        %v2395 = vld [vmem:[#allocation8 + $0x118] sm:$0xff]
        %v2396 = vld [vmem:[#allocation8 + $0x120] sm:$0xff]
        %v2397 = vld [vmem:[#allocation8 + $0x128] sm:$0xff]
        %v2398 = vld [vmem:[#allocation8 + $0x130] sm:$0xff]
        %v2399 = vld [vmem:[#allocation8 + $0x138] sm:$0xff]
        %v2400 = vld [vmem:[#allocation8 + $0x140] sm:$0xff]
        %v2401 = vld [vmem:[#allocation8 + $0x148] sm:$0xff]
        %v2402 = vld [vmem:[#allocation8 + $0x150] sm:$0xff]
        %v2403 = vld [vmem:[#allocation8 + $0x158] sm:$0xff]
        %v2404 = vld [vmem:[#allocation8 + $0x160] sm:$0xff]
        %v2405 = vld [vmem:[#allocation8 + $0x168] sm:$0xff]
        %v2406 = vld [vmem:[#allocation8 + $0x170] sm:$0xff]
        %v2407 = vld [vmem:[#allocation8 + $0x178] sm:$0xff]
        %v2408 = vld [vmem:[#allocation8 + $0x180] sm:$0xff]
        %v2409 = vld [vmem:[#allocation8 + $0x188] sm:$0xff]
        %v2410 = vld [vmem:[#allocation8 + $0x190] sm:$0xff]
        %v2411 = vld [vmem:[#allocation8 + $0x198] sm:$0xff]
        %v2412 = vld [vmem:[#allocation8 + $0x1a0] sm:$0xff]
        %v2413 = vld [vmem:[#allocation8 + $0x1a8] sm:$0xff]
        %v2414 = vld [vmem:[#allocation8 + $0x1b0] sm:$0xff]
        %v2415 = vld [vmem:[#allocation8 + $0x1b8] sm:$0xff]
        %v2416 = vld [vmem:[#allocation8 + $0x1c0] sm:$0xff]
        %v2417 = vld [vmem:[#allocation8 + $0x1c8] sm:$0xff]
        %v2418 = vld [vmem:[#allocation8 + $0x1d0] sm:$0xff]
        %v2419 = vld [vmem:[#allocation8 + $0x1d8] sm:$0xff]
        %v2420 = vld [vmem:[#allocation8 + $0x1e0] sm:$0xff]
        %v2421 = vld [vmem:[#allocation8 + $0x1e8] sm:$0xff]
        %v2422 = vld [vmem:[#allocation8 + $0x1f0] sm:$0xff]
        %v2423 = vld [vmem:[#allocation8 + $0x1f8] sm:$0xff]
        %v2424 = vld [vmem:[#allocation8 + $0x200] sm:$0xff]
        %v2425 = vld [vmem:[#allocation8 + $0x208] sm:$0xff]
        %v2426 = vld [vmem:[#allocation8 + $0x210] sm:$0xff]
        %v2427 = vld [vmem:[#allocation8 + $0x218] sm:$0xff]
        %v2428 = vld [vmem:[#allocation8 + $0x220] sm:$0xff]
        %v2429 = vld [vmem:[#allocation8 + $0x228] sm:$0xff]
        %v2430 = vld [vmem:[#allocation8 + $0x230] sm:$0xff]
        %v2431 = vld [vmem:[#allocation8 + $0x238] sm:$0xff]
        %v2432 = vld [vmem:[#allocation8 + $0x240] sm:$0xff]
        %v2433 = vld [vmem:[#allocation8 + $0x248] sm:$0xff]
        %v2434 = vld [vmem:[#allocation8 + $0x250] sm:$0xff]
        %v2435 = vld [vmem:[#allocation8 + $0x258] sm:$0xff]
        %v2436 = vld [vmem:[#allocation8 + $0x260] sm:$0xff]
        %v2437 = vld [vmem:[#allocation8 + $0x268] sm:$0xff]
        %v2438 = vld [vmem:[#allocation8 + $0x270] sm:$0xff]
        %v2439 = vld [vmem:[#allocation8 + $0x278] sm:$0xff]
        %v2440 = vld [vmem:[#allocation8 + $0x280] sm:$0xff]
        %v2441 = vld [vmem:[#allocation8 + $0x288] sm:$0xff]
        %v2442 = vld [vmem:[#allocation8 + $0x290] sm:$0xff]
        %v2443 = vld [vmem:[#allocation8 + $0x298] sm:$0xff]
        %v2444 = vld [vmem:[#allocation8 + $0x2a0] sm:$0xff]
        %v2445 = vld [vmem:[#allocation8 + $0x2a8] sm:$0xff]
        %v2446 = vld [vmem:[#allocation8 + $0x2b0] sm:$0xff]
        %v2447 = vld [vmem:[#allocation8 + $0x2b8] sm:$0xff]
        %v2448 = vld [vmem:[#allocation8 + $0x2c0] sm:$0xff]
        %v2449 = vld [vmem:[#allocation8 + $0x2c8] sm:$0xff]
        %v2450 = vld [vmem:[#allocation8 + $0x2d0] sm:$0xff]
        %v2451 = vld [vmem:[#allocation8 + $0x2d8] sm:$0xff]
        %v2452 = vld [vmem:[#allocation8 + $0x2e0] sm:$0xff]
        %v2453 = vld [vmem:[#allocation8 + $0x2e8] sm:$0xff]
        %v2454 = vld [vmem:[#allocation8 + $0x2f0] sm:$0xff]
        %v2455 = vld [vmem:[#allocation8 + $0x2f8] sm:$0xff]
        %v2456 = vld [vmem:[#allocation8 + $0x300] sm:$0xff]
        %v2457 = vld [vmem:[#allocation8 + $0x308] sm:$0xff]
        %v2458 = vld [vmem:[#allocation8 + $0x310] sm:$0xff]
        %v2459 = vld [vmem:[#allocation8 + $0x318] sm:$0xff]
        %v2460 = vld [vmem:[#allocation8 + $0x320] sm:$0xff]
        %v2461 = vld [vmem:[#allocation8 + $0x328] sm:$0xff]
        %v2462 = vld [vmem:[#allocation8 + $0x330] sm:$0xff]
        %v2463 = vld [vmem:[#allocation8 + $0x338] sm:$0xff]
        %v2464 = vld [vmem:[#allocation8 + $0x340] sm:$0xff]
        %v2465 = vld [vmem:[#allocation8 + $0x348] sm:$0xff]
        %v2466 = vld [vmem:[#allocation8 + $0x350] sm:$0xff]
        %v2467 = vld [vmem:[#allocation8 + $0x358] sm:$0xff]
        %v2468 = vld [vmem:[#allocation8 + $0x360] sm:$0xff]
        %v2469 = vld [vmem:[#allocation8 + $0x368] sm:$0xff]
        %v2470 = vld [vmem:[#allocation8 + $0x370] sm:$0xff]
        %v2471 = vld [vmem:[#allocation8 + $0x378] sm:$0xff]
        %v2472 = vld [vmem:[#allocation8 + $0x380] sm:$0xff]
        %v2473 = vld [vmem:[#allocation8 + $0x388] sm:$0xff]
        %v2474 = vld [vmem:[#allocation8 + $0x390] sm:$0xff]
        %v2475 = vld [vmem:[#allocation8 + $0x398] sm:$0xff]
        %v2476 = vld [vmem:[#allocation8 + $0x3a0] sm:$0xff]
        %v2477 = vld [vmem:[#allocation8 + $0x3a8] sm:$0xff]
        %v2478 = vld [vmem:[#allocation8 + $0x3b0] sm:$0xff]
        %v2479 = vld [vmem:[#allocation8 + $0x3b8] sm:$0xff]
        %v2480 = vld [vmem:[#allocation8 + $0x3c0] sm:$0xff]
        %v2481 = vld [vmem:[#allocation8 + $0x3c8] sm:$0xff]
        %v2482 = vld [vmem:[#allocation8 + $0x3d0] sm:$0xff]
        %v2483 = vld [vmem:[#allocation8 + $0x3d8] sm:$0xff]
        %v2484 = vld [vmem:[#allocation8 + $0x3e0] sm:$0xff]
        %v2485 = vld [vmem:[#allocation8 + $0x3e8] sm:$0xff]
        %v2486 = vld [vmem:[#allocation8 + $0x3f0] sm:$0xff]
        %v2487 = vld [vmem:[#allocation8 + $0x3f8] sm:$0xff]
        %v2488 = vld [vmem:[#allocation8 + $0x400] sm:$0xff]
        %v2489 = vld [vmem:[#allocation8 + $0x408] sm:$0xff]
        %v2490 = vld [vmem:[#allocation8 + $0x410] sm:$0xff]
        %v2491 = vld [vmem:[#allocation8 + $0x418] sm:$0xff]
        %v2492 = vld [vmem:[#allocation8 + $0x420] sm:$0xff]
        %v2493 = vld [vmem:[#allocation8 + $0x428] sm:$0xff]
        %v2494 = vld [vmem:[#allocation8 + $0x430] sm:$0xff]
        %v2495 = vld [vmem:[#allocation8 + $0x438] sm:$0xff]
        %v2496 = vld [vmem:[#allocation8 + $0x440] sm:$0xff]
        %v2497 = vld [vmem:[#allocation8 + $0x448] sm:$0xff]
        %v2498 = vld [vmem:[#allocation8 + $0x450] sm:$0xff]
        %v2499 = vld [vmem:[#allocation8 + $0x458] sm:$0xff]
        %v2500 = vld [vmem:[#allocation8 + $0x460] sm:$0xff]
        %v2501 = vld [vmem:[#allocation8 + $0x468] sm:$0xff]
        %v2502 = vld [vmem:[#allocation8 + $0x470] sm:$0xff]
        %v2503 = vld [vmem:[#allocation8 + $0x478] sm:$0xff]
        %v2504 = vld [vmem:[#allocation8 + $0x480] sm:$0xff]
        %v2505 = vld [vmem:[#allocation8 + $0x488] sm:$0xff]
        %v2506 = vld [vmem:[#allocation8 + $0x490] sm:$0xff]
        %v2507 = vld [vmem:[#allocation8 + $0x498] sm:$0xff]
        %v2508 = vld [vmem:[#allocation8 + $0x4a0] sm:$0xff]
        %v2509 = vld [vmem:[#allocation8 + $0x4a8] sm:$0xff]
        %v2510 = vld [vmem:[#allocation8 + $0x4b0] sm:$0xff]
        %v2511 = vld [vmem:[#allocation8 + $0x4b8] sm:$0xff]
        %v2512 = vld [vmem:[#allocation8 + $0x4c0] sm:$0xff]
        %v2513 = vld [vmem:[#allocation8 + $0x4c8] sm:$0xff]
        %v2514 = vld [vmem:[#allocation8 + $0x4d0] sm:$0xff]
        %v2515 = vld [vmem:[#allocation8 + $0x4d8] sm:$0xff]
        %v2516 = vld [vmem:[#allocation8 + $0x4e0] sm:$0xff]
        %v2517 = vld [vmem:[#allocation8 + $0x4e8] sm:$0xff]
        %v2518 = vld [vmem:[#allocation8 + $0x4f0] sm:$0xff]
        %v2519 = vld [vmem:[#allocation8 + $0x4f8] sm:$0xff]
        %v2520 = vld [vmem:[#allocation8 + $0x500] sm:$0xff]
        %v2521 = vld [vmem:[#allocation8 + $0x508] sm:$0xff]
        %v2522 = vld [vmem:[#allocation8 + $0x510] sm:$0xff]
        %v2523 = vld [vmem:[#allocation8 + $0x518] sm:$0xff]
        %v2524 = vld [vmem:[#allocation8 + $0x520] sm:$0xff]
        %v2525 = vld [vmem:[#allocation8 + $0x528] sm:$0xff]
        %v2526 = vld [vmem:[#allocation8 + $0x530] sm:$0xff]
        %v2527 = vld [vmem:[#allocation8 + $0x538] sm:$0xff]
        %v2528 = vld [vmem:[#allocation8 + $0x540] sm:$0xff]
        %v2529 = vld [vmem:[#allocation8 + $0x548] sm:$0xff]
        %v2530 = vld [vmem:[#allocation8 + $0x550] sm:$0xff]
        %v2531 = vld [vmem:[#allocation8 + $0x558] sm:$0xff]
        %v2532 = vld [vmem:[#allocation8 + $0x560] sm:$0xff]
        %v2533 = vld [vmem:[#allocation8 + $0x568] sm:$0xff]
        %v2534 = vld [vmem:[#allocation8 + $0x570] sm:$0xff]
        %v2535 = vld [vmem:[#allocation8 + $0x578] sm:$0xff]
        %v2536 = vld [vmem:[#allocation8 + $0x580] sm:$0xff]
        %v2537 = vld [vmem:[#allocation8 + $0x588] sm:$0xff]
        %v2538 = vld [vmem:[#allocation8 + $0x590] sm:$0xff]
        %v2539 = vld [vmem:[#allocation8 + $0x598] sm:$0xff]
        %v2540 = vld [vmem:[#allocation8 + $0x5a0] sm:$0xff]
        %v2541 = vld [vmem:[#allocation8 + $0x5a8] sm:$0xff]
        %v2542 = vld [vmem:[#allocation8 + $0x5b0] sm:$0xff]
        %v2543 = vld [vmem:[#allocation8 + $0x5b8] sm:$0xff]
        %v2544 = vld [vmem:[#allocation8 + $0x5c0] sm:$0xff]
        %v2545 = vld [vmem:[#allocation8 + $0x5c8] sm:$0xff]
        %v2546 = vld [vmem:[#allocation8 + $0x5d0] sm:$0xff]
        %v2547 = vld [vmem:[#allocation8 + $0x5d8] sm:$0xff]
        %v2548 = vld [vmem:[#allocation8 + $0x5e0] sm:$0xff]
        %v2549 = vld [vmem:[#allocation8 + $0x5e8] sm:$0xff]
        %v2550 = vld [vmem:[#allocation8 + $0x5f0] sm:$0xff]
        %v2551 = vld [vmem:[#allocation8 + $0x5f8] sm:$0xff]
        %v2552 = vld [vmem:[#allocation8 + $0x600] sm:$0xff]
        %v2553 = vld [vmem:[#allocation8 + $0x608] sm:$0xff]
        %v2554 = vld [vmem:[#allocation8 + $0x610] sm:$0xff]
        %v2555 = vld [vmem:[#allocation8 + $0x618] sm:$0xff]
        %v2556 = vld [vmem:[#allocation8 + $0x620] sm:$0xff]
        %v2557 = vld [vmem:[#allocation8 + $0x628] sm:$0xff]
        %v2558 = vld [vmem:[#allocation8 + $0x630] sm:$0xff]
        %v2559 = vld [vmem:[#allocation8 + $0x638] sm:$0xff]
        %v2560 = vld [vmem:[#allocation8 + $0x640] sm:$0xff]
        %v2561 = vld [vmem:[#allocation8 + $0x648] sm:$0xff]
        %v2562 = vld [vmem:[#allocation8 + $0x650] sm:$0xff]
        %v2563 = vld [vmem:[#allocation8 + $0x658] sm:$0xff]
        %v2564 = vld [vmem:[#allocation8 + $0x660] sm:$0xff]
        %v2565 = vld [vmem:[#allocation8 + $0x668] sm:$0xff]
        %v2566 = vld [vmem:[#allocation8 + $0x670] sm:$0xff]
        %v2567 = vld [vmem:[#allocation8 + $0x678] sm:$0xff]
        %v2568 = vld [vmem:[#allocation8 + $0x680] sm:$0xff]
        %v2569 = vld [vmem:[#allocation8 + $0x688] sm:$0xff]
        %v2570 = vld [vmem:[#allocation8 + $0x690] sm:$0xff]
        %v2571 = vld [vmem:[#allocation8 + $0x698] sm:$0xff]
        %v2572 = vld [vmem:[#allocation8 + $0x6a0] sm:$0xff]
        %v2573 = vld [vmem:[#allocation8 + $0x6a8] sm:$0xff]
        %v2574 = vld [vmem:[#allocation8 + $0x6b0] sm:$0xff]
        %v2575 = vld [vmem:[#allocation8 + $0x6b8] sm:$0xff]
        %v2576 = vld [vmem:[#allocation8 + $0x6c0] sm:$0xff]
        %v2577 = vld [vmem:[#allocation8 + $0x6c8] sm:$0xff]
        %v2578 = vld [vmem:[#allocation8 + $0x6d0] sm:$0xff]
        %v2579 = vld [vmem:[#allocation8 + $0x6d8] sm:$0xff]
        %v2580 = vld [vmem:[#allocation8 + $0x6e0] sm:$0xff]
        %v2581 = vld [vmem:[#allocation8 + $0x6e8] sm:$0xff]
        %v2582 = vld [vmem:[#allocation8 + $0x6f0] sm:$0xff]
        %v2583 = vld [vmem:[#allocation8 + $0x6f8] sm:$0xff]
        %v2584 = vld [vmem:[#allocation8 + $0x700] sm:$0xff]
        %v2585 = vld [vmem:[#allocation8 + $0x708] sm:$0xff]
        %v2586 = vld [vmem:[#allocation8 + $0x710] sm:$0xff]
        %v2587 = vld [vmem:[#allocation8 + $0x718] sm:$0xff]
        %v2588 = vld [vmem:[#allocation8 + $0x720] sm:$0xff]
        %v2589 = vld [vmem:[#allocation8 + $0x728] sm:$0xff]
        %v2590 = vld [vmem:[#allocation8 + $0x730] sm:$0xff]
        %v2591 = vld [vmem:[#allocation8 + $0x738] sm:$0xff]
        %v2592 = vld [vmem:[#allocation8 + $0x740] sm:$0xff]
        %v2593 = vld [vmem:[#allocation8 + $0x748] sm:$0xff]
        %v2594 = vld [vmem:[#allocation8 + $0x750] sm:$0xff]
        %v2595 = vld [vmem:[#allocation8 + $0x758] sm:$0xff]
        %v2596 = vld [vmem:[#allocation8 + $0x760] sm:$0xff]
        %v2597 = vld [vmem:[#allocation8 + $0x768] sm:$0xff]
        %v2598 = vld [vmem:[#allocation8 + $0x770] sm:$0xff]
        %v2599 = vld [vmem:[#allocation8 + $0x778] sm:$0xff]
        %v2600 = vld [vmem:[#allocation8 + $0x780] sm:$0xff]
        %v2601 = vld [vmem:[#allocation8 + $0x788] sm:$0xff]
        %v2602 = vld [vmem:[#allocation8 + $0x790] sm:$0xff]
        %v2603 = vld [vmem:[#allocation8 + $0x798] sm:$0xff]
        %v2604 = vld [vmem:[#allocation8 + $0x7a0] sm:$0xff]
        %v2605 = vld [vmem:[#allocation8 + $0x7a8] sm:$0xff]
        %v2606 = vld [vmem:[#allocation8 + $0x7b0] sm:$0xff]
        %v2607 = vld [vmem:[#allocation8 + $0x7b8] sm:$0xff]
        %v2608 = vld [vmem:[#allocation8 + $0x7c0] sm:$0xff]
        %v2609 = vld [vmem:[#allocation8 + $0x7c8] sm:$0xff]
        %v2610 = vld [vmem:[#allocation8 + $0x7d0] sm:$0xff]
        %v2611 = vld [vmem:[#allocation8 + $0x7d8] sm:$0xff]
        %v2612 = vld [vmem:[#allocation8 + $0x7e0] sm:$0xff]
        %v2613 = vld [vmem:[#allocation8 + $0x7e8] sm:$0xff]
        %v2614 = vld [vmem:[#allocation8 + $0x7f0] sm:$0xff]
        %v2615 = vld [vmem:[#allocation8 + $0x7f8] sm:$0xff]
        %v2616 = vld [vmem:[%s11] sm:$0xf]
        %v2873 = vunpack.c.l.b16 %v2360
        %v2874 = vunpack.c.h.b16 %v2360
        %v2875 = vunpack.c.l.b16 %v2361
        %v2876 = vunpack.c.h.b16 %v2361
        %v2877 = vunpack.c.l.b16 %v2362
        %v2878 = vunpack.c.h.b16 %v2362
        %v2879 = vunpack.c.l.b16 %v2363
        %v2880 = vunpack.c.h.b16 %v2363
        %v2881 = vunpack.c.l.b16 %v2364
        %v2882 = vunpack.c.h.b16 %v2364
        %v2883 = vunpack.c.l.b16 %v2365
        %v2884 = vunpack.c.h.b16 %v2365
        %v2885 = vunpack.c.l.b16 %v2366
        %v2886 = vunpack.c.h.b16 %v2366
        %v2887 = vunpack.c.l.b16 %v2367
        %v2888 = vunpack.c.h.b16 %v2367
        %v2889 = vunpack.c.l.b16 %v2368
        %v2890 = vunpack.c.h.b16 %v2368
        %v2891 = vunpack.c.l.b16 %v2369
        %v2892 = vunpack.c.h.b16 %v2369
        %v2893 = vunpack.c.l.b16 %v2370
        %v2894 = vunpack.c.h.b16 %v2370
        %v2895 = vunpack.c.l.b16 %v2371
        %v2896 = vunpack.c.h.b16 %v2371
        %v2897 = vunpack.c.l.b16 %v2372
        %v2898 = vunpack.c.h.b16 %v2372
        %v2899 = vunpack.c.l.b16 %v2373
        %v2900 = vunpack.c.h.b16 %v2373
        %v2901 = vunpack.c.l.b16 %v2374
        %v2902 = vunpack.c.h.b16 %v2374
        %v2903 = vunpack.c.l.b16 %v2375
        %v2904 = vunpack.c.h.b16 %v2375
        %v2905 = vunpack.c.l.b16 %v2376
        %v2906 = vunpack.c.h.b16 %v2376
        %v2907 = vunpack.c.l.b16 %v2377
        %v2908 = vunpack.c.h.b16 %v2377
        %v2909 = vunpack.c.l.b16 %v2378
        %v2910 = vunpack.c.h.b16 %v2378
        %v2911 = vunpack.c.l.b16 %v2379
        %v2912 = vunpack.c.h.b16 %v2379
        %v2913 = vunpack.c.l.b16 %v2380
        %v2914 = vunpack.c.h.b16 %v2380
        %v2915 = vunpack.c.l.b16 %v2381
        %v2916 = vunpack.c.h.b16 %v2381
        %v2917 = vunpack.c.l.b16 %v2382
        %v2918 = vunpack.c.h.b16 %v2382
        %v2919 = vunpack.c.l.b16 %v2383
        %v2920 = vunpack.c.h.b16 %v2383
        %v2921 = vunpack.c.l.b16 %v2384
        %v2922 = vunpack.c.h.b16 %v2384
        %v2923 = vunpack.c.l.b16 %v2385
        %v2924 = vunpack.c.h.b16 %v2385
        %v2925 = vunpack.c.l.b16 %v2386
        %v2926 = vunpack.c.h.b16 %v2386
        %v2927 = vunpack.c.l.b16 %v2387
        %v2928 = vunpack.c.h.b16 %v2387
        %v2929 = vunpack.c.l.b16 %v2388
        %v2930 = vunpack.c.h.b16 %v2388
        %v2931 = vunpack.c.l.b16 %v2389
        %v2932 = vunpack.c.h.b16 %v2389
        %v2933 = vunpack.c.l.b16 %v2390
        %v2934 = vunpack.c.h.b16 %v2390
        %v2935 = vunpack.c.l.b16 %v2391
        %v2936 = vunpack.c.h.b16 %v2391
        %v2937 = vunpack.c.l.b16 %v2392
        %v2938 = vunpack.c.h.b16 %v2392
        %v2939 = vunpack.c.l.b16 %v2393
        %v2940 = vunpack.c.h.b16 %v2393
        %v2941 = vunpack.c.l.b16 %v2394
        %v2942 = vunpack.c.h.b16 %v2394
        %v2943 = vunpack.c.l.b16 %v2395
        %v2944 = vunpack.c.h.b16 %v2395
        %v2945 = vunpack.c.l.b16 %v2396
        %v2946 = vunpack.c.h.b16 %v2396
        %v2947 = vunpack.c.l.b16 %v2397
        %v2948 = vunpack.c.h.b16 %v2397
        %v2949 = vunpack.c.l.b16 %v2398
        %v2950 = vunpack.c.h.b16 %v2398
        %v2951 = vunpack.c.l.b16 %v2399
        %v2952 = vunpack.c.h.b16 %v2399
        %v2953 = vunpack.c.l.b16 %v2400
        %v2954 = vunpack.c.h.b16 %v2400
        %v2955 = vunpack.c.l.b16 %v2401
        %v2956 = vunpack.c.h.b16 %v2401
        %v2957 = vunpack.c.l.b16 %v2402
        %v2958 = vunpack.c.h.b16 %v2402
        %v2959 = vunpack.c.l.b16 %v2403
        %v2960 = vunpack.c.h.b16 %v2403
        %v2961 = vunpack.c.l.b16 %v2404
        %v2962 = vunpack.c.h.b16 %v2404
        %v2963 = vunpack.c.l.b16 %v2405
        %v2964 = vunpack.c.h.b16 %v2405
        %v2965 = vunpack.c.l.b16 %v2406
        %v2966 = vunpack.c.h.b16 %v2406
        %v2967 = vunpack.c.l.b16 %v2407
        %v2968 = vunpack.c.h.b16 %v2407
        %v2969 = vunpack.c.l.b16 %v2408
        %v2970 = vunpack.c.h.b16 %v2408
        %v2971 = vunpack.c.l.b16 %v2409
        %v2972 = vunpack.c.h.b16 %v2409
        %v2973 = vunpack.c.l.b16 %v2410
        %v2974 = vunpack.c.h.b16 %v2410
        %v2975 = vunpack.c.l.b16 %v2411
        %v2976 = vunpack.c.h.b16 %v2411
        %v2977 = vunpack.c.l.b16 %v2412
        %v2978 = vunpack.c.h.b16 %v2412
        %v2979 = vunpack.c.l.b16 %v2413
        %v2980 = vunpack.c.h.b16 %v2413
        %v2981 = vunpack.c.l.b16 %v2414
        %v2982 = vunpack.c.h.b16 %v2414
        %v2983 = vunpack.c.l.b16 %v2415
        %v2984 = vunpack.c.h.b16 %v2415
        %v2985 = vunpack.c.l.b16 %v2416
        %v2986 = vunpack.c.h.b16 %v2416
        %v2987 = vunpack.c.l.b16 %v2417
        %v2988 = vunpack.c.h.b16 %v2417
        %v2989 = vunpack.c.l.b16 %v2418
        %v2990 = vunpack.c.h.b16 %v2418
        %v2991 = vunpack.c.l.b16 %v2419
        %v2992 = vunpack.c.h.b16 %v2419
        %v2993 = vunpack.c.l.b16 %v2420
        %v2994 = vunpack.c.h.b16 %v2420
        %v2995 = vunpack.c.l.b16 %v2421
        %v2996 = vunpack.c.h.b16 %v2421
        %v2997 = vunpack.c.l.b16 %v2422
        %v2998 = vunpack.c.h.b16 %v2422
        %v2999 = vunpack.c.l.b16 %v2423
        %v3000 = vunpack.c.h.b16 %v2423
        %v3001 = vunpack.c.l.b16 %v2424
        %v3002 = vunpack.c.h.b16 %v2424
        %v3003 = vunpack.c.l.b16 %v2425
        %v3004 = vunpack.c.h.b16 %v2425
        %v3005 = vunpack.c.l.b16 %v2426
        %v3006 = vunpack.c.h.b16 %v2426
        %v3007 = vunpack.c.l.b16 %v2427
        %v3008 = vunpack.c.h.b16 %v2427
        %v3009 = vunpack.c.l.b16 %v2428
        %v3010 = vunpack.c.h.b16 %v2428
        %v3011 = vunpack.c.l.b16 %v2429
        %v3012 = vunpack.c.h.b16 %v2429
        %v3013 = vunpack.c.l.b16 %v2430
        %v3014 = vunpack.c.h.b16 %v2430
        %v3015 = vunpack.c.l.b16 %v2431
        %v3016 = vunpack.c.h.b16 %v2431
        %v3017 = vunpack.c.l.b16 %v2432
        %v3018 = vunpack.c.h.b16 %v2432
        %v3019 = vunpack.c.l.b16 %v2433
        %v3020 = vunpack.c.h.b16 %v2433
        %v3021 = vunpack.c.l.b16 %v2434
        %v3022 = vunpack.c.h.b16 %v2434
        %v3023 = vunpack.c.l.b16 %v2435
        %v3024 = vunpack.c.h.b16 %v2435
        %v3025 = vunpack.c.l.b16 %v2436
        %v3026 = vunpack.c.h.b16 %v2436
        %v3027 = vunpack.c.l.b16 %v2437
        %v3028 = vunpack.c.h.b16 %v2437
        %v3029 = vunpack.c.l.b16 %v2438
        %v3030 = vunpack.c.h.b16 %v2438
        %v3031 = vunpack.c.l.b16 %v2439
        %v3032 = vunpack.c.h.b16 %v2439
        %v3033 = vunpack.c.l.b16 %v2440
        %v3034 = vunpack.c.h.b16 %v2440
        %v3035 = vunpack.c.l.b16 %v2441
        %v3036 = vunpack.c.h.b16 %v2441
        %v3037 = vunpack.c.l.b16 %v2442
        %v3038 = vunpack.c.h.b16 %v2442
        %v3039 = vunpack.c.l.b16 %v2443
        %v3040 = vunpack.c.h.b16 %v2443
        %v3041 = vunpack.c.l.b16 %v2444
        %v3042 = vunpack.c.h.b16 %v2444
        %v3043 = vunpack.c.l.b16 %v2445
        %v3044 = vunpack.c.h.b16 %v2445
        %v3045 = vunpack.c.l.b16 %v2446
        %v3046 = vunpack.c.h.b16 %v2446
        %v3047 = vunpack.c.l.b16 %v2447
        %v3048 = vunpack.c.h.b16 %v2447
        %v3049 = vunpack.c.l.b16 %v2448
        %v3050 = vunpack.c.h.b16 %v2448
        %v3051 = vunpack.c.l.b16 %v2449
        %v3052 = vunpack.c.h.b16 %v2449
        %v3053 = vunpack.c.l.b16 %v2450
        %v3054 = vunpack.c.h.b16 %v2450
        %v3055 = vunpack.c.l.b16 %v2451
        %v3056 = vunpack.c.h.b16 %v2451
        %v3057 = vunpack.c.l.b16 %v2452
        %v3058 = vunpack.c.h.b16 %v2452
        %v3059 = vunpack.c.l.b16 %v2453
        %v3060 = vunpack.c.h.b16 %v2453
        %v3061 = vunpack.c.l.b16 %v2454
        %v3062 = vunpack.c.h.b16 %v2454
        %v3063 = vunpack.c.l.b16 %v2455
        %v3064 = vunpack.c.h.b16 %v2455
        %v3065 = vunpack.c.l.b16 %v2456
        %v3066 = vunpack.c.h.b16 %v2456
        %v3067 = vunpack.c.l.b16 %v2457
        %v3068 = vunpack.c.h.b16 %v2457
        %v3069 = vunpack.c.l.b16 %v2458
        %v3070 = vunpack.c.h.b16 %v2458
        %v3071 = vunpack.c.l.b16 %v2459
        %v3072 = vunpack.c.h.b16 %v2459
        %v3073 = vunpack.c.l.b16 %v2460
        %v3074 = vunpack.c.h.b16 %v2460
        %v3075 = vunpack.c.l.b16 %v2461
        %v3076 = vunpack.c.h.b16 %v2461
        %v3077 = vunpack.c.l.b16 %v2462
        %v3078 = vunpack.c.h.b16 %v2462
        %v3079 = vunpack.c.l.b16 %v2463
        %v3080 = vunpack.c.h.b16 %v2463
        %v3081 = vunpack.c.l.b16 %v2464
        %v3082 = vunpack.c.h.b16 %v2464
        %v3083 = vunpack.c.l.b16 %v2465
        %v3084 = vunpack.c.h.b16 %v2465
        %v3085 = vunpack.c.l.b16 %v2466
        %v3086 = vunpack.c.h.b16 %v2466
        %v3087 = vunpack.c.l.b16 %v2467
        %v3088 = vunpack.c.h.b16 %v2467
        %v3089 = vunpack.c.l.b16 %v2468
        %v3090 = vunpack.c.h.b16 %v2468
        %v3091 = vunpack.c.l.b16 %v2469
        %v3092 = vunpack.c.h.b16 %v2469
        %v3093 = vunpack.c.l.b16 %v2470
        %v3094 = vunpack.c.h.b16 %v2470
        %v3095 = vunpack.c.l.b16 %v2471
        %v3096 = vunpack.c.h.b16 %v2471
        %v3097 = vunpack.c.l.b16 %v2472
        %v3098 = vunpack.c.h.b16 %v2472
        %v3099 = vunpack.c.l.b16 %v2473
        %v3100 = vunpack.c.h.b16 %v2473
        %v3101 = vunpack.c.l.b16 %v2474
        %v3102 = vunpack.c.h.b16 %v2474
        %v3103 = vunpack.c.l.b16 %v2475
        %v3104 = vunpack.c.h.b16 %v2475
        %v3105 = vunpack.c.l.b16 %v2476
        %v3106 = vunpack.c.h.b16 %v2476
        %v3107 = vunpack.c.l.b16 %v2477
        %v3108 = vunpack.c.h.b16 %v2477
        %v3109 = vunpack.c.l.b16 %v2478
        %v3110 = vunpack.c.h.b16 %v2478
        %v3111 = vunpack.c.l.b16 %v2479
        %v3112 = vunpack.c.h.b16 %v2479
        %v3113 = vunpack.c.l.b16 %v2480
        %v3114 = vunpack.c.h.b16 %v2480
        %v3115 = vunpack.c.l.b16 %v2481
        %v3116 = vunpack.c.h.b16 %v2481
        %v3117 = vunpack.c.l.b16 %v2482
        %v3118 = vunpack.c.h.b16 %v2482
        %v3119 = vunpack.c.l.b16 %v2483
        %v3120 = vunpack.c.h.b16 %v2483
        %v3121 = vunpack.c.l.b16 %v2484
        %v3122 = vunpack.c.h.b16 %v2484
        %v3123 = vunpack.c.l.b16 %v2485
        %v3124 = vunpack.c.h.b16 %v2485
        %v3125 = vunpack.c.l.b16 %v2486
        %v3126 = vunpack.c.h.b16 %v2486
        %v3127 = vunpack.c.l.b16 %v2487
        %v3128 = vunpack.c.h.b16 %v2487
        %v3129 = vunpack.c.l.b16 %v2488
        %v3130 = vunpack.c.h.b16 %v2488
        %v3131 = vunpack.c.l.b16 %v2489
        %v3132 = vunpack.c.h.b16 %v2489
        %v3133 = vunpack.c.l.b16 %v2490
        %v3134 = vunpack.c.h.b16 %v2490
        %v3135 = vunpack.c.l.b16 %v2491
        %v3136 = vunpack.c.h.b16 %v2491
        %v3137 = vunpack.c.l.b16 %v2492
        %v3138 = vunpack.c.h.b16 %v2492
        %v3139 = vunpack.c.l.b16 %v2493
        %v3140 = vunpack.c.h.b16 %v2493
        %v3141 = vunpack.c.l.b16 %v2494
        %v3142 = vunpack.c.h.b16 %v2494
        %v3143 = vunpack.c.l.b16 %v2495
        %v3144 = vunpack.c.h.b16 %v2495
        %v3145 = vunpack.c.l.b16 %v2496
        %v3146 = vunpack.c.h.b16 %v2496
        %v3147 = vunpack.c.l.b16 %v2497
        %v3148 = vunpack.c.h.b16 %v2497
        %v3149 = vunpack.c.l.b16 %v2498
        %v3150 = vunpack.c.h.b16 %v2498
        %v3151 = vunpack.c.l.b16 %v2499
        %v3152 = vunpack.c.h.b16 %v2499
        %v3153 = vunpack.c.l.b16 %v2500
        %v3154 = vunpack.c.h.b16 %v2500
        %v3155 = vunpack.c.l.b16 %v2501
        %v3156 = vunpack.c.h.b16 %v2501
        %v3157 = vunpack.c.l.b16 %v2502
        %v3158 = vunpack.c.h.b16 %v2502
        %v3159 = vunpack.c.l.b16 %v2503
        %v3160 = vunpack.c.h.b16 %v2503
        %v3161 = vunpack.c.l.b16 %v2504
        %v3162 = vunpack.c.h.b16 %v2504
        %v3163 = vunpack.c.l.b16 %v2505
        %v3164 = vunpack.c.h.b16 %v2505
        %v3165 = vunpack.c.l.b16 %v2506
        %v3166 = vunpack.c.h.b16 %v2506
        %v3167 = vunpack.c.l.b16 %v2507
        %v3168 = vunpack.c.h.b16 %v2507
        %v3169 = vunpack.c.l.b16 %v2508
        %v3170 = vunpack.c.h.b16 %v2508
        %v3171 = vunpack.c.l.b16 %v2509
        %v3172 = vunpack.c.h.b16 %v2509
        %v3173 = vunpack.c.l.b16 %v2510
        %v3174 = vunpack.c.h.b16 %v2510
        %v3175 = vunpack.c.l.b16 %v2511
        %v3176 = vunpack.c.h.b16 %v2511
        %v3177 = vunpack.c.l.b16 %v2512
        %v3178 = vunpack.c.h.b16 %v2512
        %v3179 = vunpack.c.l.b16 %v2513
        %v3180 = vunpack.c.h.b16 %v2513
        %v3181 = vunpack.c.l.b16 %v2514
        %v3182 = vunpack.c.h.b16 %v2514
        %v3183 = vunpack.c.l.b16 %v2515
        %v3184 = vunpack.c.h.b16 %v2515
        %v3185 = vunpack.c.l.b16 %v2516
        %v3186 = vunpack.c.h.b16 %v2516
        %v3187 = vunpack.c.l.b16 %v2517
        %v3188 = vunpack.c.h.b16 %v2517
        %v3189 = vunpack.c.l.b16 %v2518
        %v3190 = vunpack.c.h.b16 %v2518
        %v3191 = vunpack.c.l.b16 %v2519
        %v3192 = vunpack.c.h.b16 %v2519
        %v3193 = vunpack.c.l.b16 %v2520
        %v3194 = vunpack.c.h.b16 %v2520
        %v3195 = vunpack.c.l.b16 %v2521
        %v3196 = vunpack.c.h.b16 %v2521
        %v3197 = vunpack.c.l.b16 %v2522
        %v3198 = vunpack.c.h.b16 %v2522
        %v3199 = vunpack.c.l.b16 %v2523
        %v3200 = vunpack.c.h.b16 %v2523
        %v3201 = vunpack.c.l.b16 %v2524
        %v3202 = vunpack.c.h.b16 %v2524
        %v3203 = vunpack.c.l.b16 %v2525
        %v3204 = vunpack.c.h.b16 %v2525
        %v3205 = vunpack.c.l.b16 %v2526
        %v3206 = vunpack.c.h.b16 %v2526
        %v3207 = vunpack.c.l.b16 %v2527
        %v3208 = vunpack.c.h.b16 %v2527
        %v3209 = vunpack.c.l.b16 %v2528
        %v3210 = vunpack.c.h.b16 %v2528
        %v3211 = vunpack.c.l.b16 %v2529
        %v3212 = vunpack.c.h.b16 %v2529
        %v3213 = vunpack.c.l.b16 %v2530
        %v3214 = vunpack.c.h.b16 %v2530
        %v3215 = vunpack.c.l.b16 %v2531
        %v3216 = vunpack.c.h.b16 %v2531
        %v3217 = vunpack.c.l.b16 %v2532
        %v3218 = vunpack.c.h.b16 %v2532
        %v3219 = vunpack.c.l.b16 %v2533
        %v3220 = vunpack.c.h.b16 %v2533
        %v3221 = vunpack.c.l.b16 %v2534
        %v3222 = vunpack.c.h.b16 %v2534
        %v3223 = vunpack.c.l.b16 %v2535
        %v3224 = vunpack.c.h.b16 %v2535
        %v3225 = vunpack.c.l.b16 %v2536
        %v3226 = vunpack.c.h.b16 %v2536
        %v3227 = vunpack.c.l.b16 %v2537
        %v3228 = vunpack.c.h.b16 %v2537
        %v3229 = vunpack.c.l.b16 %v2538
        %v3230 = vunpack.c.h.b16 %v2538
        %v3231 = vunpack.c.l.b16 %v2539
        %v3232 = vunpack.c.h.b16 %v2539
        %v3233 = vunpack.c.l.b16 %v2540
        %v3234 = vunpack.c.h.b16 %v2540
        %v3235 = vunpack.c.l.b16 %v2541
        %v3236 = vunpack.c.h.b16 %v2541
        %v3237 = vunpack.c.l.b16 %v2542
        %v3238 = vunpack.c.h.b16 %v2542
        %v3239 = vunpack.c.l.b16 %v2543
        %v3240 = vunpack.c.h.b16 %v2543
        %v3241 = vunpack.c.l.b16 %v2544
        %v3242 = vunpack.c.h.b16 %v2544
        %v3243 = vunpack.c.l.b16 %v2545
        %v3244 = vunpack.c.h.b16 %v2545
        %v3245 = vunpack.c.l.b16 %v2546
        %v3246 = vunpack.c.h.b16 %v2546
        %v3247 = vunpack.c.l.b16 %v2547
        %v3248 = vunpack.c.h.b16 %v2547
        %v3249 = vunpack.c.l.b16 %v2548
        %v3250 = vunpack.c.h.b16 %v2548
        %v3251 = vunpack.c.l.b16 %v2549
        %v3252 = vunpack.c.h.b16 %v2549
        %v3253 = vunpack.c.l.b16 %v2550
        %v3254 = vunpack.c.h.b16 %v2550
        %v3255 = vunpack.c.l.b16 %v2551
        %v3256 = vunpack.c.h.b16 %v2551
        %v3257 = vunpack.c.l.b16 %v2552
        %v3258 = vunpack.c.h.b16 %v2552
        %v3259 = vunpack.c.l.b16 %v2553
        %v3260 = vunpack.c.h.b16 %v2553
        %v3261 = vunpack.c.l.b16 %v2554
        %v3262 = vunpack.c.h.b16 %v2554
        %v3263 = vunpack.c.l.b16 %v2555
        %v3264 = vunpack.c.h.b16 %v2555
        %v3265 = vunpack.c.l.b16 %v2556
        %v3266 = vunpack.c.h.b16 %v2556
        %v3267 = vunpack.c.l.b16 %v2557
        %v3268 = vunpack.c.h.b16 %v2557
        %v3269 = vunpack.c.l.b16 %v2558
        %v3270 = vunpack.c.h.b16 %v2558
        %v3271 = vunpack.c.l.b16 %v2559
        %v3272 = vunpack.c.h.b16 %v2559
        %v3273 = vunpack.c.l.b16 %v2560
        %v3274 = vunpack.c.h.b16 %v2560
        %v3275 = vunpack.c.l.b16 %v2561
        %v3276 = vunpack.c.h.b16 %v2561
        %v3277 = vunpack.c.l.b16 %v2562
        %v3278 = vunpack.c.h.b16 %v2562
        %v3279 = vunpack.c.l.b16 %v2563
        %v3280 = vunpack.c.h.b16 %v2563
        %v3281 = vunpack.c.l.b16 %v2564
        %v3282 = vunpack.c.h.b16 %v2564
        %v3283 = vunpack.c.l.b16 %v2565
        %v3284 = vunpack.c.h.b16 %v2565
        %v3285 = vunpack.c.l.b16 %v2566
        %v3286 = vunpack.c.h.b16 %v2566
        %v3287 = vunpack.c.l.b16 %v2567
        %v3288 = vunpack.c.h.b16 %v2567
        %v3289 = vunpack.c.l.b16 %v2568
        %v3290 = vunpack.c.h.b16 %v2568
        %v3291 = vunpack.c.l.b16 %v2569
        %v3292 = vunpack.c.h.b16 %v2569
        %v3293 = vunpack.c.l.b16 %v2570
        %v3294 = vunpack.c.h.b16 %v2570
        %v3295 = vunpack.c.l.b16 %v2571
        %v3296 = vunpack.c.h.b16 %v2571
        %v3297 = vunpack.c.l.b16 %v2572
        %v3298 = vunpack.c.h.b16 %v2572
        %v3299 = vunpack.c.l.b16 %v2573
        %v3300 = vunpack.c.h.b16 %v2573
        %v3301 = vunpack.c.l.b16 %v2574
        %v3302 = vunpack.c.h.b16 %v2574
        %v3303 = vunpack.c.l.b16 %v2575
        %v3304 = vunpack.c.h.b16 %v2575
        %v3305 = vunpack.c.l.b16 %v2576
        %v3306 = vunpack.c.h.b16 %v2576
        %v3307 = vunpack.c.l.b16 %v2577
        %v3308 = vunpack.c.h.b16 %v2577
        %v3309 = vunpack.c.l.b16 %v2578
        %v3310 = vunpack.c.h.b16 %v2578
        %v3311 = vunpack.c.l.b16 %v2579
        %v3312 = vunpack.c.h.b16 %v2579
        %v3313 = vunpack.c.l.b16 %v2580
        %v3314 = vunpack.c.h.b16 %v2580
        %v3315 = vunpack.c.l.b16 %v2581
        %v3316 = vunpack.c.h.b16 %v2581
        %v3317 = vunpack.c.l.b16 %v2582
        %v3318 = vunpack.c.h.b16 %v2582
        %v3319 = vunpack.c.l.b16 %v2583
        %v3320 = vunpack.c.h.b16 %v2583
        %v3321 = vunpack.c.l.b16 %v2584
        %v3322 = vunpack.c.h.b16 %v2584
        %v3323 = vunpack.c.l.b16 %v2585
        %v3324 = vunpack.c.h.b16 %v2585
        %v3325 = vunpack.c.l.b16 %v2586
        %v3326 = vunpack.c.h.b16 %v2586
        %v3327 = vunpack.c.l.b16 %v2587
        %v3328 = vunpack.c.h.b16 %v2587
        %v3329 = vunpack.c.l.b16 %v2588
        %v3330 = vunpack.c.h.b16 %v2588
        %v3331 = vunpack.c.l.b16 %v2589
        %v3332 = vunpack.c.h.b16 %v2589
        %v3333 = vunpack.c.l.b16 %v2590
        %v3334 = vunpack.c.h.b16 %v2590
        %v3335 = vunpack.c.l.b16 %v2591
        %v3336 = vunpack.c.h.b16 %v2591
        %v3337 = vunpack.c.l.b16 %v2592
        %v3338 = vunpack.c.h.b16 %v2592
        %v3339 = vunpack.c.l.b16 %v2593
        %v3340 = vunpack.c.h.b16 %v2593
        %v3341 = vunpack.c.l.b16 %v2594
        %v3342 = vunpack.c.h.b16 %v2594
        %v3343 = vunpack.c.l.b16 %v2595
        %v3344 = vunpack.c.h.b16 %v2595
        %v3345 = vunpack.c.l.b16 %v2596
        %v3346 = vunpack.c.h.b16 %v2596
        %v3347 = vunpack.c.l.b16 %v2597
        %v3348 = vunpack.c.h.b16 %v2597
        %v3349 = vunpack.c.l.b16 %v2598
        %v3350 = vunpack.c.h.b16 %v2598
        %v3351 = vunpack.c.l.b16 %v2599
        %v3352 = vunpack.c.h.b16 %v2599
        %v3353 = vunpack.c.l.b16 %v2600
        %v3354 = vunpack.c.h.b16 %v2600
        %v3355 = vunpack.c.l.b16 %v2601
        %v3356 = vunpack.c.h.b16 %v2601
        %v3357 = vunpack.c.l.b16 %v2602
        %v3358 = vunpack.c.h.b16 %v2602
        %v3359 = vunpack.c.l.b16 %v2603
        %v3360 = vunpack.c.h.b16 %v2603
        %v3361 = vunpack.c.l.b16 %v2604
        %v3362 = vunpack.c.h.b16 %v2604
        %v3363 = vunpack.c.l.b16 %v2605
        %v3364 = vunpack.c.h.b16 %v2605
        %v3365 = vunpack.c.l.b16 %v2606
        %v3366 = vunpack.c.h.b16 %v2606
        %v3367 = vunpack.c.l.b16 %v2607
        %v3368 = vunpack.c.h.b16 %v2607
        %v3369 = vunpack.c.l.b16 %v2608
        %v3370 = vunpack.c.h.b16 %v2608
        %v3371 = vunpack.c.l.b16 %v2609
        %v3372 = vunpack.c.h.b16 %v2609
        %v3373 = vunpack.c.l.b16 %v2610
        %v3374 = vunpack.c.h.b16 %v2610
        %v3375 = vunpack.c.l.b16 %v2611
        %v3376 = vunpack.c.h.b16 %v2611
        %v3377 = vunpack.c.l.b16 %v2612
        %v3378 = vunpack.c.h.b16 %v2612
        %v3379 = vunpack.c.l.b16 %v2613
        %v3380 = vunpack.c.h.b16 %v2613
        %v3381 = vunpack.c.l.b16 %v2614
        %v3382 = vunpack.c.h.b16 %v2614
        %v3383 = vunpack.c.l.b16 %v2615
        %v3384 = vunpack.c.h.b16 %v2615
        %v3385 = vpack.c.b16 %v2877, %v2873
        %v3386 = vpack.c.b16 %v2878, %v2874
        %v3387 = vpack.c.b16 %v2879, %v2875
        %v3388 = vpack.c.b16 %v2880, %v2876
        %v3389 = vpack.c.b16 %v2885, %v2881
        %v3390 = vpack.c.b16 %v2886, %v2882
        %v3391 = vpack.c.b16 %v2887, %v2883
        %v3392 = vpack.c.b16 %v2888, %v2884
        %v3393 = vpack.c.b16 %v2893, %v2889
        %v3394 = vpack.c.b16 %v2894, %v2890
        %v3395 = vpack.c.b16 %v2895, %v2891
        %v3396 = vpack.c.b16 %v2896, %v2892
        %v3397 = vpack.c.b16 %v2901, %v2897
        %v3398 = vpack.c.b16 %v2902, %v2898
        %v3399 = vpack.c.b16 %v2903, %v2899
        %v3400 = vpack.c.b16 %v2904, %v2900
        %v3401 = vpack.c.b16 %v2909, %v2905
        %v3402 = vpack.c.b16 %v2910, %v2906
        %v3403 = vpack.c.b16 %v2911, %v2907
        %v3404 = vpack.c.b16 %v2912, %v2908
        %v3405 = vpack.c.b16 %v2917, %v2913
        %v3406 = vpack.c.b16 %v2918, %v2914
        %v3407 = vpack.c.b16 %v2919, %v2915
        %v3408 = vpack.c.b16 %v2920, %v2916
        %v3409 = vpack.c.b16 %v2925, %v2921
        %v3410 = vpack.c.b16 %v2926, %v2922
        %v3411 = vpack.c.b16 %v2927, %v2923
        %v3412 = vpack.c.b16 %v2928, %v2924
        %v3413 = vpack.c.b16 %v2933, %v2929
        %v3414 = vpack.c.b16 %v2934, %v2930
        %v3415 = vpack.c.b16 %v2935, %v2931
        %v3416 = vpack.c.b16 %v2936, %v2932
        %v3417 = vpack.c.b16 %v2941, %v2937
        %v3418 = vpack.c.b16 %v2942, %v2938
        %v3419 = vpack.c.b16 %v2943, %v2939
        %v3420 = vpack.c.b16 %v2944, %v2940
        %v3421 = vpack.c.b16 %v2949, %v2945
        %v3422 = vpack.c.b16 %v2950, %v2946
        %v3423 = vpack.c.b16 %v2951, %v2947
        %v3424 = vpack.c.b16 %v2952, %v2948
        %v3425 = vpack.c.b16 %v2957, %v2953
        %v3426 = vpack.c.b16 %v2958, %v2954
        %v3427 = vpack.c.b16 %v2959, %v2955
        %v3428 = vpack.c.b16 %v2960, %v2956
        %v3429 = vpack.c.b16 %v2965, %v2961
        %v3430 = vpack.c.b16 %v2966, %v2962
        %v3431 = vpack.c.b16 %v2967, %v2963
        %v3432 = vpack.c.b16 %v2968, %v2964
        %v3433 = vpack.c.b16 %v2973, %v2969
        %v3434 = vpack.c.b16 %v2974, %v2970
        %v3435 = vpack.c.b16 %v2975, %v2971
        %v3436 = vpack.c.b16 %v2976, %v2972
        %v3437 = vpack.c.b16 %v2981, %v2977
        %v3438 = vpack.c.b16 %v2982, %v2978
        %v3439 = vpack.c.b16 %v2983, %v2979
        %v3440 = vpack.c.b16 %v2984, %v2980
        %v3441 = vpack.c.b16 %v2989, %v2985
        %v3442 = vpack.c.b16 %v2990, %v2986
        %v3443 = vpack.c.b16 %v2991, %v2987
        %v3444 = vpack.c.b16 %v2992, %v2988
        %v3445 = vpack.c.b16 %v2997, %v2993
        %v3446 = vpack.c.b16 %v2998, %v2994
        %v3447 = vpack.c.b16 %v2999, %v2995
        %v3448 = vpack.c.b16 %v3000, %v2996
        %v3449 = vpack.c.b16 %v3005, %v3001
        %v3450 = vpack.c.b16 %v3006, %v3002
        %v3451 = vpack.c.b16 %v3007, %v3003
        %v3452 = vpack.c.b16 %v3008, %v3004
        %v3453 = vpack.c.b16 %v3013, %v3009
        %v3454 = vpack.c.b16 %v3014, %v3010
        %v3455 = vpack.c.b16 %v3015, %v3011
        %v3456 = vpack.c.b16 %v3016, %v3012
        %v3457 = vpack.c.b16 %v3021, %v3017
        %v3458 = vpack.c.b16 %v3022, %v3018
        %v3459 = vpack.c.b16 %v3023, %v3019
        %v3460 = vpack.c.b16 %v3024, %v3020
        %v3461 = vpack.c.b16 %v3029, %v3025
        %v3462 = vpack.c.b16 %v3030, %v3026
        %v3463 = vpack.c.b16 %v3031, %v3027
        %v3464 = vpack.c.b16 %v3032, %v3028
        %v3465 = vpack.c.b16 %v3037, %v3033
        %v3466 = vpack.c.b16 %v3038, %v3034
        %v3467 = vpack.c.b16 %v3039, %v3035
        %v3468 = vpack.c.b16 %v3040, %v3036
        %v3469 = vpack.c.b16 %v3045, %v3041
        %v3470 = vpack.c.b16 %v3046, %v3042
        %v3471 = vpack.c.b16 %v3047, %v3043
        %v3472 = vpack.c.b16 %v3048, %v3044
        %v3473 = vpack.c.b16 %v3053, %v3049
        %v3474 = vpack.c.b16 %v3054, %v3050
        %v3475 = vpack.c.b16 %v3055, %v3051
        %v3476 = vpack.c.b16 %v3056, %v3052
        %v3477 = vpack.c.b16 %v3061, %v3057
        %v3478 = vpack.c.b16 %v3062, %v3058
        %v3479 = vpack.c.b16 %v3063, %v3059
        %v3480 = vpack.c.b16 %v3064, %v3060
        %v3481 = vpack.c.b16 %v3069, %v3065
        %v3482 = vpack.c.b16 %v3070, %v3066
        %v3483 = vpack.c.b16 %v3071, %v3067
        %v3484 = vpack.c.b16 %v3072, %v3068
        %v3485 = vpack.c.b16 %v3077, %v3073
        %v3486 = vpack.c.b16 %v3078, %v3074
        %v3487 = vpack.c.b16 %v3079, %v3075
        %v3488 = vpack.c.b16 %v3080, %v3076
        %v3489 = vpack.c.b16 %v3085, %v3081
        %v3490 = vpack.c.b16 %v3086, %v3082
        %v3491 = vpack.c.b16 %v3087, %v3083
        %v3492 = vpack.c.b16 %v3088, %v3084
        %v3493 = vpack.c.b16 %v3093, %v3089
        %v3494 = vpack.c.b16 %v3094, %v3090
        %v3495 = vpack.c.b16 %v3095, %v3091
        %v3496 = vpack.c.b16 %v3096, %v3092
        %v3497 = vpack.c.b16 %v3101, %v3097
        %v3498 = vpack.c.b16 %v3102, %v3098
        %v3499 = vpack.c.b16 %v3103, %v3099
        %v3500 = vpack.c.b16 %v3104, %v3100
        %v3501 = vpack.c.b16 %v3109, %v3105
        %v3502 = vpack.c.b16 %v3110, %v3106
        %v3503 = vpack.c.b16 %v3111, %v3107
        %v3504 = vpack.c.b16 %v3112, %v3108
        %v3505 = vpack.c.b16 %v3117, %v3113
        %v3506 = vpack.c.b16 %v3118, %v3114
        %v3507 = vpack.c.b16 %v3119, %v3115
        %v3508 = vpack.c.b16 %v3120, %v3116
        %v3509 = vpack.c.b16 %v3125, %v3121
        %v3510 = vpack.c.b16 %v3126, %v3122
        %v3511 = vpack.c.b16 %v3127, %v3123
        %v3512 = vpack.c.b16 %v3128, %v3124
        %v3513 = vpack.c.b16 %v3133, %v3129
        %v3514 = vpack.c.b16 %v3134, %v3130
        %v3515 = vpack.c.b16 %v3135, %v3131
        %v3516 = vpack.c.b16 %v3136, %v3132
        %v3517 = vpack.c.b16 %v3141, %v3137
        %v3518 = vpack.c.b16 %v3142, %v3138
        %v3519 = vpack.c.b16 %v3143, %v3139
        %v3520 = vpack.c.b16 %v3144, %v3140
        %v3521 = vpack.c.b16 %v3149, %v3145
        %v3522 = vpack.c.b16 %v3150, %v3146
        %v3523 = vpack.c.b16 %v3151, %v3147
        %v3524 = vpack.c.b16 %v3152, %v3148
        %v3525 = vpack.c.b16 %v3157, %v3153
        %v3526 = vpack.c.b16 %v3158, %v3154
        %v3527 = vpack.c.b16 %v3159, %v3155
        %v3528 = vpack.c.b16 %v3160, %v3156
        %v3529 = vpack.c.b16 %v3165, %v3161
        %v3530 = vpack.c.b16 %v3166, %v3162
        %v3531 = vpack.c.b16 %v3167, %v3163
        %v3532 = vpack.c.b16 %v3168, %v3164
        %v3533 = vpack.c.b16 %v3173, %v3169
        %v3534 = vpack.c.b16 %v3174, %v3170
        %v3535 = vpack.c.b16 %v3175, %v3171
        %v3536 = vpack.c.b16 %v3176, %v3172
        %v3537 = vpack.c.b16 %v3181, %v3177
        %v3538 = vpack.c.b16 %v3182, %v3178
        %v3539 = vpack.c.b16 %v3183, %v3179
        %v3540 = vpack.c.b16 %v3184, %v3180
        %v3541 = vpack.c.b16 %v3189, %v3185
        %v3542 = vpack.c.b16 %v3190, %v3186
        %v3543 = vpack.c.b16 %v3191, %v3187
        %v3544 = vpack.c.b16 %v3192, %v3188
        %v3545 = vpack.c.b16 %v3197, %v3193
        %v3546 = vpack.c.b16 %v3198, %v3194
        %v3547 = vpack.c.b16 %v3199, %v3195
        %v3548 = vpack.c.b16 %v3200, %v3196
        %v3549 = vpack.c.b16 %v3205, %v3201
        %v3550 = vpack.c.b16 %v3206, %v3202
        %v3551 = vpack.c.b16 %v3207, %v3203
        %v3552 = vpack.c.b16 %v3208, %v3204
        %v3553 = vpack.c.b16 %v3213, %v3209
        %v3554 = vpack.c.b16 %v3214, %v3210
        %v3555 = vpack.c.b16 %v3215, %v3211
        %v3556 = vpack.c.b16 %v3216, %v3212
        %v3557 = vpack.c.b16 %v3221, %v3217
        %v3558 = vpack.c.b16 %v3222, %v3218
        %v3559 = vpack.c.b16 %v3223, %v3219
        %v3560 = vpack.c.b16 %v3224, %v3220
        %v3561 = vpack.c.b16 %v3229, %v3225
        %v3562 = vpack.c.b16 %v3230, %v3226
        %v3563 = vpack.c.b16 %v3231, %v3227
        %v3564 = vpack.c.b16 %v3232, %v3228
        %v3565 = vpack.c.b16 %v3237, %v3233
        %v3566 = vpack.c.b16 %v3238, %v3234
        %v3567 = vpack.c.b16 %v3239, %v3235
        %v3568 = vpack.c.b16 %v3240, %v3236
        %v3569 = vpack.c.b16 %v3245, %v3241
        %v3570 = vpack.c.b16 %v3246, %v3242
        %v3571 = vpack.c.b16 %v3247, %v3243
        %v3572 = vpack.c.b16 %v3248, %v3244
        %v3573 = vpack.c.b16 %v3253, %v3249
        %v3574 = vpack.c.b16 %v3254, %v3250
        %v3575 = vpack.c.b16 %v3255, %v3251
        %v3576 = vpack.c.b16 %v3256, %v3252
        %v3577 = vpack.c.b16 %v3261, %v3257
        %v3578 = vpack.c.b16 %v3262, %v3258
        %v3579 = vpack.c.b16 %v3263, %v3259
        %v3580 = vpack.c.b16 %v3264, %v3260
        %v3581 = vpack.c.b16 %v3269, %v3265
        %v3582 = vpack.c.b16 %v3270, %v3266
        %v3583 = vpack.c.b16 %v3271, %v3267
        %v3584 = vpack.c.b16 %v3272, %v3268
        %v3585 = vpack.c.b16 %v3277, %v3273
        %v3586 = vpack.c.b16 %v3278, %v3274
        %v3587 = vpack.c.b16 %v3279, %v3275
        %v3588 = vpack.c.b16 %v3280, %v3276
        %v3589 = vpack.c.b16 %v3285, %v3281
        %v3590 = vpack.c.b16 %v3286, %v3282
        %v3591 = vpack.c.b16 %v3287, %v3283
        %v3592 = vpack.c.b16 %v3288, %v3284
        %v3593 = vpack.c.b16 %v3293, %v3289
        %v3594 = vpack.c.b16 %v3294, %v3290
        %v3595 = vpack.c.b16 %v3295, %v3291
        %v3596 = vpack.c.b16 %v3296, %v3292
        %v3597 = vpack.c.b16 %v3301, %v3297
        %v3598 = vpack.c.b16 %v3302, %v3298
        %v3599 = vpack.c.b16 %v3303, %v3299
        %v3600 = vpack.c.b16 %v3304, %v3300
        %v3601 = vpack.c.b16 %v3309, %v3305
        %v3602 = vpack.c.b16 %v3310, %v3306
        %v3603 = vpack.c.b16 %v3311, %v3307
        %v3604 = vpack.c.b16 %v3312, %v3308
        %v3605 = vpack.c.b16 %v3317, %v3313
        %v3606 = vpack.c.b16 %v3318, %v3314
        %v3607 = vpack.c.b16 %v3319, %v3315
        %v3608 = vpack.c.b16 %v3320, %v3316
        %v3609 = vpack.c.b16 %v3325, %v3321
        %v3610 = vpack.c.b16 %v3326, %v3322
        %v3611 = vpack.c.b16 %v3327, %v3323
        %v3612 = vpack.c.b16 %v3328, %v3324
        %v3613 = vpack.c.b16 %v3333, %v3329
        %v3614 = vpack.c.b16 %v3334, %v3330
        %v3615 = vpack.c.b16 %v3335, %v3331
        %v3616 = vpack.c.b16 %v3336, %v3332
        %v3617 = vpack.c.b16 %v3341, %v3337
        %v3618 = vpack.c.b16 %v3342, %v3338
        %v3619 = vpack.c.b16 %v3343, %v3339
        %v3620 = vpack.c.b16 %v3344, %v3340
        %v3621 = vpack.c.b16 %v3349, %v3345
        %v3622 = vpack.c.b16 %v3350, %v3346
        %v3623 = vpack.c.b16 %v3351, %v3347
        %v3624 = vpack.c.b16 %v3352, %v3348
        %v3625 = vpack.c.b16 %v3357, %v3353
        %v3626 = vpack.c.b16 %v3358, %v3354
        %v3627 = vpack.c.b16 %v3359, %v3355
        %v3628 = vpack.c.b16 %v3360, %v3356
        %v3629 = vpack.c.b16 %v3365, %v3361
        %v3630 = vpack.c.b16 %v3366, %v3362
        %v3631 = vpack.c.b16 %v3367, %v3363
        %v3632 = vpack.c.b16 %v3368, %v3364
        %v3633 = vpack.c.b16 %v3373, %v3369
        %v3634 = vpack.c.b16 %v3374, %v3370
        %v3635 = vpack.c.b16 %v3375, %v3371
        %v3636 = vpack.c.b16 %v3376, %v3372
        %v3637 = vpack.c.b16 %v3381, %v3377
        %v3638 = vpack.c.b16 %v3382, %v3378
        %v3639 = vpack.c.b16 %v3383, %v3379
        %v3640 = vpack.c.b16 %v3384, %v3380
        %v3898 = vlaneseq
        %v3899 = vshrl.u32 %v3898, 7
        %v3900 = vsub.s32 0, %v3899
        %v3901 = vrot.slane %v2616, %v3900
        %v3902 = vlaneseq
        %v3903 = vshrl.u32 %v3902, 7
        %v3904 = vsub.s32 1, %v3903
        %v3905 = vrot.slane %v2616, %v3904
        %v3906 = vlaneseq
        %v3907 = vshrl.u32 %v3906, 7
        %v3908 = vsub.s32 2, %v3907
        %v3909 = vrot.slane %v2616, %v3908
        %v3910 = vlaneseq
        %v3911 = vshrl.u32 %v3910, 7
        %v3912 = vsub.s32 3, %v3911
        %v3913 = vrot.slane %v2616, %v3912
        %3918 = vmatprep.subr.bf16.mxu0 %v3386
        %3919 = vmatpush1.bf16.msra.mxu0 %v3385
        %3920 = vmatprep.subr.bf16.mxu0 %v3390
        %3921 = vmatpush1.bf16.msra.mxu0 %v3389
        %3922 = vmatprep.subr.bf16.mxu0 %v3394
        %3923 = vmatpush1.bf16.msra.mxu0 %v3393
        %3924 = vmatprep.subr.bf16.mxu0 %v3398
        %3925 = vmatpush1.bf16.msra.mxu0 %v3397
        %3926 = vmatprep.subr.bf16.mxu0 %v3402
        %3927 = vmatpush1.bf16.msra.mxu0 %v3401
        %3928 = vmatprep.subr.bf16.mxu0 %v3406
        %3929 = vmatpush1.bf16.msra.mxu0 %v3405
        %3930 = vmatprep.subr.bf16.mxu0 %v3410
        %3931 = vmatpush1.bf16.msra.mxu0 %v3409
        %3932 = vmatprep.subr.bf16.mxu0 %v3414
        %3933 = vmatpush1.bf16.msra.mxu0 %v3413
        %3934 = vmatprep.subr.bf16.mxu0 %v3418
        %3935 = vmatpush1.bf16.msra.mxu0 %v3417
        %3936 = vmatprep.subr.bf16.mxu0 %v3422
        %3937 = vmatpush1.bf16.msra.mxu0 %v3421
        %3938 = vmatprep.subr.bf16.mxu0 %v3426
        %3939 = vmatpush1.bf16.msra.mxu0 %v3425
        %3940 = vmatprep.subr.bf16.mxu0 %v3430
        %3941 = vmatpush1.bf16.msra.mxu0 %v3429
        %3942 = vmatprep.subr.bf16.mxu0 %v3434
        %3943 = vmatpush1.bf16.msra.mxu0 %v3433
        %3944 = vmatprep.subr.bf16.mxu0 %v3438
        %3945 = vmatpush1.bf16.msra.mxu0 %v3437
        %3946 = vmatprep.subr.bf16.mxu0 %v3442
        %3947 = vmatpush1.bf16.msra.mxu0 %v3441
        %3948 = vmatprep.subr.bf16.mxu0 %v3446
        %3949 = vmatpush1.bf16.msra.mxu0 %v3445
        %3950 = vmatprep.mubr.bf16.mxu0 %v2353
        %3951 = vmatmul.mubr.bf16.gmra.mrb[0].mxu0 %v2352
        %v3952 = vpop.f32.mrb[0].mxu0
        %v3953 = vadd.f32 %v3901, %v3952
        %v3954 = vpop.f32.mrb[0].mxu0
        %v3955 = vadd.f32 %v3905, %v3954
        %v3956 = vpop.f32.mrb[0].mxu0
        %v3957 = vpop.f32.mrb[0].mxu0
        %3958 = vdwg.mxu0
        %3959 = vmatprep.subr.bf16.mxu0 %v3450
        %3960 = vmatpush1.bf16.msra.mxu0 %v3449
        %3961 = vmatprep.subr.bf16.mxu0 %v3454
        %3962 = vmatpush1.bf16.msra.mxu0 %v3453
        %3963 = vmatprep.subr.bf16.mxu0 %v3458
        %3964 = vmatpush1.bf16.msra.mxu0 %v3457
        %3965 = vmatprep.subr.bf16.mxu0 %v3462
        %3966 = vmatpush1.bf16.msra.mxu0 %v3461
        %3967 = vmatprep.subr.bf16.mxu0 %v3466
        %3968 = vmatpush1.bf16.msra.mxu0 %v3465
        %3969 = vmatprep.subr.bf16.mxu0 %v3470
        %3970 = vmatpush1.bf16.msra.mxu0 %v3469
        %3971 = vmatprep.subr.bf16.mxu0 %v3474
        %3972 = vmatpush1.bf16.msra.mxu0 %v3473
        %3973 = vmatprep.subr.bf16.mxu0 %v3478
        %3974 = vmatpush1.bf16.msra.mxu0 %v3477
        %3975 = vmatprep.subr.bf16.mxu0 %v3482
        %3976 = vmatpush1.bf16.msra.mxu0 %v3481
        %3977 = vmatprep.subr.bf16.mxu0 %v3486
        %3978 = vmatpush1.bf16.msra.mxu0 %v3485
        %3979 = vmatprep.subr.bf16.mxu0 %v3490
        %3980 = vmatpush1.bf16.msra.mxu0 %v3489
        %3981 = vmatprep.subr.bf16.mxu0 %v3494
        %3982 = vmatpush1.bf16.msra.mxu0 %v3493
        %3983 = vmatprep.subr.bf16.mxu0 %v3498
        %3984 = vmatpush1.bf16.msra.mxu0 %v3497
        %3985 = vmatprep.subr.bf16.mxu0 %v3502
        %3986 = vmatpush1.bf16.msra.mxu0 %v3501
        %3987 = vmatprep.subr.bf16.mxu0 %v3506
        %3988 = vmatpush1.bf16.msra.mxu0 %v3505
        %3989 = vmatprep.subr.bf16.mxu0 %v3510
        %3990 = vmatpush1.bf16.msra.mxu0 %v3509
        %3991 = vmatprep.mubr.bf16.mxu0 %v2355
        %3992 = vmatmul.mubr.bf16.gmra.mrb[0].mxu0 %v2354
        %v3993 = vpop.f32.mrb[0].mxu0
        %v3994 = vadd.f32 %v3953, %v3993
        %v3995 = vpop.f32.mrb[0].mxu0
        %v3996 = vadd.f32 %v3955, %v3995
        %v3997 = vpop.f32.mrb[0].mxu0
        %v3998 = vpop.f32.mrb[0].mxu0
        %3999 = vdwg.mxu0
        %4000 = vmatprep.subr.bf16.mxu0 %v3514
        %4001 = vmatpush1.bf16.msra.mxu0 %v3513
        %4002 = vmatprep.subr.bf16.mxu0 %v3518
        %4003 = vmatpush1.bf16.msra.mxu0 %v3517
        %4004 = vmatprep.subr.bf16.mxu0 %v3522
        %4005 = vmatpush1.bf16.msra.mxu0 %v3521
        %4006 = vmatprep.subr.bf16.mxu0 %v3526
        %4007 = vmatpush1.bf16.msra.mxu0 %v3525
        %4008 = vmatprep.subr.bf16.mxu0 %v3530
        %4009 = vmatpush1.bf16.msra.mxu0 %v3529
        %4010 = vmatprep.subr.bf16.mxu0 %v3534
        %4011 = vmatpush1.bf16.msra.mxu0 %v3533
        %4012 = vmatprep.subr.bf16.mxu0 %v3538
        %4013 = vmatpush1.bf16.msra.mxu0 %v3537
        %4014 = vmatprep.subr.bf16.mxu0 %v3542
        %4015 = vmatpush1.bf16.msra.mxu0 %v3541
        %4016 = vmatprep.subr.bf16.mxu0 %v3546
        %4017 = vmatpush1.bf16.msra.mxu0 %v3545
        %4018 = vmatprep.subr.bf16.mxu0 %v3550
        %4019 = vmatpush1.bf16.msra.mxu0 %v3549
        %4020 = vmatprep.subr.bf16.mxu0 %v3554
        %4021 = vmatpush1.bf16.msra.mxu0 %v3553
        %4022 = vmatprep.subr.bf16.mxu0 %v3558
        %4023 = vmatpush1.bf16.msra.mxu0 %v3557
        %4024 = vmatprep.subr.bf16.mxu0 %v3562
        %4025 = vmatpush1.bf16.msra.mxu0 %v3561
        %4026 = vmatprep.subr.bf16.mxu0 %v3566
        %4027 = vmatpush1.bf16.msra.mxu0 %v3565
        %4028 = vmatprep.subr.bf16.mxu0 %v3570
        %4029 = vmatpush1.bf16.msra.mxu0 %v3569
        %4030 = vmatprep.subr.bf16.mxu0 %v3574
        %4031 = vmatpush1.bf16.msra.mxu0 %v3573
        %4032 = vmatprep.mubr.bf16.mxu0 %v2357
        %4033 = vmatmul.mubr.bf16.gmra.mrb[0].mxu0 %v2356
        %v4034 = vpop.f32.mrb[0].mxu0
        %v4035 = vadd.f32 %v3994, %v4034
        %v4036 = vpop.f32.mrb[0].mxu0
        %v4037 = vadd.f32 %v3996, %v4036
        %v4038 = vpop.f32.mrb[0].mxu0
        %v4039 = vpop.f32.mrb[0].mxu0
        %4040 = vdwg.mxu0
        %4041 = vmatprep.subr.bf16.mxu0 %v3578
        %4042 = vmatpush1.bf16.msra.mxu0 %v3577
        %4043 = vmatprep.subr.bf16.mxu0 %v3582
        %4044 = vmatpush1.bf16.msra.mxu0 %v3581
        %4045 = vmatprep.subr.bf16.mxu0 %v3586
        %4046 = vmatpush1.bf16.msra.mxu0 %v3585
        %4047 = vmatprep.subr.bf16.mxu0 %v3590
        %4048 = vmatpush1.bf16.msra.mxu0 %v3589
        %4049 = vmatprep.subr.bf16.mxu0 %v3594
        %4050 = vmatpush1.bf16.msra.mxu0 %v3593
        %4051 = vmatprep.subr.bf16.mxu0 %v3598
        %4052 = vmatpush1.bf16.msra.mxu0 %v3597
        %4053 = vmatprep.subr.bf16.mxu0 %v3602
        %4054 = vmatpush1.bf16.msra.mxu0 %v3601
        %4055 = vmatprep.subr.bf16.mxu0 %v3606
        %4056 = vmatpush1.bf16.msra.mxu0 %v3605
        %4057 = vmatprep.subr.bf16.mxu0 %v3610
        %4058 = vmatpush1.bf16.msra.mxu0 %v3609
        %4059 = vmatprep.subr.bf16.mxu0 %v3614
        %4060 = vmatpush1.bf16.msra.mxu0 %v3613
        %4061 = vmatprep.subr.bf16.mxu0 %v3618
        %4062 = vmatpush1.bf16.msra.mxu0 %v3617
        %4063 = vmatprep.subr.bf16.mxu0 %v3622
        %4064 = vmatpush1.bf16.msra.mxu0 %v3621
        %4065 = vmatprep.subr.bf16.mxu0 %v3626
        %4066 = vmatpush1.bf16.msra.mxu0 %v3625
        %4067 = vmatprep.subr.bf16.mxu0 %v3630
        %4068 = vmatpush1.bf16.msra.mxu0 %v3629
        %4069 = vmatprep.subr.bf16.mxu0 %v3634
        %4070 = vmatpush1.bf16.msra.mxu0 %v3633
        %4071 = vmatprep.subr.bf16.mxu0 %v3638
        %4072 = vmatpush1.bf16.msra.mxu0 %v3637
        %4073 = vmatprep.mubr.bf16.mxu0 %v2359
        %4074 = vmatmul.mubr.bf16.gmra.mrb[0].mxu0 %v2358
        %v4075 = vpop.f32.mrb[0].mxu0
        %v4076 = vadd.f32 %v4035, %v4075
        %v4077 = vpop.f32.mrb[0].mxu0
        %v4078 = vadd.f32 %v4037, %v4077
        %v4079 = vpop.f32.mrb[0].mxu0
        %v4080 = vpop.f32.mrb[0].mxu0
        %4081 = vdwg.mxu0
        %4082 = vmatprep.subr.bf16.mxu0 %v3388
        %4083 = vmatpush1.bf16.msra.mxu0 %v3387
        %4084 = vmatprep.subr.bf16.mxu0 %v3392
        %4085 = vmatpush1.bf16.msra.mxu0 %v3391
        %4086 = vmatprep.subr.bf16.mxu0 %v3396
        %4087 = vmatpush1.bf16.msra.mxu0 %v3395
        %4088 = vmatprep.subr.bf16.mxu0 %v3400
        %4089 = vmatpush1.bf16.msra.mxu0 %v3399
        %4090 = vmatprep.subr.bf16.mxu0 %v3404
        %4091 = vmatpush1.bf16.msra.mxu0 %v3403
        %4092 = vmatprep.subr.bf16.mxu0 %v3408
        %4093 = vmatpush1.bf16.msra.mxu0 %v3407
        %4094 = vmatprep.subr.bf16.mxu0 %v3412
        %4095 = vmatpush1.bf16.msra.mxu0 %v3411
        %4096 = vmatprep.subr.bf16.mxu0 %v3416
        %4097 = vmatpush1.bf16.msra.mxu0 %v3415
        %4098 = vmatprep.subr.bf16.mxu0 %v3420
        %4099 = vmatpush1.bf16.msra.mxu0 %v3419
        %4100 = vmatprep.subr.bf16.mxu0 %v3424
        %4101 = vmatpush1.bf16.msra.mxu0 %v3423
        %4102 = vmatprep.subr.bf16.mxu0 %v3428
        %4103 = vmatpush1.bf16.msra.mxu0 %v3427
        %4104 = vmatprep.subr.bf16.mxu0 %v3432
        %4105 = vmatpush1.bf16.msra.mxu0 %v3431
        %4106 = vmatprep.subr.bf16.mxu0 %v3436
        %4107 = vmatpush1.bf16.msra.mxu0 %v3435
        %4108 = vmatprep.subr.bf16.mxu0 %v3440
        %4109 = vmatpush1.bf16.msra.mxu0 %v3439
        %4110 = vmatprep.subr.bf16.mxu0 %v3444
        %4111 = vmatpush1.bf16.msra.mxu0 %v3443
        %4112 = vmatprep.subr.bf16.mxu0 %v3448
        %4113 = vmatpush1.bf16.msra.mxu0 %v3447
        %4114 = vmatprep.mubr.bf16.mxu0 %v2353
        %4115 = vmatmul.mubr.bf16.gmra.mrb[0].mxu0 %v2352
        %v4116 = vpop.f32.mrb[0].mxu0
        %v4117 = vadd.f32 %v3909, %v4116
        %v4118 = vpop.f32.mrb[0].mxu0
        %v4119 = vadd.f32 %v3913, %v4118
        %v4120 = vpop.f32.mrb[0].mxu0
        %v4121 = vpop.f32.mrb[0].mxu0
        %4122 = vdwg.mxu0
        %4123 = vmatprep.subr.bf16.mxu0 %v3452
        %4124 = vmatpush1.bf16.msra.mxu0 %v3451
        %4125 = vmatprep.subr.bf16.mxu0 %v3456
        %4126 = vmatpush1.bf16.msra.mxu0 %v3455
        %4127 = vmatprep.subr.bf16.mxu0 %v3460
        %4128 = vmatpush1.bf16.msra.mxu0 %v3459
        %4129 = vmatprep.subr.bf16.mxu0 %v3464
        %4130 = vmatpush1.bf16.msra.mxu0 %v3463
        %4131 = vmatprep.subr.bf16.mxu0 %v3468
        %4132 = vmatpush1.bf16.msra.mxu0 %v3467
        %4133 = vmatprep.subr.bf16.mxu0 %v3472
        %4134 = vmatpush1.bf16.msra.mxu0 %v3471
        %4135 = vmatprep.subr.bf16.mxu0 %v3476
        %4136 = vmatpush1.bf16.msra.mxu0 %v3475
        %4137 = vmatprep.subr.bf16.mxu0 %v3480
        %4138 = vmatpush1.bf16.msra.mxu0 %v3479
        %4139 = vmatprep.subr.bf16.mxu0 %v3484
        %4140 = vmatpush1.bf16.msra.mxu0 %v3483
        %4141 = vmatprep.subr.bf16.mxu0 %v3488
        %4142 = vmatpush1.bf16.msra.mxu0 %v3487
        %4143 = vmatprep.subr.bf16.mxu0 %v3492
        %4144 = vmatpush1.bf16.msra.mxu0 %v3491
        %4145 = vmatprep.subr.bf16.mxu0 %v3496
        %4146 = vmatpush1.bf16.msra.mxu0 %v3495
        %4147 = vmatprep.subr.bf16.mxu0 %v3500
        %4148 = vmatpush1.bf16.msra.mxu0 %v3499
        %4149 = vmatprep.subr.bf16.mxu0 %v3504
        %4150 = vmatpush1.bf16.msra.mxu0 %v3503
        %4151 = vmatprep.subr.bf16.mxu0 %v3508
        %4152 = vmatpush1.bf16.msra.mxu0 %v3507
        %4153 = vmatprep.subr.bf16.mxu0 %v3512
        %4154 = vmatpush1.bf16.msra.mxu0 %v3511
        %4155 = vmatprep.mubr.bf16.mxu0 %v2355
        %4156 = vmatmul.mubr.bf16.gmra.mrb[0].mxu0 %v2354
        %v4157 = vpop.f32.mrb[0].mxu0
        %v4158 = vadd.f32 %v4117, %v4157
        %v4159 = vpop.f32.mrb[0].mxu0
        %v4160 = vadd.f32 %v4119, %v4159
        %v4161 = vpop.f32.mrb[0].mxu0
        %v4162 = vpop.f32.mrb[0].mxu0
        %4163 = vdwg.mxu0
        %4164 = vmatprep.subr.bf16.mxu0 %v3516
        %4165 = vmatpush1.bf16.msra.mxu0 %v3515
        %4166 = vmatprep.subr.bf16.mxu0 %v3520
        %4167 = vmatpush1.bf16.msra.mxu0 %v3519
        %4168 = vmatprep.subr.bf16.mxu0 %v3524
        %4169 = vmatpush1.bf16.msra.mxu0 %v3523
        %4170 = vmatprep.subr.bf16.mxu0 %v3528
        %4171 = vmatpush1.bf16.msra.mxu0 %v3527
        %4172 = vmatprep.subr.bf16.mxu0 %v3532
        %4173 = vmatpush1.bf16.msra.mxu0 %v3531
        %4174 = vmatprep.subr.bf16.mxu0 %v3536
        %4175 = vmatpush1.bf16.msra.mxu0 %v3535
        %4176 = vmatprep.subr.bf16.mxu0 %v3540
        %4177 = vmatpush1.bf16.msra.mxu0 %v3539
        %4178 = vmatprep.subr.bf16.mxu0 %v3544
        %4179 = vmatpush1.bf16.msra.mxu0 %v3543
        %4180 = vmatprep.subr.bf16.mxu0 %v3548
        %4181 = vmatpush1.bf16.msra.mxu0 %v3547
        %4182 = vmatprep.subr.bf16.mxu0 %v3552
        %4183 = vmatpush1.bf16.msra.mxu0 %v3551
        %4184 = vmatprep.subr.bf16.mxu0 %v3556
        %4185 = vmatpush1.bf16.msra.mxu0 %v3555
        %4186 = vmatprep.subr.bf16.mxu0 %v3560
        %4187 = vmatpush1.bf16.msra.mxu0 %v3559
        %4188 = vmatprep.subr.bf16.mxu0 %v3564
        %4189 = vmatpush1.bf16.msra.mxu0 %v3563
        %4190 = vmatprep.subr.bf16.mxu0 %v3568
        %4191 = vmatpush1.bf16.msra.mxu0 %v3567
        %4192 = vmatprep.subr.bf16.mxu0 %v3572
        %4193 = vmatpush1.bf16.msra.mxu0 %v3571
        %4194 = vmatprep.subr.bf16.mxu0 %v3576
        %4195 = vmatpush1.bf16.msra.mxu0 %v3575
        %4196 = vmatprep.mubr.bf16.mxu0 %v2357
        %4197 = vmatmul.mubr.bf16.gmra.mrb[0].mxu0 %v2356
        %v4198 = vpop.f32.mrb[0].mxu0
        %v4199 = vadd.f32 %v4158, %v4198
        %v4200 = vpop.f32.mrb[0].mxu0
        %v4201 = vadd.f32 %v4160, %v4200
        %v4202 = vpop.f32.mrb[0].mxu0
        %v4203 = vpop.f32.mrb[0].mxu0
        %4204 = vdwg.mxu0
        %4205 = vmatprep.subr.bf16.mxu0 %v3580
        %4206 = vmatpush1.bf16.msra.mxu0 %v3579
        %4207 = vmatprep.subr.bf16.mxu0 %v3584
        %4208 = vmatpush1.bf16.msra.mxu0 %v3583
        %4209 = vmatprep.subr.bf16.mxu0 %v3588
        %4210 = vmatpush1.bf16.msra.mxu0 %v3587
        %4211 = vmatprep.subr.bf16.mxu0 %v3592
        %4212 = vmatpush1.bf16.msra.mxu0 %v3591
        %4213 = vmatprep.subr.bf16.mxu0 %v3596
        %4214 = vmatpush1.bf16.msra.mxu0 %v3595
        %4215 = vmatprep.subr.bf16.mxu0 %v3600
        %4216 = vmatpush1.bf16.msra.mxu0 %v3599
        %4217 = vmatprep.subr.bf16.mxu0 %v3604
        %4218 = vmatpush1.bf16.msra.mxu0 %v3603
        %4219 = vmatprep.subr.bf16.mxu0 %v3608
        %4220 = vmatpush1.bf16.msra.mxu0 %v3607
        %4221 = vmatprep.subr.bf16.mxu0 %v3612
        %4222 = vmatpush1.bf16.msra.mxu0 %v3611
        %4223 = vmatprep.subr.bf16.mxu0 %v3616
        %4224 = vmatpush1.bf16.msra.mxu0 %v3615
        %4225 = vmatprep.subr.bf16.mxu0 %v3620
        %4226 = vmatpush1.bf16.msra.mxu0 %v3619
        %4227 = vmatprep.subr.bf16.mxu0 %v3624
        %4228 = vmatpush1.bf16.msra.mxu0 %v3623
        %4229 = vmatprep.subr.bf16.mxu0 %v3628
        %4230 = vmatpush1.bf16.msra.mxu0 %v3627
        %4231 = vmatprep.subr.bf16.mxu0 %v3632
        %4232 = vmatpush1.bf16.msra.mxu0 %v3631
        %4233 = vmatprep.subr.bf16.mxu0 %v3636
        %4234 = vmatpush1.bf16.msra.mxu0 %v3635
        %4235 = vmatprep.subr.bf16.mxu0 %v3640
        %4236 = vmatpush1.bf16.msra.mxu0 %v3639
        %4237 = vmatprep.mubr.bf16.mxu0 %v2359
        %4238 = vmatmul.mubr.bf16.gmra.mrb[0].mxu0 %v2358
        %v4239 = vpop.f32.mrb[0].mxu0
        %v4240 = vadd.f32 %v4199, %v4239
        %v4241 = vpop.f32.mrb[0].mxu0
        %v4242 = vadd.f32 %v4201, %v4241
        %v4243 = vpop.f32.mrb[0].mxu0
        %v4244 = vpop.f32.mrb[0].mxu0
        %4245 = vdwg.mxu0
        %vm4246 = vcmp.ge.f32.partialorder %v4076, 0.0
        %vm4247 = vcmp.ge.f32.partialorder %v4078, 0.0
        %vm4248 = vcmp.ge.f32.partialorder %v4240, 0.0
        %vm4249 = vcmp.ge.f32.partialorder %v4242, 0.0
        %v4250 = vmul.f32 %v4076, 0.01
        %v4251 = vmul.f32 %v4078, 0.01
        %v4252 = vmul.f32 %v4240, 0.01
        %v4253 = vmul.f32 %v4242, 0.01
        %v4254 = vsel %vm4246, %v4076, %v4250
        %v4255 = vsel %vm4247, %v4078, %v4251
        %v4256 = vsel %vm4248, %v4240, %v4252
        %v4257 = vsel %vm4249, %v4242, %v4253
        %v4258 = vpack.c.bf16 %v4254, %v4254
        %v4259 = vpack.c.bf16 %v4255, %v4255
        %v4260 = vpack.c.bf16 %v4256, %v4256
        %v4261 = vpack.c.bf16 %v4257, %v4257
        %v4262 = vld [vmem:[#allocation10] sm:$0xff]
        %v4263 = vld [vmem:[#allocation10 + $0x8] sm:$0xff]
        %v4264 = vld [vmem:[#allocation10 + $0x10] sm:$0xff]
        %v4265 = vld [vmem:[#allocation10 + $0x18] sm:$0xff]
        %v4266 = vld [vmem:[#allocation10 + $0x20] sm:$0xff]
        %v4267 = vld [vmem:[#allocation10 + $0x28] sm:$0xff]
        %v4268 = vld [vmem:[#allocation10 + $0x30] sm:$0xff]
        %v4269 = vld [vmem:[#allocation10 + $0x38] sm:$0xff]
        %v4270 = vld [vmem:[#allocation10 + $0x40] sm:$0xff]
        %v4271 = vld [vmem:[#allocation10 + $0x48] sm:$0xff]
        %v4272 = vld [vmem:[#allocation10 + $0x50] sm:$0xff]
        %v4273 = vld [vmem:[#allocation10 + $0x58] sm:$0xff]
        %v4274 = vld [vmem:[#allocation10 + $0x60] sm:$0xff]
        %v4275 = vld [vmem:[#allocation10 + $0x68] sm:$0xff]
        %v4276 = vld [vmem:[#allocation10 + $0x70] sm:$0xff]
        %v4277 = vld [vmem:[#allocation10 + $0x78] sm:$0xff]
        %v4278 = vld [vmem:[#allocation10 + $0x80] sm:$0xff]
        %v4279 = vld [vmem:[#allocation10 + $0x88] sm:$0xff]
        %v4280 = vld [vmem:[#allocation10 + $0x90] sm:$0xff]
        %v4281 = vld [vmem:[#allocation10 + $0x98] sm:$0xff]
        %v4282 = vld [vmem:[#allocation10 + $0xa0] sm:$0xff]
        %v4283 = vld [vmem:[#allocation10 + $0xa8] sm:$0xff]
        %v4284 = vld [vmem:[#allocation10 + $0xb0] sm:$0xff]
        %v4285 = vld [vmem:[#allocation10 + $0xb8] sm:$0xff]
        %v4286 = vld [vmem:[#allocation10 + $0xc0] sm:$0xff]
        %v4287 = vld [vmem:[#allocation10 + $0xc8] sm:$0xff]
        %v4288 = vld [vmem:[#allocation10 + $0xd0] sm:$0xff]
        %v4289 = vld [vmem:[#allocation10 + $0xd8] sm:$0xff]
        %v4290 = vld [vmem:[#allocation10 + $0xe0] sm:$0xff]
        %v4291 = vld [vmem:[#allocation10 + $0xe8] sm:$0xff]
        %v4292 = vld [vmem:[#allocation10 + $0xf0] sm:$0xff]
        %v4293 = vld [vmem:[#allocation10 + $0xf8] sm:$0xff]
        %v4294 = vld [vmem:[#allocation10 + $0x100] sm:$0xff]
        %v4295 = vld [vmem:[#allocation10 + $0x108] sm:$0xff]
        %v4296 = vld [vmem:[#allocation10 + $0x110] sm:$0xff]
        %v4297 = vld [vmem:[#allocation10 + $0x118] sm:$0xff]
        %v4298 = vld [vmem:[#allocation10 + $0x120] sm:$0xff]
        %v4299 = vld [vmem:[#allocation10 + $0x128] sm:$0xff]
        %v4300 = vld [vmem:[#allocation10 + $0x130] sm:$0xff]
        %v4301 = vld [vmem:[#allocation10 + $0x138] sm:$0xff]
        %v4302 = vld [vmem:[#allocation10 + $0x140] sm:$0xff]
        %v4303 = vld [vmem:[#allocation10 + $0x148] sm:$0xff]
        %v4304 = vld [vmem:[#allocation10 + $0x150] sm:$0xff]
        %v4305 = vld [vmem:[#allocation10 + $0x158] sm:$0xff]
        %v4306 = vld [vmem:[#allocation10 + $0x160] sm:$0xff]
        %v4307 = vld [vmem:[#allocation10 + $0x168] sm:$0xff]
        %v4308 = vld [vmem:[#allocation10 + $0x170] sm:$0xff]
        %v4309 = vld [vmem:[#allocation10 + $0x178] sm:$0xff]
        %v4310 = vld [vmem:[#allocation10 + $0x180] sm:$0xff]
        %v4311 = vld [vmem:[#allocation10 + $0x188] sm:$0xff]
        %v4312 = vld [vmem:[#allocation10 + $0x190] sm:$0xff]
        %v4313 = vld [vmem:[#allocation10 + $0x198] sm:$0xff]
        %v4314 = vld [vmem:[#allocation10 + $0x1a0] sm:$0xff]
        %v4315 = vld [vmem:[#allocation10 + $0x1a8] sm:$0xff]
        %v4316 = vld [vmem:[#allocation10 + $0x1b0] sm:$0xff]
        %v4317 = vld [vmem:[#allocation10 + $0x1b8] sm:$0xff]
        %v4318 = vld [vmem:[#allocation10 + $0x1c0] sm:$0xff]
        %v4319 = vld [vmem:[#allocation10 + $0x1c8] sm:$0xff]
        %v4320 = vld [vmem:[#allocation10 + $0x1d0] sm:$0xff]
        %v4321 = vld [vmem:[#allocation10 + $0x1d8] sm:$0xff]
        %v4322 = vld [vmem:[#allocation10 + $0x1e0] sm:$0xff]
        %v4323 = vld [vmem:[#allocation10 + $0x1e8] sm:$0xff]
        %v4324 = vld [vmem:[#allocation10 + $0x1f0] sm:$0xff]
        %v4325 = vld [vmem:[#allocation10 + $0x1f8] sm:$0xff]
        %v4326 = vld [vmem:[%s13] sm:$0x3]
        %v4391 = vunpack.c.l.b16 %v4262
        %v4392 = vunpack.c.h.b16 %v4262
        %v4393 = vunpack.c.l.b16 %v4263
        %v4394 = vunpack.c.h.b16 %v4263
        %v4395 = vunpack.c.l.b16 %v4264
        %v4396 = vunpack.c.h.b16 %v4264
        %v4397 = vunpack.c.l.b16 %v4265
        %v4398 = vunpack.c.h.b16 %v4265
        %v4399 = vunpack.c.l.b16 %v4266
        %v4400 = vunpack.c.h.b16 %v4266
        %v4401 = vunpack.c.l.b16 %v4267
        %v4402 = vunpack.c.h.b16 %v4267
        %v4403 = vunpack.c.l.b16 %v4268
        %v4404 = vunpack.c.h.b16 %v4268
        %v4405 = vunpack.c.l.b16 %v4269
        %v4406 = vunpack.c.h.b16 %v4269
        %v4407 = vunpack.c.l.b16 %v4270
        %v4408 = vunpack.c.h.b16 %v4270
        %v4409 = vunpack.c.l.b16 %v4271
        %v4410 = vunpack.c.h.b16 %v4271
        %v4411 = vunpack.c.l.b16 %v4272
        %v4412 = vunpack.c.h.b16 %v4272
        %v4413 = vunpack.c.l.b16 %v4273
        %v4414 = vunpack.c.h.b16 %v4273
        %v4415 = vunpack.c.l.b16 %v4274
        %v4416 = vunpack.c.h.b16 %v4274
        %v4417 = vunpack.c.l.b16 %v4275
        %v4418 = vunpack.c.h.b16 %v4275
        %v4419 = vunpack.c.l.b16 %v4276
        %v4420 = vunpack.c.h.b16 %v4276
        %v4421 = vunpack.c.l.b16 %v4277
        %v4422 = vunpack.c.h.b16 %v4277
        %v4423 = vunpack.c.l.b16 %v4278
        %v4424 = vunpack.c.h.b16 %v4278
        %v4425 = vunpack.c.l.b16 %v4279
        %v4426 = vunpack.c.h.b16 %v4279
        %v4427 = vunpack.c.l.b16 %v4280
        %v4428 = vunpack.c.h.b16 %v4280
        %v4429 = vunpack.c.l.b16 %v4281
        %v4430 = vunpack.c.h.b16 %v4281
        %v4431 = vunpack.c.l.b16 %v4282
        %v4432 = vunpack.c.h.b16 %v4282
        %v4433 = vunpack.c.l.b16 %v4283
        %v4434 = vunpack.c.h.b16 %v4283
        %v4435 = vunpack.c.l.b16 %v4284
        %v4436 = vunpack.c.h.b16 %v4284
        %v4437 = vunpack.c.l.b16 %v4285
        %v4438 = vunpack.c.h.b16 %v4285
        %v4439 = vunpack.c.l.b16 %v4286
        %v4440 = vunpack.c.h.b16 %v4286
        %v4441 = vunpack.c.l.b16 %v4287
        %v4442 = vunpack.c.h.b16 %v4287
        %v4443 = vunpack.c.l.b16 %v4288
        %v4444 = vunpack.c.h.b16 %v4288
        %v4445 = vunpack.c.l.b16 %v4289
        %v4446 = vunpack.c.h.b16 %v4289
        %v4447 = vunpack.c.l.b16 %v4290
        %v4448 = vunpack.c.h.b16 %v4290
        %v4449 = vunpack.c.l.b16 %v4291
        %v4450 = vunpack.c.h.b16 %v4291
        %v4451 = vunpack.c.l.b16 %v4292
        %v4452 = vunpack.c.h.b16 %v4292
        %v4453 = vunpack.c.l.b16 %v4293
        %v4454 = vunpack.c.h.b16 %v4293
        %v4455 = vunpack.c.l.b16 %v4294
        %v4456 = vunpack.c.h.b16 %v4294
        %v4457 = vunpack.c.l.b16 %v4295
        %v4458 = vunpack.c.h.b16 %v4295
        %v4459 = vunpack.c.l.b16 %v4296
        %v4460 = vunpack.c.h.b16 %v4296
        %v4461 = vunpack.c.l.b16 %v4297
        %v4462 = vunpack.c.h.b16 %v4297
        %v4463 = vunpack.c.l.b16 %v4298
        %v4464 = vunpack.c.h.b16 %v4298
        %v4465 = vunpack.c.l.b16 %v4299
        %v4466 = vunpack.c.h.b16 %v4299
        %v4467 = vunpack.c.l.b16 %v4300
        %v4468 = vunpack.c.h.b16 %v4300
        %v4469 = vunpack.c.l.b16 %v4301
        %v4470 = vunpack.c.h.b16 %v4301
        %v4471 = vunpack.c.l.b16 %v4302
        %v4472 = vunpack.c.h.b16 %v4302
        %v4473 = vunpack.c.l.b16 %v4303
        %v4474 = vunpack.c.h.b16 %v4303
        %v4475 = vunpack.c.l.b16 %v4304
        %v4476 = vunpack.c.h.b16 %v4304
        %v4477 = vunpack.c.l.b16 %v4305
        %v4478 = vunpack.c.h.b16 %v4305
        %v4479 = vunpack.c.l.b16 %v4306
        %v4480 = vunpack.c.h.b16 %v4306
        %v4481 = vunpack.c.l.b16 %v4307
        %v4482 = vunpack.c.h.b16 %v4307
        %v4483 = vunpack.c.l.b16 %v4308
        %v4484 = vunpack.c.h.b16 %v4308
        %v4485 = vunpack.c.l.b16 %v4309
        %v4486 = vunpack.c.h.b16 %v4309
        %v4487 = vunpack.c.l.b16 %v4310
        %v4488 = vunpack.c.h.b16 %v4310
        %v4489 = vunpack.c.l.b16 %v4311
        %v4490 = vunpack.c.h.b16 %v4311
        %v4491 = vunpack.c.l.b16 %v4312
        %v4492 = vunpack.c.h.b16 %v4312
        %v4493 = vunpack.c.l.b16 %v4313
        %v4494 = vunpack.c.h.b16 %v4313
        %v4495 = vunpack.c.l.b16 %v4314
        %v4496 = vunpack.c.h.b16 %v4314
        %v4497 = vunpack.c.l.b16 %v4315
        %v4498 = vunpack.c.h.b16 %v4315
        %v4499 = vunpack.c.l.b16 %v4316
        %v4500 = vunpack.c.h.b16 %v4316
        %v4501 = vunpack.c.l.b16 %v4317
        %v4502 = vunpack.c.h.b16 %v4317
        %v4503 = vunpack.c.l.b16 %v4318
        %v4504 = vunpack.c.h.b16 %v4318
        %v4505 = vunpack.c.l.b16 %v4319
        %v4506 = vunpack.c.h.b16 %v4319
        %v4507 = vunpack.c.l.b16 %v4320
        %v4508 = vunpack.c.h.b16 %v4320
        %v4509 = vunpack.c.l.b16 %v4321
        %v4510 = vunpack.c.h.b16 %v4321
        %v4511 = vunpack.c.l.b16 %v4322
        %v4512 = vunpack.c.h.b16 %v4322
        %v4513 = vunpack.c.l.b16 %v4323
        %v4514 = vunpack.c.h.b16 %v4323
        %v4515 = vunpack.c.l.b16 %v4324
        %v4516 = vunpack.c.h.b16 %v4324
        %v4517 = vunpack.c.l.b16 %v4325
        %v4518 = vunpack.c.h.b16 %v4325
        %v4519 = vpack.c.b16 %v4393, %v4391
        %v4520 = vpack.c.b16 %v4394, %v4392
        %v4521 = vpack.c.b16 %v4397, %v4395
        %v4522 = vpack.c.b16 %v4398, %v4396
        %v4523 = vpack.c.b16 %v4401, %v4399
        %v4524 = vpack.c.b16 %v4402, %v4400
        %v4525 = vpack.c.b16 %v4405, %v4403
        %v4526 = vpack.c.b16 %v4406, %v4404
        %v4527 = vpack.c.b16 %v4409, %v4407
        %v4528 = vpack.c.b16 %v4410, %v4408
        %v4529 = vpack.c.b16 %v4413, %v4411
        %v4530 = vpack.c.b16 %v4414, %v4412
        %v4531 = vpack.c.b16 %v4417, %v4415
        %v4532 = vpack.c.b16 %v4418, %v4416
        %v4533 = vpack.c.b16 %v4421, %v4419
        %v4534 = vpack.c.b16 %v4422, %v4420
        %v4535 = vpack.c.b16 %v4425, %v4423
        %v4536 = vpack.c.b16 %v4426, %v4424
        %v4537 = vpack.c.b16 %v4429, %v4427
        %v4538 = vpack.c.b16 %v4430, %v4428
        %v4539 = vpack.c.b16 %v4433, %v4431
        %v4540 = vpack.c.b16 %v4434, %v4432
        %v4541 = vpack.c.b16 %v4437, %v4435
        %v4542 = vpack.c.b16 %v4438, %v4436
        %v4543 = vpack.c.b16 %v4441, %v4439
        %v4544 = vpack.c.b16 %v4442, %v4440
        %v4545 = vpack.c.b16 %v4445, %v4443
        %v4546 = vpack.c.b16 %v4446, %v4444
        %v4547 = vpack.c.b16 %v4449, %v4447
        %v4548 = vpack.c.b16 %v4450, %v4448
        %v4549 = vpack.c.b16 %v4453, %v4451
        %v4550 = vpack.c.b16 %v4454, %v4452
        %v4551 = vpack.c.b16 %v4457, %v4455
        %v4552 = vpack.c.b16 %v4458, %v4456
        %v4553 = vpack.c.b16 %v4461, %v4459
        %v4554 = vpack.c.b16 %v4462, %v4460
        %v4555 = vpack.c.b16 %v4465, %v4463
        %v4556 = vpack.c.b16 %v4466, %v4464
        %v4557 = vpack.c.b16 %v4469, %v4467
        %v4558 = vpack.c.b16 %v4470, %v4468
        %v4559 = vpack.c.b16 %v4473, %v4471
        %v4560 = vpack.c.b16 %v4474, %v4472
        %v4561 = vpack.c.b16 %v4477, %v4475
        %v4562 = vpack.c.b16 %v4478, %v4476
        %v4563 = vpack.c.b16 %v4481, %v4479
        %v4564 = vpack.c.b16 %v4482, %v4480
        %v4565 = vpack.c.b16 %v4485, %v4483
        %v4566 = vpack.c.b16 %v4486, %v4484
        %v4567 = vpack.c.b16 %v4489, %v4487
        %v4568 = vpack.c.b16 %v4490, %v4488
        %v4569 = vpack.c.b16 %v4493, %v4491
        %v4570 = vpack.c.b16 %v4494, %v4492
        %v4571 = vpack.c.b16 %v4497, %v4495
        %v4572 = vpack.c.b16 %v4498, %v4496
        %v4573 = vpack.c.b16 %v4501, %v4499
        %v4574 = vpack.c.b16 %v4502, %v4500
        %v4575 = vpack.c.b16 %v4505, %v4503
        %v4576 = vpack.c.b16 %v4506, %v4504
        %v4577 = vpack.c.b16 %v4509, %v4507
        %v4578 = vpack.c.b16 %v4510, %v4508
        %v4579 = vpack.c.b16 %v4513, %v4511
        %v4580 = vpack.c.b16 %v4514, %v4512
        %v4581 = vpack.c.b16 %v4517, %v4515
        %v4582 = vpack.c.b16 %v4518, %v4516
        %v4648 = vlaneseq
        %v4649 = vshrl.u32 %v4648, 7
        %v4650 = vsub.s32 0, %v4649
        %v4651 = vrot.slane %v4326, %v4650
        %v4652 = vlaneseq
        %v4653 = vshrl.u32 %v4652, 7
        %v4654 = vsub.s32 1, %v4653
        %v4655 = vrot.slane %v4326, %v4654
        %4658 = vmatprep.subr.bf16.mxu0 %v4520
        %4659 = vmatpush1.bf16.msra.mxu0 %v4519
        %4660 = vmatprep.subr.bf16.mxu0 %v4522
        %4661 = vmatpush1.bf16.msra.mxu0 %v4521
        %4662 = vmatprep.subr.bf16.mxu0 %v4524
        %4663 = vmatpush1.bf16.msra.mxu0 %v4523
        %4664 = vmatprep.subr.bf16.mxu0 %v4526
        %4665 = vmatpush1.bf16.msra.mxu0 %v4525
        %4666 = vmatprep.subr.bf16.mxu0 %v4528
        %4667 = vmatpush1.bf16.msra.mxu0 %v4527
        %4668 = vmatprep.subr.bf16.mxu0 %v4530
        %4669 = vmatpush1.bf16.msra.mxu0 %v4529
        %4670 = vmatprep.subr.bf16.mxu0 %v4532
        %4671 = vmatpush1.bf16.msra.mxu0 %v4531
        %4672 = vmatprep.subr.bf16.mxu0 %v4534
        %4673 = vmatpush1.bf16.msra.mxu0 %v4533
        %4674 = vmatprep.subr.bf16.mxu0 %v4536
        %4675 = vmatpush1.bf16.msra.mxu0 %v4535
        %4676 = vmatprep.subr.bf16.mxu0 %v4538
        %4677 = vmatpush1.bf16.msra.mxu0 %v4537
        %4678 = vmatprep.subr.bf16.mxu0 %v4540
        %4679 = vmatpush1.bf16.msra.mxu0 %v4539
        %4680 = vmatprep.subr.bf16.mxu0 %v4542
        %4681 = vmatpush1.bf16.msra.mxu0 %v4541
        %4682 = vmatprep.subr.bf16.mxu0 %v4544
        %4683 = vmatpush1.bf16.msra.mxu0 %v4543
        %4684 = vmatprep.subr.bf16.mxu0 %v4546
        %4685 = vmatpush1.bf16.msra.mxu0 %v4545
        %4686 = vmatprep.subr.bf16.mxu0 %v4548
        %4687 = vmatpush1.bf16.msra.mxu0 %v4547
        %4688 = vmatprep.subr.bf16.mxu0 %v4550
        %4689 = vmatpush1.bf16.msra.mxu0 %v4549
        %4690 = vmatprep.mubr.bf16.mxu0 %v4259
        %4691 = vmatmul.mubr.bf16.gmra.mrb[0].mxu0 %v4258
        %v4692 = vpop.f32.mrb[0].mxu0
        %v4693 = vadd.f32 %v4651, %v4692
        %v4694 = vpop.f32.mrb[0].mxu0
        %v4695 = vadd.f32 %v4655, %v4694
        %v4696 = vpop.f32.mrb[0].mxu0
        %v4697 = vpop.f32.mrb[0].mxu0
        %4698 = vdwg.mxu0
        %4699 = vmatprep.subr.bf16.mxu0 %v4552
        %4700 = vmatpush1.bf16.msra.mxu0 %v4551
        %4701 = vmatprep.subr.bf16.mxu0 %v4554
        %4702 = vmatpush1.bf16.msra.mxu0 %v4553
        %4703 = vmatprep.subr.bf16.mxu0 %v4556
        %4704 = vmatpush1.bf16.msra.mxu0 %v4555
        %4705 = vmatprep.subr.bf16.mxu0 %v4558
        %4706 = vmatpush1.bf16.msra.mxu0 %v4557
        %4707 = vmatprep.subr.bf16.mxu0 %v4560
        %4708 = vmatpush1.bf16.msra.mxu0 %v4559
        %4709 = vmatprep.subr.bf16.mxu0 %v4562
        %4710 = vmatpush1.bf16.msra.mxu0 %v4561
        %4711 = vmatprep.subr.bf16.mxu0 %v4564
        %4712 = vmatpush1.bf16.msra.mxu0 %v4563
        %4713 = vmatprep.subr.bf16.mxu0 %v4566
        %4714 = vmatpush1.bf16.msra.mxu0 %v4565
        %4715 = vmatprep.subr.bf16.mxu0 %v4568
        %4716 = vmatpush1.bf16.msra.mxu0 %v4567
        %4717 = vmatprep.subr.bf16.mxu0 %v4570
        %4718 = vmatpush1.bf16.msra.mxu0 %v4569
        %4719 = vmatprep.subr.bf16.mxu0 %v4572
        %4720 = vmatpush1.bf16.msra.mxu0 %v4571
        %4721 = vmatprep.subr.bf16.mxu0 %v4574
        %4722 = vmatpush1.bf16.msra.mxu0 %v4573
        %4723 = vmatprep.subr.bf16.mxu0 %v4576
        %4724 = vmatpush1.bf16.msra.mxu0 %v4575
        %4725 = vmatprep.subr.bf16.mxu0 %v4578
        %4726 = vmatpush1.bf16.msra.mxu0 %v4577
        %4727 = vmatprep.subr.bf16.mxu0 %v4580
        %4728 = vmatpush1.bf16.msra.mxu0 %v4579
        %4729 = vmatprep.subr.bf16.mxu0 %v4582
        %4730 = vmatpush1.bf16.msra.mxu0 %v4581
        %4731 = vmatprep.mubr.bf16.mxu0 %v4261
        %4732 = vmatmul.mubr.bf16.gmra.mrb[0].mxu0 %v4260
        %v4733 = vpop.f32.mrb[0].mxu0
        %v4734 = vadd.f32 %v4693, %v4733
        %v4735 = vpop.f32.mrb[0].mxu0
        %v4736 = vadd.f32 %v4695, %v4735
        %v4737 = vpop.f32.mrb[0].mxu0
        %v4738 = vpop.f32.mrb[0].mxu0
        %4739 = vdwg.mxu0
        %vm4740 = vcmp.ge.f32.partialorder %v4734, 0.0
        %vm4741 = vcmp.ge.f32.partialorder %v4736, 0.0
        %v4742 = vmul.f32 %v4734, 0.01
        %v4743 = vmul.f32 %v4736, 0.01
        %v4744 = vsel %vm4740, %v4734, %v4742
        %v4745 = vsel %vm4741, %v4736, %v4743
        %v4746 = vpack.c.bf16 %v4744, %v4744
        %v4747 = vpack.c.bf16 %v4745, %v4745
        %v4748 = vld [vmem:[#allocation11] sm:$0xf]
        %v4749 = vld [vmem:[#allocation11 + $0x4] sm:$0xf]
        %v4750 = vld [vmem:[#allocation11 + $0x8] sm:$0xf]
        %v4751 = vld [vmem:[#allocation11 + $0xc] sm:$0xf]
        %v4752 = vld [vmem:[#allocation11 + $0x10] sm:$0xf]
        %v4753 = vld [vmem:[#allocation11 + $0x14] sm:$0xf]
        %v4754 = vld [vmem:[#allocation11 + $0x18] sm:$0xf]
        %v4755 = vld [vmem:[#allocation11 + $0x1c] sm:$0xf]
        %v4756 = vld [vmem:[#allocation11 + $0x20] sm:$0xf]
        %v4757 = vld [vmem:[#allocation11 + $0x24] sm:$0xf]
        %v4758 = vld [vmem:[#allocation11 + $0x28] sm:$0xf]
        %v4759 = vld [vmem:[#allocation11 + $0x2c] sm:$0xf]
        %v4760 = vld [vmem:[#allocation11 + $0x30] sm:$0xf]
        %v4761 = vld [vmem:[#allocation11 + $0x34] sm:$0xf]
        %v4762 = vld [vmem:[#allocation11 + $0x38] sm:$0xf]
        %v4763 = vld [vmem:[#allocation11 + $0x3c] sm:$0xf]
        %v4764 = vld [vmem:[#allocation11 + $0x40] sm:$0xf]
        %v4765 = vld [vmem:[#allocation11 + $0x44] sm:$0xf]
        %v4766 = vld [vmem:[#allocation11 + $0x48] sm:$0xf]
        %v4767 = vld [vmem:[#allocation11 + $0x4c] sm:$0xf]
        %v4768 = vld [vmem:[#allocation11 + $0x50] sm:$0xf]
        %v4769 = vld [vmem:[#allocation11 + $0x54] sm:$0xf]
        %v4770 = vld [vmem:[#allocation11 + $0x58] sm:$0xf]
        %v4771 = vld [vmem:[#allocation11 + $0x5c] sm:$0xf]
        %v4772 = vld [vmem:[#allocation11 + $0x60] sm:$0xf]
        %v4773 = vld [vmem:[#allocation11 + $0x64] sm:$0xf]
        %v4774 = vld [vmem:[#allocation11 + $0x68] sm:$0xf]
        %v4775 = vld [vmem:[#allocation11 + $0x6c] sm:$0xf]
        %v4776 = vld [vmem:[#allocation11 + $0x70] sm:$0xf]
        %v4777 = vld [vmem:[#allocation11 + $0x74] sm:$0xf]
        %v4778 = vld [vmem:[#allocation11 + $0x78] sm:$0xf]
        %v4779 = vld [vmem:[#allocation11 + $0x7c] sm:$0xf]
        %v4780 = vld [vmem:[%s15] sm:$0x1]
        %v4813 = vunpack.c.l.b16 %v4748
        %v4814 = vunpack.c.l.b16 %v4749
        %v4815 = vunpack.c.l.b16 %v4750
        %v4816 = vunpack.c.l.b16 %v4751
        %v4817 = vunpack.c.l.b16 %v4752
        %v4818 = vunpack.c.l.b16 %v4753
        %v4819 = vunpack.c.l.b16 %v4754
        %v4820 = vunpack.c.l.b16 %v4755
        %v4821 = vunpack.c.l.b16 %v4756
        %v4822 = vunpack.c.l.b16 %v4757
        %v4823 = vunpack.c.l.b16 %v4758
        %v4824 = vunpack.c.l.b16 %v4759
        %v4825 = vunpack.c.l.b16 %v4760
        %v4826 = vunpack.c.l.b16 %v4761
        %v4827 = vunpack.c.l.b16 %v4762
        %v4828 = vunpack.c.l.b16 %v4763
        %v4829 = vunpack.c.l.b16 %v4764
        %v4830 = vunpack.c.l.b16 %v4765
        %v4831 = vunpack.c.l.b16 %v4766
        %v4832 = vunpack.c.l.b16 %v4767
        %v4833 = vunpack.c.l.b16 %v4768
        %v4834 = vunpack.c.l.b16 %v4769
        %v4835 = vunpack.c.l.b16 %v4770
        %v4836 = vunpack.c.l.b16 %v4771
        %v4837 = vunpack.c.l.b16 %v4772
        %v4838 = vunpack.c.l.b16 %v4773
        %v4839 = vunpack.c.l.b16 %v4774
        %v4840 = vunpack.c.l.b16 %v4775
        %v4841 = vunpack.c.l.b16 %v4776
        %v4842 = vunpack.c.l.b16 %v4777
        %v4843 = vunpack.c.l.b16 %v4778
        %v4844 = vunpack.c.l.b16 %v4779
        %v4845 = vpack.c.b16 %v4814, %v4813
        %v4846 = vpack.c.b16 %v4816, %v4815
        %v4847 = vpack.c.b16 %v4818, %v4817
        %v4848 = vpack.c.b16 %v4820, %v4819
        %v4849 = vpack.c.b16 %v4822, %v4821
        %v4850 = vpack.c.b16 %v4824, %v4823
        %v4851 = vpack.c.b16 %v4826, %v4825
        %v4852 = vpack.c.b16 %v4828, %v4827
        %v4853 = vpack.c.b16 %v4830, %v4829
        %v4854 = vpack.c.b16 %v4832, %v4831
        %v4855 = vpack.c.b16 %v4834, %v4833
        %v4856 = vpack.c.b16 %v4836, %v4835
        %v4857 = vpack.c.b16 %v4838, %v4837
        %v4858 = vpack.c.b16 %v4840, %v4839
        %v4859 = vpack.c.b16 %v4842, %v4841
        %v4860 = vpack.c.b16 %v4844, %v4843
        %4877 = vmatprep.subr.bf16.mxu0 0
        %4878 = vmatpush1.bf16.msra.mxu0 %v4845
        %4879 = vmatprep.subr.bf16.mxu0 0
        %4880 = vmatpush1.bf16.msra.mxu0 %v4846
        %4881 = vmatprep.subr.bf16.mxu0 0
        %4882 = vmatpush1.bf16.msra.mxu0 %v4847
        %4883 = vmatprep.subr.bf16.mxu0 0
        %4884 = vmatpush1.bf16.msra.mxu0 %v4848
        %4885 = vmatprep.subr.bf16.mxu0 0
        %4886 = vmatpush1.bf16.msra.mxu0 %v4849
        %4887 = vmatprep.subr.bf16.mxu0 0
        %4888 = vmatpush1.bf16.msra.mxu0 %v4850
        %4889 = vmatprep.subr.bf16.mxu0 0
        %4890 = vmatpush1.bf16.msra.mxu0 %v4851
        %4891 = vmatprep.subr.bf16.mxu0 0
        %4892 = vmatpush1.bf16.msra.mxu0 %v4852
        %4893 = vmatprep.subr.bf16.mxu0 0
        %4894 = vmatpush1.bf16.msra.mxu0 %v4853
        %4895 = vmatprep.subr.bf16.mxu0 0
        %4896 = vmatpush1.bf16.msra.mxu0 %v4854
        %4897 = vmatprep.subr.bf16.mxu0 0
        %4898 = vmatpush1.bf16.msra.mxu0 %v4855
        %4899 = vmatprep.subr.bf16.mxu0 0
        %4900 = vmatpush1.bf16.msra.mxu0 %v4856
        %4901 = vmatprep.subr.bf16.mxu0 0
        %4902 = vmatpush1.bf16.msra.mxu0 %v4857
        %4903 = vmatprep.subr.bf16.mxu0 0
        %4904 = vmatpush1.bf16.msra.mxu0 %v4858
        %4905 = vmatprep.subr.bf16.mxu0 0
        %4906 = vmatpush1.bf16.msra.mxu0 %v4859
        %4907 = vmatprep.subr.bf16.mxu0 0
        %4908 = vmatpush1.bf16.msra.mxu0 %v4860
        %4909 = vmatprep.mubr.bf16.mxu0 %v4747
        %4910 = vmatmul.mubr.bf16.gmra.mrb[0].mxu0 %v4746
        %v4911 = vpop.f32.mrb[0].mxu0
        %v4912 = vadd.f32 %v4780, %v4911
        %v4913 = vpop.f32.mrb[0].mxu0
        %v4914 = vpop.f32.mrb[0].mxu0
        %v4915 = vpop.f32.mrb[0].mxu0
        %4916 = vdwg.mxu0
        %4917 = vst [vmem:[%s685] sm:$0x1] %v4912
        %p4918 = scmp.lt.s32.totalorder %s37, 1
        %s4919 = scalar_select %p4918, %s37, 1
        %s4920 = smul.addr %s4919, 2
        %s4921 = smul.addr %s4920, 8
        %s4922 = scalar_lea.vmem %s16, %s4921
        %p4923 = scmp.lt.s32.totalorder %s37, 1
        %s4924 = scalar_select %p4923, %s37, 1
        %s4925 = smul.addr %s4924, 2
        %s4926 = smul.addr %s4925, 8
        %s4927 = scalar_lea.vmem %s17, %s4926
        %s4928 = sand.u32 %s443, 1
        %s4929 = scalar_lea.sflag [#allocation4], %s4928
        %s4930 = sand.u32 %s443, 1
        %s4931 = scalar_lea.vmem [#allocation13], %s4930
        // Predicated region
        $region109: #{my_model_forward.1} parent=83 // pred_check
          %p4932 = pneg %p401
        $region110: #{my_model_forward.1} parent=83 // pred_check_branch
          %4934 = sbr.rel (%p4932) target = $region112
        $region111: #{my_model_forward.1} parent=83 // pred_region
          _
        $region112: #{my_model_forward.1} parent=83 // pred_fallthru
          _
        // Predicated region
        $region113: #{my_model_forward.1} parent=83 // pred_check
          %p4935 = pneg %p427
        $region114: #{my_model_forward.1} parent=83 // pred_check_branch
          %4937 = sbr.rel (%p4935) target = $region116
        $region115: #{my_model_forward.1} parent=83 // pred_region
          _
        $region116: #{my_model_forward.1} parent=83 // pred_fallthru
          _
        // Predicated region
        $region117: #{my_model_forward.1} parent=83 // pred_check
          %p4938 = pneg %p453
        $region118: #{my_model_forward.1} parent=83 // pred_check_branch
          %4940 = sbr.rel (%p4938) target = $region120
        $region119: #{my_model_forward.1} parent=83 // pred_region
          %s4942 = ssub.s32 16, 16
          %4943 = vsyncadd %s4929, %s4942
          %s4944 = smul.addr %s37, 16
          %s4945 = scalar_lea.hbm %s18, %s4944
          %s4947 = sshll.u32 %s4931, 4
          %s4948 = int_to_ptr.vmem [resolvable:$true] %s4947
          %4950 = dma.vmem_to_hbm [thread:$0]  %s4948, 16, %s4945, %s4929
        $region120: #{my_model_forward.1} parent=83 // pred_fallthru
          _
      $region84: #{my_model_forward.1} parent=5 // pred_fallthru
        _
      %p4951 = scmp.le.s32.totalorder 2, %s32
      // Predicated region
      $region121: #{my_model_forward.1} parent=5 // pred_check
        %p4952 = pneg %p4951
      $region122: #{my_model_forward.1} parent=5 // pred_check_branch
        %4954 = sbr.rel (%p4952) target = $region124
      $region123: #{my_model_forward.1} parent=5 // pred_region
        %s4955 = ssub.s32 %s32, 2
        // Predicated region
        $region125: #{my_model_forward.1} parent=123 // pred_check
          %p4956 = pneg %p407
        $region126: #{my_model_forward.1} parent=123 // pred_check_branch
          %4958 = sbr.rel (%p4956) target = $region128
        $region127: #{my_model_forward.1} parent=123 // pred_region
          %p4959 = scmp.lt.s32.totalorder %s38, 1
          %s4960 = scalar_select %p4959, %s38, 1
          %s4961 = smul.addr %s4960, 2
          %s4962 = smul.addr %s4961, 8
          %s4963 = scalar_lea.vmem %s16, %s4962
        $region128: #{my_model_forward.1} parent=123 // pred_fallthru
          _
        // Predicated region
        $region129: #{my_model_forward.1} parent=123 // pred_check
          %p4964 = pneg %p433
        $region130: #{my_model_forward.1} parent=123 // pred_check_branch
          %4966 = sbr.rel (%p4964) target = $region132
        $region131: #{my_model_forward.1} parent=123 // pred_region
          %p4967 = scmp.lt.s32.totalorder %s38, 1
          %s4968 = scalar_select %p4967, %s38, 1
          %s4969 = smul.addr %s4968, 2
          %s4970 = smul.addr %s4969, 8
          %s4971 = scalar_lea.vmem %s17, %s4970
        $region132: #{my_model_forward.1} parent=123 // pred_fallthru
          _
        // Predicated region
        $region133: #{my_model_forward.1} parent=123 // pred_check
          %p4972 = pneg %p459
        $region134: #{my_model_forward.1} parent=123 // pred_check_branch
          %4974 = sbr.rel (%p4972) target = $region136
        $region135: #{my_model_forward.1} parent=123 // pred_region
          %s4975 = sand.u32 %s444, 1
          %s4976 = scalar_lea.sflag [#allocation4], %s4975
          %s4977 = sand.u32 %s444, 1
          %s4978 = scalar_lea.vmem [#allocation13], %s4977
          %4979 = dma.done %s4976, 16
        $region136: #{my_model_forward.1} parent=123 // pred_fallthru
          _
      $region124: #{my_model_forward.1} parent=5 // pred_fallthru
        _
    $region6: #{my_model_forward.1} parent=1 // loop_footer
      %s36 = sadd.s32 1, %s32
    $region7: #{my_model_forward.1} parent=1 // loop_footer_branch
      %31 = sbr.rel target = $region3
    $region8: #{my_model_forward.1} parent=1 // loop_exit
      _
    %4980 = vsyncpa [#allocation3], 1
    %s4981 = scalar_lea.sflag [#allocation3], 1
    %4982 = vsyncpa %s4981, 1
    %4983 = vsyncpa [#allocation6], 1
    %4984 = vsyncpa [#allocation9], 1
    %4985 = vsyncpa [#allocation12], 1
    %4986 = vsyncpa [#allocation4], 1
    %s4987 = scalar_lea.sflag [#allocation4], 1
    %4988 = vsyncpa %s4987, 1

</llo_original>
